<compile_context>
chip_gen: v7x
topology: tpu7x:2x2x1
jax: 0.10.0
libtpu: 0.0.40
codegen_flags: <defaults>
</compile_context>

<pallas_src>
import jax
import jax.numpy as jnp
from jax.experimental import pallas as pl
from jax.experimental.pallas import tpu as pltpu


def _round_up(n, m):
    return ((n + m - 1) // m) * m


# ----------------------------------------------------------------------------
# Kernel 1: fused conv (+bias+ReLU) via in-kernel tap accumulation.
#   The wrapper decomposes the zero-padded input into s*s stride-phases and
#   flattens them; each 3x3 tap becomes a contiguous row-slice of the flat
#   phase buffer, so the kernel only needs static contiguous slices + 2-D
#   matmuls (bf16 on the MXU, f32 accumulator).
# ----------------------------------------------------------------------------
def _make_conv_tap_kernel(plan, l_out, c_out):
    def kernel(ph_ref, w_ref, b_ref, o_ref):
        acc = jnp.zeros((l_out, c_out), jnp.float32)
        for tap, start in plan:
            xmat = ph_ref[0, start:start + l_out, :].astype(jnp.bfloat16)
            acc = acc + jnp.dot(xmat, w_ref[tap],
                                preferred_element_type=jnp.float32)
        o_ref[0] = jnp.maximum(acc + b_ref[...], 0.0)
    return kernel


def conv2d_relu(x_nhwc, w, b, stride):
    """kxk conv ('same' zero padding, stride s) + bias + ReLU, fused in Pallas."""
    B, H, W, Cin = x_nhwc.shape
    kh, kw, _, Cout = w.shape
    s = stride
    pad = kh // 2
    Hp, Wp = H + 2 * pad, W + 2 * pad
    Ho = (Hp - kh) // s + 1
    Wo = (Wp - kw) // s + 1

    xp = jnp.pad(x_nhwc, ((0, 0), (pad, pad), (pad, pad), (0, 0)))

    # Common phase canvas large enough for every tap window.
    Hph = max(max(-(-(Hp - py) // s) for py in range(s)), (kh - 1) // s + Ho)
    Wph = max(max(-(-(Wp - px) // s) for px in range(s)), (kw - 1) // s + Wo)
    Lph = Hph * Wph
    L_out = Ho * Wph                                   # output row pitch = Wph
    max_start = ((kh - 1) // s) * Wph + (kw - 1) // s
    Lp = _round_up(max(Lph, max_start + L_out), 8)     # per-phase flat length

    phases = []
    for py in range(s):
        for px in range(s):
            ph = xp[:, py::s, px::s, :]
            ph = jnp.pad(ph, ((0, 0), (0, Hph - ph.shape[1]),
                              (0, Wph - ph.shape[2]), (0, 0)))
            phases.append(ph.reshape(B, Lph, Cin))
    ph_flat = jnp.stack(phases, axis=1)                        # (B, s*s, Lph, Cin)
    ph_flat = jnp.pad(ph_flat, ((0, 0), (0, 0), (0, Lp - Lph), (0, 0)))
    ph_flat = ph_flat.reshape(B, s * s * Lp, Cin).astype(jnp.float32)

    # Tap -> (weight index, flat start offset) plan (all static Python ints).
    plan = []
    for dy in range(kh):
        for dx in range(kw):
            p = (dy % s) * s + (dx % s)
            start = p * Lp + (dy // s) * Wph + (dx // s)
            plan.append((dy * kw + dx, start))

    w_taps = w.reshape(kh * kw, Cin, Cout).astype(jnp.bfloat16)
    bias = b.reshape(1, Cout).astype(jnp.float32)

    out = pl.pallas_call(
        _make_conv_tap_kernel(tuple(plan), L_out, Cout),
        out_shape=jax.ShapeDtypeStruct((B, L_out, Cout), jnp.float32),
        grid=(B,),
        in_specs=[
            pl.BlockSpec((1, s * s * Lp, Cin), lambda bb: (bb, 0, 0)),
            pl.BlockSpec((kh * kw, Cin, Cout), lambda bb: (0, 0, 0)),
            pl.BlockSpec((1, Cout), lambda bb: (0, 0)),
        ],
        out_specs=pl.BlockSpec((1, L_out, Cout), lambda bb: (bb, 0, 0)),
        compiler_params=pltpu.CompilerParams(
            dimension_semantics=("parallel",)),
    )(ph_flat, w_taps, bias)
    # Drop the single garbage output column introduced by the Wph row pitch.
    return out.reshape(B, Ho, Wph, Cout)[:, :, :Wo, :]


# ----------------------------------------------------------------------------
# Kernel 2: local neighborhood aggregation (3x3 reflect-padded mean pooling),
#           pipelined over the batch axis.
# ----------------------------------------------------------------------------
def _neighborhood_avg_kernel(pad_ref, o_ref):
    _, H, W, C = o_ref.shape
    acc = jnp.zeros((H, W, C), jnp.float32)
    for dy in range(3):
        for dx in range(3):
            acc = acc + pad_ref[0, dy:dy + H, dx:dx + W, :]
    o_ref[0] = acc * (1.0 / 9.0)


def local_neighborhood_aggregation(fm_nchw, p=3):
    assert p == 3
    off = p // 2
    x = jnp.transpose(fm_nchw, (0, 2, 3, 1)).astype(jnp.float32)     # NHWC
    xp = jnp.pad(x, ((0, 0), (off, off), (off, off), (0, 0)), mode="reflect")
    B, H, W, C = x.shape
    # TODO(synk): for real ResNet-sized maps, additionally tile H into row
    #             blocks (halo'd manual DMA) so a single image never has to
    #             fit VMEM whole.
    out = pl.pallas_call(
        _neighborhood_avg_kernel,
        out_shape=jax.ShapeDtypeStruct((B, H, W, C), jnp.float32),
        grid=(B,),
        in_specs=[pl.BlockSpec((1, H + 2 * off, W + 2 * off, C),
                               lambda bb: (bb, 0, 0, 0))],
        out_specs=pl.BlockSpec((1, H, W, C), lambda bb: (bb, 0, 0, 0)),
        compiler_params=pltpu.CompilerParams(
            dimension_semantics=("parallel",)),
    )(xp)
    return jnp.transpose(out, (0, 3, 1, 2))                           # NCHW


# ----------------------------------------------------------------------------
# Kernel 3: fused dual-bank cdist + running min/argmin.
#   grid = (patch tiles, 2 banks, bank tiles);  squared-distance running min
#   and argmin live in VMEM scratch; outputs (sqrt'd distance + index) are
#   written once at the last bank tile.
# ----------------------------------------------------------------------------
def _dual_cdist_min_kernel(x_ref, xsq_ref, bank_ref, bsq_ref,
                           dist_ref, idx_ref, min_acc, arg_acc):
    k = pl.program_id(2)
    tm = bank_ref.shape[1]

    # bf16 MXU matmul contracting on C (no transpose of the bank tile).
    xm = jax.lax.dot_general(
        x_ref[...], bank_ref[0],
        dimension_numbers=(((1,), (1,)), ((), ())),
        preferred_element_type=jnp.float32)             # (tp, tm)
    d2 = xsq_ref[...] + bsq_ref[0] - 2.0 * xm           # squared distances, f32

    tile_min = jnp.min(d2, axis=1, keepdims=True)       # (tp, 1)
    col = jax.lax.broadcasted_iota(jnp.int32, d2.shape, 1)
    big = jnp.int32(2 ** 30)
    tile_arg = jnp.min(jnp.where(d2 <= tile_min, col, big),
                       axis=1, keepdims=True) + k * tm

    @pl.when(k == 0)
    def _():
        min_acc[...] = tile_min
        arg_acc[...] = tile_arg

    @pl.when(k > 0)
    def _():
        better = tile_min < min_acc[...]
        arg_acc[...] = jnp.where(better, tile_arg, arg_acc[...])
        min_acc[...] = jnp.minimum(tile_min, min_acc[...])

    @pl.when(k == pl.num_programs(2) - 1)
    def _():
        dist_ref[0] = jnp.sqrt(jnp.maximum(min_acc[...], 0.0))
        idx_ref[0] = arg_acc[...]


def dual_cdist_min(patches, neg_bank, pos_bank, tp_max=256, tm_max=512):
    """For both banks: min_j ||patches_i - bank_j||_2 and the argmin.

    Non-multiple P / M are handled by padding; padded bank rows get a +BIG
    squared norm so they can never win the min.  Note: tm_max=512 targets
    v6e/v7x; on v5e a 128-256 bank tile with deeper buffering is preferable.
    """
    P, C = patches.shape
    M1, M2 = neg_bank.shape[0], pos_bank.shape[0]

    Pp16 = _round_up(P, 16)
    tp = min(Pp16, tp_max)
    Pp = _round_up(P, tp)
    Mmax = max(M1, M2)
    tm = min(_round_up(Mmax, 128), tm_max)
    Mp = _round_up(Mmax, tm)

    x_f32 = jnp.pad(patches.astype(jnp.float32), ((0, Pp - P), (0, 0)))
    x_sq = jnp.sum(x_f32 * x_f32, axis=1, keepdims=True)            # (Pp, 1) f32
    x_bf = x_f32.astype(jnp.bfloat16)

    BIG = jnp.float32(1e30)

    def prep(bank, M):
        bk = jnp.pad(bank.astype(jnp.float32), ((0, Mp - M), (0, 0)))
        sq = jnp.sum(bk * bk, axis=1)
        sq = jnp.where(jnp.arange(Mp) < M, sq, BIG)
        return bk.astype(jnp.bfloat16), sq

    nb, nsq = prep(neg_bank, M1)
    pb, psq = prep(pos_bank, M2)
    banks = jnp.stack([nb, pb], axis=0)                              # (2, Mp, C)
    banks_sq = jnp.stack([nsq, psq], axis=0).reshape(2, 1, Mp)       # f32

    dist, idx = pl.pallas_call(
        _dual_cdist_min_kernel,
        out_shape=(jax.ShapeDtypeStruct((2, Pp, 1), jnp.float32),
                   jax.ShapeDtypeStruct((2, Pp, 1), jnp.int32)),
        grid=(Pp // tp, 2, Mp // tm),
        in_specs=[
            pl.BlockSpec((tp, C), lambda i, b, k: (i, 0)),
            pl.BlockSpec((tp, 1), lambda i, b, k: (i, 0)),
            pl.BlockSpec((1, tm, C), lambda i, b, k: (b, k, 0)),
            pl.BlockSpec((1, 1, tm), lambda i, b, k: (b, 0, k)),
        ],
        out_specs=(pl.BlockSpec((1, tp, 1), lambda i, b, k: (b, i, 0)),
                   pl.BlockSpec((1, tp, 1), lambda i, b, k: (b, i, 0))),
        scratch_shapes=[pltpu.VMEM((tp, 1), jnp.float32),
                        pltpu.VMEM((tp, 1), jnp.int32)],
        compiler_params=pltpu.CompilerParams(
            dimension_semantics=("parallel", "parallel", "arbitrary"),
            vmem_limit_bytes=32 * 1024 * 1024),
    )(x_bf, x_sq, banks, banks_sq)

    neg = (dist[0, :P, 0], idx[0, :P, 0])
    pos = (dist[1, :P, 0], idx[1, :P, 0])
    return neg, pos


# ----------------------------------------------------------------------------
# Glue: bilinear upsample (align_corners=False, half-pixel centers)
# ----------------------------------------------------------------------------
def bilinear_upsample(x_nchw, target_size):
    B, C, H, W = x_nchw.shape
    th, tw = int(target_size[0]), int(target_size[1])
    if (H, W) == (th, tw):
        return x_nchw
    return jax.image.resize(x_nchw, (B, C, th, tw), method="bilinear")


# ----------------------------------------------------------------------------
# PatchCore (dual memory bank)
# ----------------------------------------------------------------------------
class PatchCoreJAX:
    def __init__(self, key, image_size=32):
        self.k_nearest = 3
        self.image_size = image_size
        self.alpha = 0.9
        self.beta = 0.1
        self.neg_memory_bank = None
        self.pos_memory_bank = None

        def init_conv(k, cin, cout):
            w = jax.random.normal(k, (3, 3, cin, cout), jnp.float32) / jnp.sqrt(9.0 * cin)
            b = jnp.zeros((cout,), jnp.float32)
            return w, b

        ks = jax.random.split(key, 3)
        self.stem = init_conv(ks[0], 3, 8)        # stride-2
        self.stage2 = init_conv(ks[1], 8, 16)     # stride-2, plays "layer2" hook
        self.stage3 = init_conv(ks[2], 16, 32)    # stride-2, plays "layer3" hook

    def forward(self, x_nchw):
        """Matches PatchCore.forward: returns the two hooked feature maps (NCHW)."""
        x = jnp.transpose(x_nchw, (0, 2, 3, 1)).astype(jnp.float32)   # NHWC
        h1 = conv2d_relu(x, *self.stem, stride=2)
        f2 = conv2d_relu(h1, *self.stage2, stride=2)
        f3 = conv2d_relu(f2, *self.stage3, stride=2)
        to_nchw = lambda t: jnp.transpose(t, (0, 3, 1, 2))
        return [to_nchw(f2), to_nchw(f3)]

    def predict(self, sample):
        """Anomaly score = d_neg / d_pos with dual-memory-bank reweighting (B must be 1)."""
        fmaps = self.forward(sample)
        fmaps = [local_neighborhood_aggregation(fm, p=3) for fm in fmaps]
        fmaps[1] = bilinear_upsample(fmaps[1], fmaps[0].shape[2:])
        patch = jnp.concatenate(fmaps, axis=1)                 # (1, C, H, W)
        C = patch.shape[1]
        patch_collection = patch.reshape(C, -1).T              # (H*W, C)

        (neg_d, neg_i), (pos_d, pos_i) = dual_cdist_min(
            patch_collection, self.neg_memory_bank, self.pos_memory_bank)

        eps = 1e-6
        ratio = neg_d / (pos_d + eps)
        s_idx = jnp.argmax(ratio)
        s_star = ratio[s_idx]
        m_test_star = patch_collection[s_idx]
        norm = jnp.sqrt(jnp.float32(C))

        def softmax_weight(bank, d, i):
            m_star = bank[i[s_idx]][None, :]
            dists = jnp.sqrt(jnp.maximum(jnp.sum((m_star - bank) ** 2, axis=1), 0.0))
            _, nn_idx = jax.lax.top_k(-dists, self.k_nearest)   # k nearest (incl. self)
            neigh = bank[nn_idx[1:]]
            denom = jnp.linalg.norm(m_test_star[None, :] - neigh, axis=1)
            return jnp.exp(d[s_idx] / norm) / jnp.sum(jnp.exp(denom / norm))

        w_neg = 1.0 - softmax_weight(self.neg_memory_bank, neg_d, neg_i)
        w_pos = softmax_weight(self.pos_memory_bank, pos_d, pos_i)
        s_final = (self.alpha * w_neg + self.beta * w_pos) * s_star

        Hf, Wf = fmaps[0].shape[2], fmaps[0].shape[3]
        segm_map = ratio.reshape(1, 1, Hf, Wf) * (self.alpha * w_neg + self.beta * w_pos)
        segm_map = bilinear_upsample(segm_map, (self.image_size, self.image_size))
        # TODO(synk): PIL GaussianBlur(radius=4) post-processing has no clean Pallas
        #             equivalent (PIL-only op); segmentation map returned un-blurred.
        return s_final, segm_map


if __name__ == "__main__":
    key = jax.random.PRNGKey(0)
    k_model, k_x, k_neg, k_pos = jax.random.split(key, 4)

    model = PatchCoreJAX(k_model, image_size=32)
    x = jax.random.normal(k_x, (2, 3, 32, 32), jnp.float32)   # NCHW, like PyTorch

    # forward pass (the module's forward(): hooked layer2/layer3-style features)
    feats = model.forward(x)
    for f in feats:
        jax.block_until_ready(f)
    assert feats[0].shape == (2, 16, 8, 8)
    assert feats[1].shape == (2, 32, 4, 4)

    # fit()'s coreset pipeline is training-time/host-side; build small deterministic
    # synthetic memory banks (deliberately non-multiples of 128 to exercise the
    # padded/masked tail-tile path) with matching channel dim for predict().
    C = feats[0].shape[1] + feats[1].shape[1]
    model.neg_memory_bank = jax.random.normal(k_neg, (250, C), jnp.float32)
    model.pos_memory_bank = jax.random.normal(k_pos, (300, C), jnp.float32)

    score, segm = model.predict(x[0:1])
    jax.block_until_ready(score)
    jax.block_until_ready(segm)
    assert segm.shape == (1, 1, 32, 32)
    assert jnp.isfinite(score)
    assert jnp.all(jnp.isfinite(segm))

    print("KERNEL_OK")
</pallas_src>

<mosaic_0001>
module attributes {stable_mosaic.version = 11 : i64} {
  func.func @kernel(%arg0: i32, %arg1: memref<1x1184x3xf32, #tpu.memory_space<vmem>>, %arg2: memref<9x3x8xbf16, #tpu.memory_space<vmem>>, %arg3: memref<1x8xf32, #tpu.memory_space<vmem>>, %arg4: memref<1x272x8xf32, #tpu.memory_space<vmem>>) attributes {dimension_semantics = [#tpu.dimension_semantics<parallel>], iteration_bounds = array<i64: 2>, scalar_prefetch = 0 : i64, scratch_operands = 0 : i64, tpu.core_type = #tpu.core_type<tc>, window_params = [{transform_indices = @transform_0, window_bounds = array<i64: 1, 1184, 3>}, {pipeline_mode = #tpu.pipeline_mode<synchronous>, transform_indices = @transform_1, window_bounds = array<i64: 9, 3, 8>}, {pipeline_mode = #tpu.pipeline_mode<synchronous>, transform_indices = @transform_2, window_bounds = array<i64: 1, 8>}, {transform_indices = @transform_3, window_bounds = array<i64: 1, 272, 8>}]} {
    %cst = arith.constant 0.000000e+00 : f32
    %0 = vector.broadcast %cst : f32 to vector<272x8xf32>
    %c0 = arith.constant 0 : index
    %c0_0 = arith.constant 0 : index
    %c0_1 = arith.constant 0 : index
    %1 = vector.load %arg1[%c0, %c0_0, %c0_1] : memref<1x1184x3xf32, #tpu.memory_space<vmem>>, vector<1x272x3xf32>
    %2 = vector.shape_cast %1 : vector<1x272x3xf32> to vector<272x3xf32>
    %3 = arith.truncf %2 : vector<272x3xf32> to vector<272x3xbf16>
    %c0_2 = arith.constant 0 : index
    %c0_3 = arith.constant 0 : index
    %c0_4 = arith.constant 0 : index
    %4 = vector.load %arg2[%c0_2, %c0_3, %c0_4] : memref<9x3x8xbf16, #tpu.memory_space<vmem>>, vector<1x3x8xbf16>
    %5 = vector.shape_cast %4 : vector<1x3x8xbf16> to vector<3x8xbf16>
    %cst_5 = arith.constant dense<0.000000e+00> : vector<272x8xf32>
    %6 = tpu.matmul %3, %5, %cst_5 {dimension_numbers = #tpu.dot_dimension_numbers<[1], [0], [0], [1], [0, 0, 1, 1], [], []>} : vector<272x3xbf16>, vector<3x8xbf16>, vector<272x8xf32> -> vector<272x8xf32>
    %7 = arith.addf %0, %6 : vector<272x8xf32>
    %c0_6 = arith.constant 0 : index
    %c296 = arith.constant 296 : index
    %c0_7 = arith.constant 0 : index
    %8 = vector.load %arg1[%c0_6, %c296, %c0_7] : memref<1x1184x3xf32, #tpu.memory_space<vmem>>, vector<1x272x3xf32>
    %9 = vector.shape_cast %8 : vector<1x272x3xf32> to vector<272x3xf32>
    %10 = arith.truncf %9 : vector<272x3xf32> to vector<272x3xbf16>
    %c1 = arith.constant 1 : index
    %c0_8 = arith.constant 0 : index
    %c0_9 = arith.constant 0 : index
    %11 = vector.load %arg2[%c1, %c0_8, %c0_9] : memref<9x3x8xbf16, #tpu.memory_space<vmem>>, vector<1x3x8xbf16>
    %12 = vector.shape_cast %11 : vector<1x3x8xbf16> to vector<3x8xbf16>
    %cst_10 = arith.constant dense<0.000000e+00> : vector<272x8xf32>
    %13 = tpu.matmul %10, %12, %cst_10 {dimension_numbers = #tpu.dot_dimension_numbers<[1], [0], [0], [1], [0, 0, 1, 1], [], []>} : vector<272x3xbf16>, vector<3x8xbf16>, vector<272x8xf32> -> vector<272x8xf32>
    %14 = arith.addf %7, %13 : vector<272x8xf32>
    %c0_11 = arith.constant 0 : index
    %c1_12 = arith.constant 1 : index
    %c0_13 = arith.constant 0 : index
    %15 = vector.load %arg1[%c0_11, %c1_12, %c0_13] : memref<1x1184x3xf32, #tpu.memory_space<vmem>>, vector<1x272x3xf32>
    %16 = vector.shape_cast %15 : vector<1x272x3xf32> to vector<272x3xf32>
    %17 = arith.truncf %16 : vector<272x3xf32> to vector<272x3xbf16>
    %c2 = arith.constant 2 : index
    %c0_14 = arith.constant 0 : index
    %c0_15 = arith.constant 0 : index
    %18 = vector.load %arg2[%c2, %c0_14, %c0_15] : memref<9x3x8xbf16, #tpu.memory_space<vmem>>, vector<1x3x8xbf16>
    %19 = vector.shape_cast %18 : vector<1x3x8xbf16> to vector<3x8xbf16>
    %cst_16 = arith.constant dense<0.000000e+00> : vector<272x8xf32>
    %20 = tpu.matmul %17, %19, %cst_16 {dimension_numbers = #tpu.dot_dimension_numbers<[1], [0], [0], [1], [0, 0, 1, 1], [], []>} : vector<272x3xbf16>, vector<3x8xbf16>, vector<272x8xf32> -> vector<272x8xf32>
    %21 = arith.addf %14, %20 : vector<272x8xf32>
    %c0_17 = arith.constant 0 : index
    %c592 = arith.constant 592 : index
    %c0_18 = arith.constant 0 : index
    %22 = vector.load %arg1[%c0_17, %c592, %c0_18] : memref<1x1184x3xf32, #tpu.memory_space<vmem>>, vector<1x272x3xf32>
    %23 = vector.shape_cast %22 : vector<1x272x3xf32> to vector<272x3xf32>
    %24 = arith.truncf %23 : vector<272x3xf32> to vector<272x3xbf16>
    %c3 = arith.constant 3 : index
    %c0_19 = arith.constant 0 : index
    %c0_20 = arith.constant 0 : index
    %25 = vector.load %arg2[%c3, %c0_19, %c0_20] : memref<9x3x8xbf16, #tpu.memory_space<vmem>>, vector<1x3x8xbf16>
    %26 = vector.shape_cast %25 : vector<1x3x8xbf16> to vector<3x8xbf16>
    %cst_21 = arith.constant dense<0.000000e+00> : vector<272x8xf32>
    %27 = tpu.matmul %24, %26, %cst_21 {dimension_numbers = #tpu.dot_dimension_numbers<[1], [0], [0], [1], [0, 0, 1, 1], [], []>} : vector<272x3xbf16>, vector<3x8xbf16>, vector<272x8xf32> -> vector<272x8xf32>
    %28 = arith.addf %21, %27 : vector<272x8xf32>
    %c0_22 = arith.constant 0 : index
    %c888 = arith.constant 888 : index
    %c0_23 = arith.constant 0 : index
    %29 = vector.load %arg1[%c0_22, %c888, %c0_23] : memref<1x1184x3xf32, #tpu.memory_space<vmem>>, vector<1x272x3xf32>
    %30 = vector.shape_cast %29 : vector<1x272x3xf32> to vector<272x3xf32>
    %31 = arith.truncf %30 : vector<272x3xf32> to vector<272x3xbf16>
    %c4 = arith.constant 4 : index
    %c0_24 = arith.constant 0 : index
    %c0_25 = arith.constant 0 : index
    %32 = vector.load %arg2[%c4, %c0_24, %c0_25] : memref<9x3x8xbf16, #tpu.memory_space<vmem>>, vector<1x3x8xbf16>
    %33 = vector.shape_cast %32 : vector<1x3x8xbf16> to vector<3x8xbf16>
    %cst_26 = arith.constant dense<0.000000e+00> : vector<272x8xf32>
    %34 = tpu.matmul %31, %33, %cst_26 {dimension_numbers = #tpu.dot_dimension_numbers<[1], [0], [0], [1], [0, 0, 1, 1], [], []>} : vector<272x3xbf16>, vector<3x8xbf16>, vector<272x8xf32> -> vector<272x8xf32>
    %35 = arith.addf %28, %34 : vector<272x8xf32>
    %c0_27 = arith.constant 0 : index
    %c593 = arith.constant 593 : index
    %c0_28 = arith.constant 0 : index
    %36 = vector.load %arg1[%c0_27, %c593, %c0_28] : memref<1x1184x3xf32, #tpu.memory_space<vmem>>, vector<1x272x3xf32>
    %37 = vector.shape_cast %36 : vector<1x272x3xf32> to vector<272x3xf32>
    %38 = arith.truncf %37 : vector<272x3xf32> to vector<272x3xbf16>
    %c5 = arith.constant 5 : index
    %c0_29 = arith.constant 0 : index
    %c0_30 = arith.constant 0 : index
    %39 = vector.load %arg2[%c5, %c0_29, %c0_30] : memref<9x3x8xbf16, #tpu.memory_space<vmem>>, vector<1x3x8xbf16>
    %40 = vector.shape_cast %39 : vector<1x3x8xbf16> to vector<3x8xbf16>
    %cst_31 = arith.constant dense<0.000000e+00> : vector<272x8xf32>
    %41 = tpu.matmul %38, %40, %cst_31 {dimension_numbers = #tpu.dot_dimension_numbers<[1], [0], [0], [1], [0, 0, 1, 1], [], []>} : vector<272x3xbf16>, vector<3x8xbf16>, vector<272x8xf32> -> vector<272x8xf32>
    %42 = arith.addf %35, %41 : vector<272x8xf32>
    %c0_32 = arith.constant 0 : index
    %c17 = arith.constant 17 : index
    %c0_33 = arith.constant 0 : index
    %43 = vector.load %arg1[%c0_32, %c17, %c0_33] : memref<1x1184x3xf32, #tpu.memory_space<vmem>>, vector<1x272x3xf32>
    %44 = vector.shape_cast %43 : vector<1x272x3xf32> to vector<272x3xf32>
    %45 = arith.truncf %44 : vector<272x3xf32> to vector<272x3xbf16>
    %c6 = arith.constant 6 : index
    %c0_34 = arith.constant 0 : index
    %c0_35 = arith.constant 0 : index
    %46 = vector.load %arg2[%c6, %c0_34, %c0_35] : memref<9x3x8xbf16, #tpu.memory_space<vmem>>, vector<1x3x8xbf16>
    %47 = vector.shape_cast %46 : vector<1x3x8xbf16> to vector<3x8xbf16>
    %cst_36 = arith.constant dense<0.000000e+00> : vector<272x8xf32>
    %48 = tpu.matmul %45, %47, %cst_36 {dimension_numbers = #tpu.dot_dimension_numbers<[1], [0], [0], [1], [0, 0, 1, 1], [], []>} : vector<272x3xbf16>, vector<3x8xbf16>, vector<272x8xf32> -> vector<272x8xf32>
    %49 = arith.addf %42, %48 : vector<272x8xf32>
    %c0_37 = arith.constant 0 : index
    %c313 = arith.constant 313 : index
    %c0_38 = arith.constant 0 : index
    %50 = vector.load %arg1[%c0_37, %c313, %c0_38] : memref<1x1184x3xf32, #tpu.memory_space<vmem>>, vector<1x272x3xf32>
    %51 = vector.shape_cast %50 : vector<1x272x3xf32> to vector<272x3xf32>
    %52 = arith.truncf %51 : vector<272x3xf32> to vector<272x3xbf16>
    %c7 = arith.constant 7 : index
    %c0_39 = arith.constant 0 : index
    %c0_40 = arith.constant 0 : index
    %53 = vector.load %arg2[%c7, %c0_39, %c0_40] : memref<9x3x8xbf16, #tpu.memory_space<vmem>>, vector<1x3x8xbf16>
    %54 = vector.shape_cast %53 : vector<1x3x8xbf16> to vector<3x8xbf16>
    %cst_41 = arith.constant dense<0.000000e+00> : vector<272x8xf32>
    %55 = tpu.matmul %52, %54, %cst_41 {dimension_numbers = #tpu.dot_dimension_numbers<[1], [0], [0], [1], [0, 0, 1, 1], [], []>} : vector<272x3xbf16>, vector<3x8xbf16>, vector<272x8xf32> -> vector<272x8xf32>
    %56 = arith.addf %49, %55 : vector<272x8xf32>
    %c0_42 = arith.constant 0 : index
    %c18 = arith.constant 18 : index
    %c0_43 = arith.constant 0 : index
    %57 = vector.load %arg1[%c0_42, %c18, %c0_43] : memref<1x1184x3xf32, #tpu.memory_space<vmem>>, vector<1x272x3xf32>
    %58 = vector.shape_cast %57 : vector<1x272x3xf32> to vector<272x3xf32>
    %59 = arith.truncf %58 : vector<272x3xf32> to vector<272x3xbf16>
    %c8 = arith.constant 8 : index
    %c0_44 = arith.constant 0 : index
    %c0_45 = arith.constant 0 : index
    %60 = vector.load %arg2[%c8, %c0_44, %c0_45] : memref<9x3x8xbf16, #tpu.memory_space<vmem>>, vector<1x3x8xbf16>
    %61 = vector.shape_cast %60 : vector<1x3x8xbf16> to vector<3x8xbf16>
    %cst_46 = arith.constant dense<0.000000e+00> : vector<272x8xf32>
    %62 = tpu.matmul %59, %61, %cst_46 {dimension_numbers = #tpu.dot_dimension_numbers<[1], [0], [0], [1], [0, 0, 1, 1], [], []>} : vector<272x3xbf16>, vector<3x8xbf16>, vector<272x8xf32> -> vector<272x8xf32>
    %63 = arith.addf %56, %62 : vector<272x8xf32>
    %c0_47 = arith.constant 0 : index
    %c0_48 = arith.constant 0 : index
    %64 = vector.load %arg3[%c0_47, %c0_48] : memref<1x8xf32, #tpu.memory_space<vmem>>, vector<1x8xf32>
    %65 = vector.broadcast %64 : vector<1x8xf32> to vector<272x8xf32>
    %66 = arith.addf %63, %65 : vector<272x8xf32>
    %cst_49 = arith.constant 0.000000e+00 : f32
    %67 = vector.broadcast %cst_49 : f32 to vector<272x8xf32>
    %68 = arith.maximumf %66, %67 : vector<272x8xf32>
    %c0_50 = arith.constant 0 : index
    %c0_51 = arith.constant 0 : index
    %c0_52 = arith.constant 0 : index
    %69 = vector.load %arg4[%c0_50, %c0_51, %c0_52] : memref<1x272x8xf32, #tpu.memory_space<vmem>>, vector<1x272x8xf32>
    %70 = vector.shape_cast %69 : vector<1x272x8xf32> to vector<272x8xf32>
    %71 = vector.shape_cast %68 : vector<272x8xf32> to vector<1x272x8xf32>
    tpu.vector_store %arg4[%c0_50, %c0_51, %c0_52], %71 {strides = array<i32>} : memref<1x272x8xf32, #tpu.memory_space<vmem>>, vector<1x272x8xf32>,
    return
  }
  func.func @transform_0(%arg0: i32) -> (i32, i32, i32) {
    %c0_i32 = arith.constant 0 : i32
    %c0_i32_0 = arith.constant 0 : i32
    %c0_i32_1 = arith.constant 0 : i32
    return %arg0, %c0_i32, %c0_i32_0 : i32, i32, i32
  }
  func.func @transform_1(%arg0: i32) -> (i32, i32, i32) {
    %c0_i32 = arith.constant 0 : i32
    %c0_i32_0 = arith.constant 0 : i32
    %c0_i32_1 = arith.constant 0 : i32
    %c0_i32_2 = arith.constant 0 : i32
    return %c0_i32, %c0_i32_0, %c0_i32_1 : i32, i32, i32
  }
  func.func @transform_2(%arg0: i32) -> (i32, i32) {
    %c0_i32 = arith.constant 0 : i32
    %c0_i32_0 = arith.constant 0 : i32
    %c0_i32_1 = arith.constant 0 : i32
    return %c0_i32, %c0_i32_0 : i32, i32
  }
  func.func @transform_3(%arg0: i32) -> (i32, i32, i32) {
    %c0_i32 = arith.constant 0 : i32
    %c0_i32_0 = arith.constant 0 : i32
    %c0_i32_1 = arith.constant 0 : i32
    return %arg0, %c0_i32, %c0_i32_0 : i32, i32, i32
  }
}

</mosaic_0001>

<llo_original>
// kernel: tpu_custom_call.1
$region0: #{tpu_custom_call.1}
  #allocation0 [shape = 'u32[]', space=smem, size = 0x4, offset = 0x4, fixed_abs, tag = 'smem constant byte address 0x4 - core index']
  #allocation1 [shape = 'u32[144,128]{1,0:T(1,128)}', space=vmem, size = 0x12000, scoped, tag = 'internal scratch']
  %s0 = inlined_call_operand.vmem [shape: f32[2,1184,3], index: 0, kind: input, shape index: {}]
  %s1 = inlined_call_operand.vmem [shape: bf16[9,3,8], index: 1, kind: input, shape index: {}]
  %s2 = inlined_call_operand.vmem [shape: f32[1,8], index: 2, kind: input, shape index: {}]
  %s3 = inlined_call_operand.vmem [shape: f32[2,272,8], index: 3, kind: output, shape index: {}]
  %s4 = sld [smem:[#allocation0]]
  $region45: #{tpu_custom_call.1} parent=0
    _
  %s6 = ssub.s32 1, %s4
  %s7 = scalar_select 0, %s6, %s4
  loop: start=0, step=1, limit=4
  $region2: #{tpu_custom_call.1} parent=0 // loop_pre_header
    _
  $region3: #{tpu_custom_call.1} parent=0 // loop_header
    %s9 = sphi 0, %s13
    %p10 = scmp.ge.s32.totalorder %s9, 4
    %s19 = sphi 0, %s21
    %s22 = sphi 0, %s19
    %s23 = sphi 0, %s22
    %s39 = sphi 0, %s23
    %s43 = sphi 0, %s43
    %s45 = sphi 0, %s43
    %s46 = sphi 0, %s45
    %s60 = sphi 0, %s46
    %s64 = sphi 0, %s64
    %s66 = sphi 0, %s64
    %s67 = sphi 0, %s66
    %s81 = sphi 0, %s67
    %s87 = sphi 0, %s89
    %s90 = sphi 0, %s87
    %s91 = sphi 0, %s90
    %s107 = sphi 0, %s91
  $region4: #{tpu_custom_call.1} parent=0 // loop_header_branch
    %12 = sbr.rel (%p10) target = $region8
  $region5: #{tpu_custom_call.1} parent=0 // loop_body
    %s14 = ssub.s32 %s9, 1
    %s15 = ssub.s32 %s9, 2
    %s16 = sadd.s32 %s9, 1
    %s17 = ssub.s32 %s9, %s16
    %p18 = scmp.eq.s32.totalorder %s17, 0
    %s20 = sadd.s32 %s19, 1
    %s21 = scalar_select %p18, %s19, %s20
    %p24 = pneg %p18
    %p25 = scmp.eq.s32.totalorder %s9, 1
    %p26 = por %p24, %p25
    %p27 = scmp.ne.s32.totalorder %s19, %s22
    %p28 = scmp.eq.s32.totalorder %s9, 0
    %p29 = por %p27, %p28
    %p30 = scmp.ne.s32.totalorder %s19, %s22
    %p31 = scmp.eq.s32.totalorder %s14, 1
    %p32 = por %p30, %p31
    %p33 = scmp.ne.s32.totalorder %s22, %s23
    %p34 = scmp.eq.s32.totalorder %s14, 0
    %p35 = por %p33, %p34
    %p36 = scmp.ne.s32.totalorder %s22, %s23
    %p37 = scmp.eq.s32.totalorder %s15, 1
    %p38 = por %p36, %p37
    %p40 = scmp.ne.s32.totalorder %s23, %s39
    %p41 = scmp.eq.s32.totalorder %s15, 0
    %p42 = por %p40, %p41
    %s44 = sadd.s32 %s43, 1
    %p47 = scmp.eq.s32.totalorder %s9, 1
    %p48 = scmp.ne.s32.totalorder %s43, %s45
    %p49 = scmp.eq.s32.totalorder %s9, 0
    %p50 = por %p48, %p49
    %p51 = scmp.ne.s32.totalorder %s43, %s45
    %p52 = scmp.eq.s32.totalorder %s14, 1
    %p53 = por %p51, %p52
    %p54 = scmp.ne.s32.totalorder %s45, %s46
    %p55 = scmp.eq.s32.totalorder %s14, 0
    %p56 = por %p54, %p55
    %p57 = scmp.ne.s32.totalorder %s45, %s46
    %p58 = scmp.eq.s32.totalorder %s15, 1
    %p59 = por %p57, %p58
    %p61 = scmp.ne.s32.totalorder %s46, %s60
    %p62 = scmp.eq.s32.totalorder %s15, 0
    %p63 = por %p61, %p62
    %s65 = sadd.s32 %s64, 1
    %p68 = scmp.eq.s32.totalorder %s9, 1
    %p69 = scmp.ne.s32.totalorder %s64, %s66
    %p70 = scmp.eq.s32.totalorder %s9, 0
    %p71 = por %p69, %p70
    %p72 = scmp.ne.s32.totalorder %s64, %s66
    %p73 = scmp.eq.s32.totalorder %s14, 1
    %p74 = por %p72, %p73
    %p75 = scmp.ne.s32.totalorder %s66, %s67
    %p76 = scmp.eq.s32.totalorder %s14, 0
    %p77 = por %p75, %p76
    %p78 = scmp.ne.s32.totalorder %s66, %s67
    %p79 = scmp.eq.s32.totalorder %s15, 1
    %p80 = por %p78, %p79
    %p82 = scmp.ne.s32.totalorder %s67, %s81
    %p83 = scmp.eq.s32.totalorder %s15, 0
    %p84 = por %p82, %p83
    %s85 = ssub.s32 %s9, %s16
    %p86 = scmp.eq.s32.totalorder %s85, 0
    %s88 = sadd.s32 %s87, 1
    %s89 = scalar_select %p86, %s87, %s88
    %p92 = pneg %p86
    %p93 = scmp.eq.s32.totalorder %s9, 1
    %p94 = por %p92, %p93
    %p95 = scmp.ne.s32.totalorder %s87, %s90
    %p96 = scmp.eq.s32.totalorder %s9, 0
    %p97 = por %p95, %p96
    %p98 = scmp.ne.s32.totalorder %s87, %s90
    %p99 = scmp.eq.s32.totalorder %s14, 1
    %p100 = por %p98, %p99
    %p101 = scmp.ne.s32.totalorder %s90, %s91
    %p102 = scmp.eq.s32.totalorder %s14, 0
    %p103 = por %p101, %p102
    %p104 = scmp.ne.s32.totalorder %s90, %s91
    %p105 = scmp.eq.s32.totalorder %s15, 1
    %p106 = por %p104, %p105
    %p108 = scmp.ne.s32.totalorder %s91, %s107
    %p109 = scmp.eq.s32.totalorder %s15, 0
    %p110 = por %p108, %p109
    %p111 = scmp.le.s32.totalorder 1, %s9
    %p112 = scmp.lt.s32.totalorder %s9, 3
    %p113 = pnand %p111, %p112
    %p114 = pneg %p113
    // Predicated region
    $region9: #{tpu_custom_call.1} parent=5 // pred_check
      _
    $region10: #{tpu_custom_call.1} parent=5 // pred_check_branch
      %116 = sbr.rel (%p113) target = $region12
    $region11: #{tpu_custom_call.1} parent=5 // pred_region
      %s117 = ssub.s32 %s9, 1
      // Predicated region
      $region13: #{tpu_custom_call.1} parent=11 // pred_check
        %p118 = pneg %p56
      $region14: #{tpu_custom_call.1} parent=11 // pred_check_branch
        %120 = sbr.rel (%p118) target = $region16
      $region15: #{tpu_custom_call.1} parent=11 // pred_region
        _
      $region16: #{tpu_custom_call.1} parent=11 // pred_fallthru
        _
      // Predicated region
      $region17: #{tpu_custom_call.1} parent=11 // pred_check
        %p121 = pneg %p77
      $region18: #{tpu_custom_call.1} parent=11 // pred_check_branch
        %123 = sbr.rel (%p121) target = $region20
      $region19: #{tpu_custom_call.1} parent=11 // pred_region
        _
      $region20: #{tpu_custom_call.1} parent=11 // pred_fallthru
        _
    $region12: #{tpu_custom_call.1} parent=5 // pred_fallthru
      _
    %p124 = scmp.lt.s32.totalorder %s9, 2
    // Predicated region
    $region21: #{tpu_custom_call.1} parent=5 // pred_check
      %p125 = pneg %p124
    $region22: #{tpu_custom_call.1} parent=5 // pred_check_branch
      %127 = sbr.rel (%p125) target = $region24
    $region23: #{tpu_custom_call.1} parent=5 // pred_region
      // Predicated region
      $region25: #{tpu_custom_call.1} parent=23 // pred_check
        %p128 = pneg %p29
      $region26: #{tpu_custom_call.1} parent=23 // pred_check_branch
        %130 = sbr.rel (%p128) target = $region28
      $region27: #{tpu_custom_call.1} parent=23 // pred_region
        %p131 = scmp.lt.s32.totalorder %s9, 1
        %s132 = scalar_select %p131, %s9, 1
        %s133 = smul.addr %s132, 148
        %s134 = smul.addr %s133, 8
        %s135 = scalar_lea.vmem %s0, %s134
      $region28: #{tpu_custom_call.1} parent=23 // pred_fallthru
        _
    $region24: #{tpu_custom_call.1} parent=5 // pred_fallthru
      _
    %p136 = scmp.le.s32.totalorder 1, %s9
    %p137 = scmp.lt.s32.totalorder %s9, 3
    %p138 = pnand %p136, %p137
    %p139 = pneg %p138
    // Predicated region
    $region29: #{tpu_custom_call.1} parent=5 // pred_check
      _
    $region30: #{tpu_custom_call.1} parent=5 // pred_check_branch
      %141 = sbr.rel (%p138) target = $region32
    $region31: #{tpu_custom_call.1} parent=5 // pred_region
      %s142 = ssub.s32 %s9, 1
      %p143 = scmp.lt.s32.totalorder %s14, 1
      %s144 = scalar_select %p143, %s14, 1
      %s145 = smul.addr %s144, 148
      %s146 = smul.addr %s145, 8
      %s147 = scalar_lea.vmem %s0, %s146
      %p148 = pneg %p35
      %p149 = pneg %p32
      %p150 = pneg %p56
      %p151 = pneg %p53
      %p152 = pneg %p77
      %p153 = pneg %p74
      %p154 = pneg %p103
      %p155 = pneg %p100
      %p156 = scmp.lt.s32.totalorder %s14, 1
      %s157 = scalar_select %p156, %s14, 1
      %s158 = smul.addr %s157, 34
      %s159 = smul.addr %s158, 8
      %s160 = scalar_lea.vmem %s3, %s159
      %p161 = scmp.lt.s32.totalorder %s14, 1
      %s162 = scalar_select %p161, %s14, 1
      %s163 = smul.addr %s162, 148
      %s164 = smul.addr %s163, 8
      %s165 = scalar_lea.vmem %s0, %s164
      %p166 = scmp.lt.s32.totalorder %s14, 1
      %s167 = scalar_select %p166, %s14, 1
      %s168 = smul.addr %s167, 34
      %s169 = smul.addr %s168, 8
      %s170 = scalar_lea.vmem %s3, %s169
      %v172 = vld [vmem:[%s165] sm:$0xff]
      %v173 = vld [vmem:[%s165 + $0x8] sm:$0xff]
      %v174 = vld [vmem:[%s165 + $0x10] sm:$0xff]
      %v175 = vld [vmem:[%s165 + $0x18] sm:$0xff]
      %v176 = vld [vmem:[%s165 + $0x20] sm:$0xff]
      %v177 = vld [vmem:[%s165 + $0x28] sm:$0xff]
      %v178 = vld [vmem:[%s165 + $0x30] sm:$0xff]
      %v179 = vld [vmem:[%s165 + $0x38] sm:$0xff]
      %v180 = vld [vmem:[%s165 + $0x40] sm:$0xff]
      %v181 = vld [vmem:[%s165 + $0x48] sm:$0xff]
      %v182 = vld [vmem:[%s165 + $0x50] sm:$0xff]
      %v183 = vld [vmem:[%s165 + $0x58] sm:$0xff]
      %v184 = vld [vmem:[%s165 + $0x60] sm:$0xff]
      %v185 = vld [vmem:[%s165 + $0x68] sm:$0xff]
      %v186 = vld [vmem:[%s165 + $0x70] sm:$0xff]
      %v187 = vld [vmem:[%s165 + $0x78] sm:$0xff]
      %v188 = vld [vmem:[%s165 + $0x80] sm:$0xff]
      %v189 = vld [vmem:[%s165 + $0x88] sm:$0xff]
      %v190 = vld [vmem:[%s165 + $0x90] sm:$0xff]
      %v191 = vld [vmem:[%s165 + $0x98] sm:$0xff]
      %v192 = vld [vmem:[%s165 + $0xa0] sm:$0xff]
      %v193 = vld [vmem:[%s165 + $0xa8] sm:$0xff]
      %v194 = vld [vmem:[%s165 + $0xb0] sm:$0xff]
      %v195 = vld [vmem:[%s165 + $0xb8] sm:$0xff]
      %v196 = vld [vmem:[%s165 + $0xc0] sm:$0xff]
      %v197 = vld [vmem:[%s165 + $0xc8] sm:$0xff]
      %v198 = vld [vmem:[%s165 + $0xd0] sm:$0xff]
      %v199 = vld [vmem:[%s165 + $0xd8] sm:$0xff]
      %v200 = vld [vmem:[%s165 + $0xe0] sm:$0xff]
      %v201 = vld [vmem:[%s165 + $0xe8] sm:$0xff]
      %v202 = vld [vmem:[%s165 + $0xf0] sm:$0xff]
      %v203 = vld [vmem:[%s165 + $0xf8] sm:$0xff]
      %v204 = vld [vmem:[%s165 + $0x100] sm:$0xff]
      %v205 = vld [vmem:[%s165 + $0x108] sm:$0xff]
      %v206 = vpack.c.bf16 %v173, %v172
      %v207 = vpack.c.bf16 %v175, %v174
      %v208 = vpack.c.bf16 %v177, %v176
      %v209 = vpack.c.bf16 %v179, %v178
      %v210 = vpack.c.bf16 %v181, %v180
      %v211 = vpack.c.bf16 %v183, %v182
      %v212 = vpack.c.bf16 %v185, %v184
      %v213 = vpack.c.bf16 %v187, %v186
      %v214 = vpack.c.bf16 %v189, %v188
      %v215 = vpack.c.bf16 %v191, %v190
      %v216 = vpack.c.bf16 %v193, %v192
      %v217 = vpack.c.bf16 %v195, %v194
      %v218 = vpack.c.bf16 %v197, %v196
      %v219 = vpack.c.bf16 %v199, %v198
      %v220 = vpack.c.bf16 %v201, %v200
      %v221 = vpack.c.bf16 %v203, %v202
      %v222 = vpack.c.bf16 %v205, %v204
      %v223 = vld [vmem:[%s1] sm:$0x3]
      %v224 = vld [vmem:[%s165 + $0x128] sm:$0xff]
      %v225 = vld [vmem:[%s165 + $0x130] sm:$0xff]
      %v226 = vld [vmem:[%s165 + $0x138] sm:$0xff]
      %v227 = vld [vmem:[%s165 + $0x140] sm:$0xff]
      %v228 = vld [vmem:[%s165 + $0x148] sm:$0xff]
      %v229 = vld [vmem:[%s165 + $0x150] sm:$0xff]
      %v230 = vld [vmem:[%s165 + $0x158] sm:$0xff]
      %v231 = vld [vmem:[%s165 + $0x160] sm:$0xff]
      %v232 = vld [vmem:[%s165 + $0x168] sm:$0xff]
      %v233 = vld [vmem:[%s165 + $0x170] sm:$0xff]
      %v234 = vld [vmem:[%s165 + $0x178] sm:$0xff]
      %v235 = vld [vmem:[%s165 + $0x180] sm:$0xff]
      %v236 = vld [vmem:[%s165 + $0x188] sm:$0xff]
      %v237 = vld [vmem:[%s165 + $0x190] sm:$0xff]
      %v238 = vld [vmem:[%s165 + $0x198] sm:$0xff]
      %v239 = vld [vmem:[%s165 + $0x1a0] sm:$0xff]
      %v240 = vld [vmem:[%s165 + $0x1a8] sm:$0xff]
      %v241 = vld [vmem:[%s165 + $0x1b0] sm:$0xff]
      %v242 = vld [vmem:[%s165 + $0x1b8] sm:$0xff]
      %v243 = vld [vmem:[%s165 + $0x1c0] sm:$0xff]
      %v244 = vld [vmem:[%s165 + $0x1c8] sm:$0xff]
      %v245 = vld [vmem:[%s165 + $0x1d0] sm:$0xff]
      %v246 = vld [vmem:[%s165 + $0x1d8] sm:$0xff]
      %v247 = vld [vmem:[%s165 + $0x1e0] sm:$0xff]
      %v248 = vld [vmem:[%s165 + $0x1e8] sm:$0xff]
      %v249 = vld [vmem:[%s165 + $0x1f0] sm:$0xff]
      %v250 = vld [vmem:[%s165 + $0x1f8] sm:$0xff]
      %v251 = vld [vmem:[%s165 + $0x200] sm:$0xff]
      %v252 = vld [vmem:[%s165 + $0x208] sm:$0xff]
      %v253 = vld [vmem:[%s165 + $0x210] sm:$0xff]
      %v254 = vld [vmem:[%s165 + $0x218] sm:$0xff]
      %v255 = vld [vmem:[%s165 + $0x220] sm:$0xff]
      %v256 = vld [vmem:[%s165 + $0x228] sm:$0xff]
      %v257 = vld [vmem:[%s165 + $0x230] sm:$0xff]
      %v258 = vpack.c.bf16 %v225, %v224
      %v259 = vpack.c.bf16 %v227, %v226
      %v260 = vpack.c.bf16 %v229, %v228
      %v261 = vpack.c.bf16 %v231, %v230
      %v262 = vpack.c.bf16 %v233, %v232
      %v263 = vpack.c.bf16 %v235, %v234
      %v264 = vpack.c.bf16 %v237, %v236
      %v265 = vpack.c.bf16 %v239, %v238
      %v266 = vpack.c.bf16 %v241, %v240
      %v267 = vpack.c.bf16 %v243, %v242
      %v268 = vpack.c.bf16 %v245, %v244
      %v269 = vpack.c.bf16 %v247, %v246
      %v270 = vpack.c.bf16 %v249, %v248
      %v271 = vpack.c.bf16 %v251, %v250
      %v272 = vpack.c.bf16 %v253, %v252
      %v273 = vpack.c.bf16 %v255, %v254
      %v274 = vpack.c.bf16 %v257, %v256
      %s275 = scalar_lea.vmem %s1, 2
      %v276 = vld [vmem:[%s275] sm:$0x3]
      %vm277 = vcmask 23552
      %v279 = vsel %vm277, %v258, 0
      %v282 = vsel %vm277, %v259, 0
      %v285 = vsel %vm277, %v260, 0
      %v288 = vsel %vm277, %v261, 0
      %v291 = vsel %vm277, %v262, 0
      %v294 = vsel %vm277, %v263, 0
      %v297 = vsel %vm277, %v264, 0
      %v300 = vsel %vm277, %v265, 0
      %v303 = vsel %vm277, %v266, 0
      %v306 = vsel %vm277, %v267, 0
      %v309 = vsel %vm277, %v268, 0
      %v312 = vsel %vm277, %v269, 0
      %v315 = vsel %vm277, %v270, 0
      %v318 = vsel %vm277, %v271, 0
      %v321 = vsel %vm277, %v272, 0
      %v324 = vsel %vm277, %v273, 0
      %v327 = vsel %vm277, %v274, 0
      %vm329 = vcmask 1040384
      %vm330 = vcmask 1041408
      %v331 = vsel %vm329, 4294967295, 65535
      %v332 = vsel %vm330, %v331, 0
      %v334 = vand.u32 %v276, %v332
      %336 = vmatprep.subr.bf16.mxu0 0
      %337 = vmatpush1.bf16.msra.mxu0 %v334
      %338 = vmatprep.subr.bf16.mxu0 0
      %339 = vmatpush1.bf16.msra.mxu0 0
      %340 = vmatprep.subr.bf16.mxu0 0
      %341 = vmatpush1.bf16.msra.mxu0 0
      %342 = vmatprep.subr.bf16.mxu0 0
      %343 = vmatpush1.bf16.msra.mxu0 0
      %344 = vmatprep.subr.bf16.mxu0 0
      %345 = vmatpush1.bf16.msra.mxu0 0
      %346 = vmatprep.subr.bf16.mxu0 0
      %347 = vmatpush1.bf16.msra.mxu0 0
      %348 = vmatprep.subr.bf16.mxu0 0
      %349 = vmatpush1.bf16.msra.mxu0 0
      %350 = vmatprep.subr.bf16.mxu0 0
      %351 = vmatpush1.bf16.msra.mxu0 0
      %352 = vmatprep.subr.bf16.mxu0 0
      %353 = vmatpush1.bf16.msra.mxu0 0
      %354 = vmatprep.subr.bf16.mxu0 0
      %355 = vmatpush1.bf16.msra.mxu0 0
      %356 = vmatprep.subr.bf16.mxu0 0
      %357 = vmatpush1.bf16.msra.mxu0 0
      %358 = vmatprep.subr.bf16.mxu0 0
      %359 = vmatpush1.bf16.msra.mxu0 0
      %360 = vmatprep.subr.bf16.mxu0 0
      %361 = vmatpush1.bf16.msra.mxu0 0
      %362 = vmatprep.subr.bf16.mxu0 0
      %363 = vmatpush1.bf16.msra.mxu0 0
      %364 = vmatprep.subr.bf16.mxu0 0
      %365 = vmatpush1.bf16.msra.mxu0 0
      %366 = vmatprep.subr.bf16.mxu0 0
      %367 = vmatpush1.bf16.msra.mxu0 0
      %368 = vmatprep.mubr.bf16.mxu0 0
      %369 = vmatmul.mubr.bf16.gmra.mrb[0].mxu0 %v279
      %v370 = vpop.f32.mrb[0].mxu0
      %v371 = vadd.f32 0.0, %v370
      %v372 = vpop.f32.mrb[0].mxu0
      %v373 = vpop.f32.mrb[0].mxu0
      %v374 = vadd.f32 0.0, %v373
      %v375 = vpop.f32.mrb[0].mxu0
      %376 = vmatprep.mubr.bf16.mxu0 0
      %377 = vmatmul.mubr.bf16.gmra.mrb[0].mxu0 %v282
      %v378 = vpop.f32.mrb[0].mxu0
      %v379 = vadd.f32 0.0, %v378
      %v380 = vpop.f32.mrb[0].mxu0
      %v381 = vpop.f32.mrb[0].mxu0
      %v382 = vadd.f32 0.0, %v381
      %v383 = vpop.f32.mrb[0].mxu0
      %384 = vmatprep.mubr.bf16.mxu0 0
      %385 = vmatmul.mubr.bf16.gmra.mrb[0].mxu0 %v285
      %v386 = vpop.f32.mrb[0].mxu0
      %v387 = vadd.f32 0.0, %v386
      %v388 = vpop.f32.mrb[0].mxu0
      %v389 = vpop.f32.mrb[0].mxu0
      %v390 = vadd.f32 0.0, %v389
      %v391 = vpop.f32.mrb[0].mxu0
      %392 = vmatprep.mubr.bf16.mxu0 0
      %393 = vmatmul.mubr.bf16.gmra.mrb[0].mxu0 %v288
      %v394 = vpop.f32.mrb[0].mxu0
      %v395 = vadd.f32 0.0, %v394
      %v396 = vpop.f32.mrb[0].mxu0
      %v397 = vpop.f32.mrb[0].mxu0
      %v398 = vadd.f32 0.0, %v397
      %v399 = vpop.f32.mrb[0].mxu0
      %400 = vmatprep.mubr.bf16.mxu0 0
      %401 = vmatmul.mubr.bf16.gmra.mrb[0].mxu0 %v291
      %v402 = vpop.f32.mrb[0].mxu0
      %v403 = vadd.f32 0.0, %v402
      %v404 = vpop.f32.mrb[0].mxu0
      %v405 = vpop.f32.mrb[0].mxu0
      %v406 = vadd.f32 0.0, %v405
      %v407 = vpop.f32.mrb[0].mxu0
      %408 = vmatprep.mubr.bf16.mxu0 0
      %409 = vmatmul.mubr.bf16.gmra.mrb[0].mxu0 %v294
      %v410 = vpop.f32.mrb[0].mxu0
      %v411 = vadd.f32 0.0, %v410
      %v412 = vpop.f32.mrb[0].mxu0
      %v413 = vpop.f32.mrb[0].mxu0
      %v414 = vadd.f32 0.0, %v413
      %v415 = vpop.f32.mrb[0].mxu0
      %416 = vmatprep.mubr.bf16.mxu0 0
      %417 = vmatmul.mubr.bf16.gmra.mrb[0].mxu0 %v297
      %v418 = vpop.f32.mrb[0].mxu0
      %v419 = vadd.f32 0.0, %v418
      %v420 = vpop.f32.mrb[0].mxu0
      %v421 = vpop.f32.mrb[0].mxu0
      %v422 = vadd.f32 0.0, %v421
      %v423 = vpop.f32.mrb[0].mxu0
      %424 = vmatprep.mubr.bf16.mxu0 0
      %425 = vmatmul.mubr.bf16.gmra.mrb[0].mxu0 %v300
      %v426 = vpop.f32.mrb[0].mxu0
      %v427 = vadd.f32 0.0, %v426
      %v428 = vpop.f32.mrb[0].mxu0
      %v429 = vpop.f32.mrb[0].mxu0
      %v430 = vadd.f32 0.0, %v429
      %v431 = vpop.f32.mrb[0].mxu0
      %432 = vmatprep.mubr.bf16.mxu0 0
      %433 = vmatmul.mubr.bf16.gmra.mrb[0].mxu0 %v303
      %v434 = vpop.f32.mrb[0].mxu0
      %v435 = vadd.f32 0.0, %v434
      %v436 = vpop.f32.mrb[0].mxu0
      %v437 = vpop.f32.mrb[0].mxu0
      %v438 = vadd.f32 0.0, %v437
      %v439 = vpop.f32.mrb[0].mxu0
      %440 = vmatprep.mubr.bf16.mxu0 0
      %441 = vmatmul.mubr.bf16.gmra.mrb[0].mxu0 %v306
      %v442 = vpop.f32.mrb[0].mxu0
      %v443 = vadd.f32 0.0, %v442
      %v444 = vpop.f32.mrb[0].mxu0
      %v445 = vpop.f32.mrb[0].mxu0
      %v446 = vadd.f32 0.0, %v445
      %v447 = vpop.f32.mrb[0].mxu0
      %448 = vmatprep.mubr.bf16.mxu0 0
      %449 = vmatmul.mubr.bf16.gmra.mrb[0].mxu0 %v309
      %v450 = vpop.f32.mrb[0].mxu0
      %v451 = vadd.f32 0.0, %v450
      %v452 = vpop.f32.mrb[0].mxu0
      %v453 = vpop.f32.mrb[0].mxu0
      %v454 = vadd.f32 0.0, %v453
      %v455 = vpop.f32.mrb[0].mxu0
      %456 = vmatprep.mubr.bf16.mxu0 0
      %457 = vmatmul.mubr.bf16.gmra.mrb[0].mxu0 %v312
      %v458 = vpop.f32.mrb[0].mxu0
      %v459 = vadd.f32 0.0, %v458
      %v460 = vpop.f32.mrb[0].mxu0
      %v461 = vpop.f32.mrb[0].mxu0
      %v462 = vadd.f32 0.0, %v461
      %v463 = vpop.f32.mrb[0].mxu0
      %464 = vmatprep.mubr.bf16.mxu0 0
      %465 = vmatmul.mubr.bf16.gmra.mrb[0].mxu0 %v315
      %v466 = vpop.f32.mrb[0].mxu0
      %v467 = vadd.f32 0.0, %v466
      %v468 = vpop.f32.mrb[0].mxu0
      %v469 = vpop.f32.mrb[0].mxu0
      %v470 = vadd.f32 0.0, %v469
      %v471 = vpop.f32.mrb[0].mxu0
      %472 = vmatprep.mubr.bf16.mxu0 0
      %473 = vmatmul.mubr.bf16.gmra.mrb[0].mxu0 %v318
      %v474 = vpop.f32.mrb[0].mxu0
      %v475 = vadd.f32 0.0, %v474
      %v476 = vpop.f32.mrb[0].mxu0
      %v477 = vpop.f32.mrb[0].mxu0
      %v478 = vadd.f32 0.0, %v477
      %v479 = vpop.f32.mrb[0].mxu0
      %480 = vmatprep.mubr.bf16.mxu0 0
      %481 = vmatmul.mubr.bf16.gmra.mrb[0].mxu0 %v321
      %v482 = vpop.f32.mrb[0].mxu0
      %v483 = vadd.f32 0.0, %v482
      %v484 = vpop.f32.mrb[0].mxu0
      %v485 = vpop.f32.mrb[0].mxu0
      %v486 = vadd.f32 0.0, %v485
      %v487 = vpop.f32.mrb[0].mxu0
      %488 = vmatprep.mubr.bf16.mxu0 0
      %489 = vmatmul.mubr.bf16.gmra.mrb[0].mxu0 %v324
      %v490 = vpop.f32.mrb[0].mxu0
      %v491 = vadd.f32 0.0, %v490
      %v492 = vpop.f32.mrb[0].mxu0
      %v493 = vpop.f32.mrb[0].mxu0
      %v494 = vadd.f32 0.0, %v493
      %v495 = vpop.f32.mrb[0].mxu0
      %496 = vmatprep.mubr.bf16.mxu0 0
      %497 = vmatmul.mubr.bf16.gmra.mrb[0].mxu0 %v327
      %v498 = vpop.f32.mrb[0].mxu0
      %v499 = vadd.f32 0.0, %v498
      %v500 = vpop.f32.mrb[0].mxu0
      %v501 = vpop.f32.mrb[0].mxu0
      %v502 = vadd.f32 0.0, %v501
      %v503 = vpop.f32.mrb[0].mxu0
      %504 = vdwg.mxu0
      %v506 = vsel %vm277, %v206, 0
      %v509 = vsel %vm277, %v207, 0
      %v512 = vsel %vm277, %v208, 0
      %v515 = vsel %vm277, %v209, 0
      %v518 = vsel %vm277, %v210, 0
      %v521 = vsel %vm277, %v211, 0
      %v524 = vsel %vm277, %v212, 0
      %v527 = vsel %vm277, %v213, 0
      %v530 = vsel %vm277, %v214, 0
      %v533 = vsel %vm277, %v215, 0
      %v536 = vsel %vm277, %v216, 0
      %v539 = vsel %vm277, %v217, 0
      %v542 = vsel %vm277, %v218, 0
      %v545 = vsel %vm277, %v219, 0
      %v548 = vsel %vm277, %v220, 0
      %v551 = vsel %vm277, %v221, 0
      %v554 = vsel %vm277, %v222, 0
      %v557 = vand.u32 %v223, %v332
      %559 = vmatprep.subr.bf16.mxu0 0
      %560 = vmatpush1.bf16.msra.mxu0 %v557
      %561 = vmatprep.subr.bf16.mxu0 0
      %562 = vmatpush1.bf16.msra.mxu0 0
      %563 = vmatprep.subr.bf16.mxu0 0
      %564 = vmatpush1.bf16.msra.mxu0 0
      %565 = vmatprep.subr.bf16.mxu0 0
      %566 = vmatpush1.bf16.msra.mxu0 0
      %567 = vmatprep.subr.bf16.mxu0 0
      %568 = vmatpush1.bf16.msra.mxu0 0
      %569 = vmatprep.subr.bf16.mxu0 0
      %570 = vmatpush1.bf16.msra.mxu0 0
      %571 = vmatprep.subr.bf16.mxu0 0
      %572 = vmatpush1.bf16.msra.mxu0 0
      %573 = vmatprep.subr.bf16.mxu0 0
      %574 = vmatpush1.bf16.msra.mxu0 0
      %575 = vmatprep.subr.bf16.mxu0 0
      %576 = vmatpush1.bf16.msra.mxu0 0
      %577 = vmatprep.subr.bf16.mxu0 0
      %578 = vmatpush1.bf16.msra.mxu0 0
      %579 = vmatprep.subr.bf16.mxu0 0
      %580 = vmatpush1.bf16.msra.mxu0 0
      %581 = vmatprep.subr.bf16.mxu0 0
      %582 = vmatpush1.bf16.msra.mxu0 0
      %583 = vmatprep.subr.bf16.mxu0 0
      %584 = vmatpush1.bf16.msra.mxu0 0
      %585 = vmatprep.subr.bf16.mxu0 0
      %586 = vmatpush1.bf16.msra.mxu0 0
      %587 = vmatprep.subr.bf16.mxu0 0
      %588 = vmatpush1.bf16.msra.mxu0 0
      %589 = vmatprep.subr.bf16.mxu0 0
      %590 = vmatpush1.bf16.msra.mxu0 0
      %591 = vmatprep.mubr.bf16.mxu0 0
      %592 = vmatmul.mubr.bf16.gmra.mrb[0].mxu0 %v506
      %v593 = vpop.f32.mrb[0].mxu0
      %v594 = vadd.f32 %v371, %v593
      %v595 = vpop.f32.mrb[0].mxu0
      %v596 = vpop.f32.mrb[0].mxu0
      %v597 = vadd.f32 %v374, %v596
      %v598 = vpop.f32.mrb[0].mxu0
      %599 = vmatprep.mubr.bf16.mxu0 0
      %600 = vmatmul.mubr.bf16.gmra.mrb[0].mxu0 %v509
      %v601 = vpop.f32.mrb[0].mxu0
      %v602 = vadd.f32 %v379, %v601
      %v603 = vpop.f32.mrb[0].mxu0
      %v604 = vpop.f32.mrb[0].mxu0
      %v605 = vadd.f32 %v382, %v604
      %v606 = vpop.f32.mrb[0].mxu0
      %607 = vmatprep.mubr.bf16.mxu0 0
      %608 = vmatmul.mubr.bf16.gmra.mrb[0].mxu0 %v512
      %v609 = vpop.f32.mrb[0].mxu0
      %v610 = vadd.f32 %v387, %v609
      %v611 = vpop.f32.mrb[0].mxu0
      %v612 = vpop.f32.mrb[0].mxu0
      %v613 = vadd.f32 %v390, %v612
      %v614 = vpop.f32.mrb[0].mxu0
      %615 = vmatprep.mubr.bf16.mxu0 0
      %616 = vmatmul.mubr.bf16.gmra.mrb[0].mxu0 %v515
      %v617 = vpop.f32.mrb[0].mxu0
      %v618 = vadd.f32 %v395, %v617
      %v619 = vpop.f32.mrb[0].mxu0
      %v620 = vpop.f32.mrb[0].mxu0
      %v621 = vadd.f32 %v398, %v620
      %v622 = vpop.f32.mrb[0].mxu0
      %623 = vmatprep.mubr.bf16.mxu0 0
      %624 = vmatmul.mubr.bf16.gmra.mrb[0].mxu0 %v518
      %v625 = vpop.f32.mrb[0].mxu0
      %v626 = vadd.f32 %v403, %v625
      %v627 = vpop.f32.mrb[0].mxu0
      %v628 = vpop.f32.mrb[0].mxu0
      %v629 = vadd.f32 %v406, %v628
      %v630 = vpop.f32.mrb[0].mxu0
      %631 = vmatprep.mubr.bf16.mxu0 0
      %632 = vmatmul.mubr.bf16.gmra.mrb[0].mxu0 %v521
      %v633 = vpop.f32.mrb[0].mxu0
      %v634 = vadd.f32 %v411, %v633
      %v635 = vpop.f32.mrb[0].mxu0
      %v636 = vpop.f32.mrb[0].mxu0
      %v637 = vadd.f32 %v414, %v636
      %v638 = vpop.f32.mrb[0].mxu0
      %639 = vmatprep.mubr.bf16.mxu0 0
      %640 = vmatmul.mubr.bf16.gmra.mrb[0].mxu0 %v524
      %v641 = vpop.f32.mrb[0].mxu0
      %v642 = vadd.f32 %v419, %v641
      %v643 = vpop.f32.mrb[0].mxu0
      %v644 = vpop.f32.mrb[0].mxu0
      %v645 = vadd.f32 %v422, %v644
      %v646 = vpop.f32.mrb[0].mxu0
      %647 = vmatprep.mubr.bf16.mxu0 0
      %648 = vmatmul.mubr.bf16.gmra.mrb[0].mxu0 %v527
      %v649 = vpop.f32.mrb[0].mxu0
      %v650 = vadd.f32 %v427, %v649
      %v651 = vpop.f32.mrb[0].mxu0
      %v652 = vpop.f32.mrb[0].mxu0
      %v653 = vadd.f32 %v430, %v652
      %v654 = vpop.f32.mrb[0].mxu0
      %655 = vmatprep.mubr.bf16.mxu0 0
      %656 = vmatmul.mubr.bf16.gmra.mrb[0].mxu0 %v530
      %v657 = vpop.f32.mrb[0].mxu0
      %v658 = vadd.f32 %v435, %v657
      %v659 = vpop.f32.mrb[0].mxu0
      %v660 = vpop.f32.mrb[0].mxu0
      %v661 = vadd.f32 %v438, %v660
      %v662 = vpop.f32.mrb[0].mxu0
      %663 = vmatprep.mubr.bf16.mxu0 0
      %664 = vmatmul.mubr.bf16.gmra.mrb[0].mxu0 %v533
      %v665 = vpop.f32.mrb[0].mxu0
      %v666 = vadd.f32 %v443, %v665
      %v667 = vpop.f32.mrb[0].mxu0
      %v668 = vpop.f32.mrb[0].mxu0
      %v669 = vadd.f32 %v446, %v668
      %v670 = vpop.f32.mrb[0].mxu0
      %671 = vmatprep.mubr.bf16.mxu0 0
      %672 = vmatmul.mubr.bf16.gmra.mrb[0].mxu0 %v536
      %v673 = vpop.f32.mrb[0].mxu0
      %v674 = vadd.f32 %v451, %v673
      %v675 = vpop.f32.mrb[0].mxu0
      %v676 = vpop.f32.mrb[0].mxu0
      %v677 = vadd.f32 %v454, %v676
      %v678 = vpop.f32.mrb[0].mxu0
      %679 = vmatprep.mubr.bf16.mxu0 0
      %680 = vmatmul.mubr.bf16.gmra.mrb[0].mxu0 %v539
      %v681 = vpop.f32.mrb[0].mxu0
      %v682 = vadd.f32 %v459, %v681
      %v683 = vpop.f32.mrb[0].mxu0
      %v684 = vpop.f32.mrb[0].mxu0
      %v685 = vadd.f32 %v462, %v684
      %v686 = vpop.f32.mrb[0].mxu0
      %687 = vmatprep.mubr.bf16.mxu0 0
      %688 = vmatmul.mubr.bf16.gmra.mrb[0].mxu0 %v542
      %v689 = vpop.f32.mrb[0].mxu0
      %v690 = vadd.f32 %v467, %v689
      %v691 = vpop.f32.mrb[0].mxu0
      %v692 = vpop.f32.mrb[0].mxu0
      %v693 = vadd.f32 %v470, %v692
      %v694 = vpop.f32.mrb[0].mxu0
      %695 = vmatprep.mubr.bf16.mxu0 0
      %696 = vmatmul.mubr.bf16.gmra.mrb[0].mxu0 %v545
      %v697 = vpop.f32.mrb[0].mxu0
      %v698 = vadd.f32 %v475, %v697
      %v699 = vpop.f32.mrb[0].mxu0
      %v700 = vpop.f32.mrb[0].mxu0
      %v701 = vadd.f32 %v478, %v700
      %v702 = vpop.f32.mrb[0].mxu0
      %703 = vmatprep.mubr.bf16.mxu0 0
      %704 = vmatmul.mubr.bf16.gmra.mrb[0].mxu0 %v548
      %v705 = vpop.f32.mrb[0].mxu0
      %v706 = vadd.f32 %v483, %v705
      %v707 = vpop.f32.mrb[0].mxu0
      %v708 = vpop.f32.mrb[0].mxu0
      %v709 = vadd.f32 %v486, %v708
      %v710 = vpop.f32.mrb[0].mxu0
      %711 = vmatprep.mubr.bf16.mxu0 0
      %712 = vmatmul.mubr.bf16.gmra.mrb[0].mxu0 %v551
      %v713 = vpop.f32.mrb[0].mxu0
      %v714 = vadd.f32 %v491, %v713
      %v715 = vpop.f32.mrb[0].mxu0
      %v716 = vpop.f32.mrb[0].mxu0
      %v717 = vadd.f32 %v494, %v716
      %v718 = vpop.f32.mrb[0].mxu0
      %719 = vmatprep.mubr.bf16.mxu0 0
      %720 = vmatmul.mubr.bf16.gmra.mrb[0].mxu0 %v554
      %v721 = vpop.f32.mrb[0].mxu0
      %v722 = vadd.f32 %v499, %v721
      %v723 = vpop.f32.mrb[0].mxu0
      %v724 = vpop.f32.mrb[0].mxu0
      %v725 = vadd.f32 %v502, %v724
      %v726 = vpop.f32.mrb[0].mxu0
      %727 = vdwg.mxu0
      %v728 = vld [vmem:[%s165 + $0x1] sm:$0xff]
      %v729 = vld [vmem:[%s165 + $0x9] sm:$0xff]
      %v730 = vld [vmem:[%s165 + $0x11] sm:$0xff]
      %v731 = vld [vmem:[%s165 + $0x19] sm:$0xff]
      %v732 = vld [vmem:[%s165 + $0x21] sm:$0xff]
      %v733 = vld [vmem:[%s165 + $0x29] sm:$0xff]
      %v734 = vld [vmem:[%s165 + $0x31] sm:$0xff]
      %v735 = vld [vmem:[%s165 + $0x39] sm:$0xff]
      %v736 = vld [vmem:[%s165 + $0x41] sm:$0xff]
      %v737 = vld [vmem:[%s165 + $0x49] sm:$0xff]
      %v738 = vld [vmem:[%s165 + $0x51] sm:$0xff]
      %v739 = vld [vmem:[%s165 + $0x59] sm:$0xff]
      %v740 = vld [vmem:[%s165 + $0x61] sm:$0xff]
      %v741 = vld [vmem:[%s165 + $0x69] sm:$0xff]
      %v742 = vld [vmem:[%s165 + $0x71] sm:$0xff]
      %v743 = vld [vmem:[%s165 + $0x79] sm:$0xff]
      %v744 = vld [vmem:[%s165 + $0x81] sm:$0xff]
      %v745 = vld [vmem:[%s165 + $0x89] sm:$0xff]
      %v746 = vld [vmem:[%s165 + $0x91] sm:$0xff]
      %v747 = vld [vmem:[%s165 + $0x99] sm:$0xff]
      %v748 = vld [vmem:[%s165 + $0xa1] sm:$0xff]
      %v749 = vld [vmem:[%s165 + $0xa9] sm:$0xff]
      %v750 = vld [vmem:[%s165 + $0xb1] sm:$0xff]
      %v751 = vld [vmem:[%s165 + $0xb9] sm:$0xff]
      %v752 = vld [vmem:[%s165 + $0xc1] sm:$0xff]
      %v753 = vld [vmem:[%s165 + $0xc9] sm:$0xff]
      %v754 = vld [vmem:[%s165 + $0xd1] sm:$0xff]
      %v755 = vld [vmem:[%s165 + $0xd9] sm:$0xff]
      %v756 = vld [vmem:[%s165 + $0xe1] sm:$0xff]
      %v757 = vld [vmem:[%s165 + $0xe9] sm:$0xff]
      %v758 = vld [vmem:[%s165 + $0xf1] sm:$0xff]
      %v759 = vld [vmem:[%s165 + $0xf9] sm:$0xff]
      %v760 = vld [vmem:[%s165 + $0x101] sm:$0xff]
      %v761 = vld [vmem:[%s165 + $0x109] sm:$0xff]
      %v762 = vpack.c.bf16 %v729, %v728
      %v763 = vpack.c.bf16 %v731, %v730
      %v764 = vpack.c.bf16 %v733, %v732
      %v765 = vpack.c.bf16 %v735, %v734
      %v766 = vpack.c.bf16 %v737, %v736
      %v767 = vpack.c.bf16 %v739, %v738
      %v768 = vpack.c.bf16 %v741, %v740
      %v769 = vpack.c.bf16 %v743, %v742
      %v770 = vpack.c.bf16 %v745, %v744
      %v771 = vpack.c.bf16 %v747, %v746
      %v772 = vpack.c.bf16 %v749, %v748
      %v773 = vpack.c.bf16 %v751, %v750
      %v774 = vpack.c.bf16 %v753, %v752
      %v775 = vpack.c.bf16 %v755, %v754
      %v776 = vpack.c.bf16 %v757, %v756
      %v777 = vpack.c.bf16 %v759, %v758
      %v778 = vpack.c.bf16 %v761, %v760
      %s779 = scalar_lea.vmem %s1, 4
      %v780 = vld [vmem:[%s779] sm:$0x3]
      %v782 = vsel %vm277, %v762, 0
      %v785 = vsel %vm277, %v763, 0
      %v788 = vsel %vm277, %v764, 0
      %v791 = vsel %vm277, %v765, 0
      %v794 = vsel %vm277, %v766, 0
      %v797 = vsel %vm277, %v767, 0
      %v800 = vsel %vm277, %v768, 0
      %v803 = vsel %vm277, %v769, 0
      %v806 = vsel %vm277, %v770, 0
      %v809 = vsel %vm277, %v771, 0
      %v812 = vsel %vm277, %v772, 0
      %v815 = vsel %vm277, %v773, 0
      %v818 = vsel %vm277, %v774, 0
      %v821 = vsel %vm277, %v775, 0
      %v824 = vsel %vm277, %v776, 0
      %v827 = vsel %vm277, %v777, 0
      %v830 = vsel %vm277, %v778, 0
      %v833 = vand.u32 %v780, %v332
      %835 = vmatprep.subr.bf16.mxu0 0
      %836 = vmatpush1.bf16.msra.mxu0 %v833
      %837 = vmatprep.subr.bf16.mxu0 0
      %838 = vmatpush1.bf16.msra.mxu0 0
      %839 = vmatprep.subr.bf16.mxu0 0
      %840 = vmatpush1.bf16.msra.mxu0 0
      %841 = vmatprep.subr.bf16.mxu0 0
      %842 = vmatpush1.bf16.msra.mxu0 0
      %843 = vmatprep.subr.bf16.mxu0 0
      %844 = vmatpush1.bf16.msra.mxu0 0
      %845 = vmatprep.subr.bf16.mxu0 0
      %846 = vmatpush1.bf16.msra.mxu0 0
      %847 = vmatprep.subr.bf16.mxu0 0
      %848 = vmatpush1.bf16.msra.mxu0 0
      %849 = vmatprep.subr.bf16.mxu0 0
      %850 = vmatpush1.bf16.msra.mxu0 0
      %851 = vmatprep.subr.bf16.mxu0 0
      %852 = vmatpush1.bf16.msra.mxu0 0
      %853 = vmatprep.subr.bf16.mxu0 0
      %854 = vmatpush1.bf16.msra.mxu0 0
      %855 = vmatprep.subr.bf16.mxu0 0
      %856 = vmatpush1.bf16.msra.mxu0 0
      %857 = vmatprep.subr.bf16.mxu0 0
      %858 = vmatpush1.bf16.msra.mxu0 0
      %859 = vmatprep.subr.bf16.mxu0 0
      %860 = vmatpush1.bf16.msra.mxu0 0
      %861 = vmatprep.subr.bf16.mxu0 0
      %862 = vmatpush1.bf16.msra.mxu0 0
      %863 = vmatprep.subr.bf16.mxu0 0
      %864 = vmatpush1.bf16.msra.mxu0 0
      %865 = vmatprep.subr.bf16.mxu0 0
      %866 = vmatpush1.bf16.msra.mxu0 0
      %867 = vmatprep.mubr.bf16.mxu0 0
      %868 = vmatmul.mubr.bf16.gmra.mrb[0].mxu0 %v782
      %v869 = vpop.f32.mrb[0].mxu0
      %v870 = vadd.f32 0.0, %v869
      %v871 = vpop.f32.mrb[0].mxu0
      %v872 = vpop.f32.mrb[0].mxu0
      %v873 = vadd.f32 0.0, %v872
      %v874 = vpop.f32.mrb[0].mxu0
      %875 = vmatprep.mubr.bf16.mxu0 0
      %876 = vmatmul.mubr.bf16.gmra.mrb[0].mxu0 %v785
      %v877 = vpop.f32.mrb[0].mxu0
      %v878 = vadd.f32 0.0, %v877
      %v879 = vpop.f32.mrb[0].mxu0
      %v880 = vpop.f32.mrb[0].mxu0
      %v881 = vadd.f32 0.0, %v880
      %v882 = vpop.f32.mrb[0].mxu0
      %883 = vmatprep.mubr.bf16.mxu0 0
      %884 = vmatmul.mubr.bf16.gmra.mrb[0].mxu0 %v788
      %v885 = vpop.f32.mrb[0].mxu0
      %v886 = vadd.f32 0.0, %v885
      %v887 = vpop.f32.mrb[0].mxu0
      %v888 = vpop.f32.mrb[0].mxu0
      %v889 = vadd.f32 0.0, %v888
      %v890 = vpop.f32.mrb[0].mxu0
      %891 = vmatprep.mubr.bf16.mxu0 0
      %892 = vmatmul.mubr.bf16.gmra.mrb[0].mxu0 %v791
      %v893 = vpop.f32.mrb[0].mxu0
      %v894 = vadd.f32 0.0, %v893
      %v895 = vpop.f32.mrb[0].mxu0
      %v896 = vpop.f32.mrb[0].mxu0
      %v897 = vadd.f32 0.0, %v896
      %v898 = vpop.f32.mrb[0].mxu0
      %899 = vmatprep.mubr.bf16.mxu0 0
      %900 = vmatmul.mubr.bf16.gmra.mrb[0].mxu0 %v794
      %v901 = vpop.f32.mrb[0].mxu0
      %v902 = vadd.f32 0.0, %v901
      %v903 = vpop.f32.mrb[0].mxu0
      %v904 = vpop.f32.mrb[0].mxu0
      %v905 = vadd.f32 0.0, %v904
      %v906 = vpop.f32.mrb[0].mxu0
      %907 = vmatprep.mubr.bf16.mxu0 0
      %908 = vmatmul.mubr.bf16.gmra.mrb[0].mxu0 %v797
      %v909 = vpop.f32.mrb[0].mxu0
      %v910 = vadd.f32 0.0, %v909
      %v911 = vpop.f32.mrb[0].mxu0
      %v912 = vpop.f32.mrb[0].mxu0
      %v913 = vadd.f32 0.0, %v912
      %v914 = vpop.f32.mrb[0].mxu0
      %915 = vmatprep.mubr.bf16.mxu0 0
      %916 = vmatmul.mubr.bf16.gmra.mrb[0].mxu0 %v800
      %v917 = vpop.f32.mrb[0].mxu0
      %v918 = vadd.f32 0.0, %v917
      %v919 = vpop.f32.mrb[0].mxu0
      %v920 = vpop.f32.mrb[0].mxu0
      %v921 = vadd.f32 0.0, %v920
      %v922 = vpop.f32.mrb[0].mxu0
      %923 = vmatprep.mubr.bf16.mxu0 0
      %924 = vmatmul.mubr.bf16.gmra.mrb[0].mxu0 %v803
      %v925 = vpop.f32.mrb[0].mxu0
      %v926 = vadd.f32 0.0, %v925
      %v927 = vpop.f32.mrb[0].mxu0
      %v928 = vpop.f32.mrb[0].mxu0
      %v929 = vadd.f32 0.0, %v928
      %v930 = vpop.f32.mrb[0].mxu0
      %931 = vmatprep.mubr.bf16.mxu0 0
      %932 = vmatmul.mubr.bf16.gmra.mrb[0].mxu0 %v806
      %v933 = vpop.f32.mrb[0].mxu0
      %v934 = vadd.f32 0.0, %v933
      %v935 = vpop.f32.mrb[0].mxu0
      %v936 = vpop.f32.mrb[0].mxu0
      %v937 = vadd.f32 0.0, %v936
      %v938 = vpop.f32.mrb[0].mxu0
      %939 = vmatprep.mubr.bf16.mxu0 0
      %940 = vmatmul.mubr.bf16.gmra.mrb[0].mxu0 %v809
      %v941 = vpop.f32.mrb[0].mxu0
      %v942 = vadd.f32 0.0, %v941
      %v943 = vpop.f32.mrb[0].mxu0
      %v944 = vpop.f32.mrb[0].mxu0
      %v945 = vadd.f32 0.0, %v944
      %v946 = vpop.f32.mrb[0].mxu0
      %947 = vmatprep.mubr.bf16.mxu0 0
      %948 = vmatmul.mubr.bf16.gmra.mrb[0].mxu0 %v812
      %v949 = vpop.f32.mrb[0].mxu0
      %v950 = vadd.f32 0.0, %v949
      %v951 = vpop.f32.mrb[0].mxu0
      %v952 = vpop.f32.mrb[0].mxu0
      %v953 = vadd.f32 0.0, %v952
      %v954 = vpop.f32.mrb[0].mxu0
      %955 = vmatprep.mubr.bf16.mxu0 0
      %956 = vmatmul.mubr.bf16.gmra.mrb[0].mxu0 %v815
      %v957 = vpop.f32.mrb[0].mxu0
      %v958 = vadd.f32 0.0, %v957
      %v959 = vpop.f32.mrb[0].mxu0
      %v960 = vpop.f32.mrb[0].mxu0
      %v961 = vadd.f32 0.0, %v960
      %v962 = vpop.f32.mrb[0].mxu0
      %963 = vmatprep.mubr.bf16.mxu0 0
      %964 = vmatmul.mubr.bf16.gmra.mrb[0].mxu0 %v818
      %v965 = vpop.f32.mrb[0].mxu0
      %v966 = vadd.f32 0.0, %v965
      %v967 = vpop.f32.mrb[0].mxu0
      %v968 = vpop.f32.mrb[0].mxu0
      %v969 = vadd.f32 0.0, %v968
      %v970 = vpop.f32.mrb[0].mxu0
      %971 = vmatprep.mubr.bf16.mxu0 0
      %972 = vmatmul.mubr.bf16.gmra.mrb[0].mxu0 %v821
      %v973 = vpop.f32.mrb[0].mxu0
      %v974 = vadd.f32 0.0, %v973
      %v975 = vpop.f32.mrb[0].mxu0
      %v976 = vpop.f32.mrb[0].mxu0
      %v977 = vadd.f32 0.0, %v976
      %v978 = vpop.f32.mrb[0].mxu0
      %979 = vmatprep.mubr.bf16.mxu0 0
      %980 = vmatmul.mubr.bf16.gmra.mrb[0].mxu0 %v824
      %v981 = vpop.f32.mrb[0].mxu0
      %v982 = vadd.f32 0.0, %v981
      %v983 = vpop.f32.mrb[0].mxu0
      %v984 = vpop.f32.mrb[0].mxu0
      %v985 = vadd.f32 0.0, %v984
      %v986 = vpop.f32.mrb[0].mxu0
      %987 = vmatprep.mubr.bf16.mxu0 0
      %988 = vmatmul.mubr.bf16.gmra.mrb[0].mxu0 %v827
      %v989 = vpop.f32.mrb[0].mxu0
      %v990 = vadd.f32 0.0, %v989
      %v991 = vpop.f32.mrb[0].mxu0
      %v992 = vpop.f32.mrb[0].mxu0
      %v993 = vadd.f32 0.0, %v992
      %v994 = vpop.f32.mrb[0].mxu0
      %995 = vmatprep.mubr.bf16.mxu0 0
      %996 = vmatmul.mubr.bf16.gmra.mrb[0].mxu0 %v830
      %v997 = vpop.f32.mrb[0].mxu0
      %v998 = vadd.f32 0.0, %v997
      %v999 = vpop.f32.mrb[0].mxu0
      %v1000 = vpop.f32.mrb[0].mxu0
      %v1001 = vadd.f32 0.0, %v1000
      %v1002 = vpop.f32.mrb[0].mxu0
      %1003 = vdwg.mxu0
      %v1004 = vadd.f32 %v594, %v870
      %v1005 = vadd.f32 %v597, %v873
      %v1006 = vadd.f32 %v602, %v878
      %v1007 = vadd.f32 %v605, %v881
      %v1008 = vadd.f32 %v610, %v886
      %v1009 = vadd.f32 %v613, %v889
      %v1010 = vadd.f32 %v618, %v894
      %v1011 = vadd.f32 %v621, %v897
      %v1012 = vadd.f32 %v626, %v902
      %v1013 = vadd.f32 %v629, %v905
      %v1014 = vadd.f32 %v634, %v910
      %v1015 = vadd.f32 %v637, %v913
      %v1016 = vadd.f32 %v642, %v918
      %v1017 = vadd.f32 %v645, %v921
      %v1018 = vadd.f32 %v650, %v926
      %v1019 = vadd.f32 %v653, %v929
      %v1020 = vadd.f32 %v658, %v934
      %v1021 = vadd.f32 %v661, %v937
      %v1022 = vadd.f32 %v666, %v942
      %v1023 = vadd.f32 %v669, %v945
      %v1024 = vadd.f32 %v674, %v950
      %v1025 = vadd.f32 %v677, %v953
      %v1026 = vadd.f32 %v682, %v958
      %v1027 = vadd.f32 %v685, %v961
      %v1028 = vadd.f32 %v690, %v966
      %v1029 = vadd.f32 %v693, %v969
      %v1030 = vadd.f32 %v698, %v974
      %v1031 = vadd.f32 %v701, %v977
      %v1032 = vadd.f32 %v706, %v982
      %v1033 = vadd.f32 %v709, %v985
      %v1034 = vadd.f32 %v714, %v990
      %v1035 = vadd.f32 %v717, %v993
      %v1036 = vadd.f32 %v722, %v998
      %v1037 = vadd.f32 %v725, %v1001
      %v1038 = vld [vmem:[%s165 + $0x250] sm:$0xff]
      %v1039 = vld [vmem:[%s165 + $0x258] sm:$0xff]
      %v1040 = vld [vmem:[%s165 + $0x260] sm:$0xff]
      %v1041 = vld [vmem:[%s165 + $0x268] sm:$0xff]
      %v1042 = vld [vmem:[%s165 + $0x270] sm:$0xff]
      %v1043 = vld [vmem:[%s165 + $0x278] sm:$0xff]
      %v1044 = vld [vmem:[%s165 + $0x280] sm:$0xff]
      %v1045 = vld [vmem:[%s165 + $0x288] sm:$0xff]
      %v1046 = vld [vmem:[%s165 + $0x290] sm:$0xff]
      %v1047 = vld [vmem:[%s165 + $0x298] sm:$0xff]
      %v1048 = vld [vmem:[%s165 + $0x2a0] sm:$0xff]
      %v1049 = vld [vmem:[%s165 + $0x2a8] sm:$0xff]
      %v1050 = vld [vmem:[%s165 + $0x2b0] sm:$0xff]
      %v1051 = vld [vmem:[%s165 + $0x2b8] sm:$0xff]
      %v1052 = vld [vmem:[%s165 + $0x2c0] sm:$0xff]
      %v1053 = vld [vmem:[%s165 + $0x2c8] sm:$0xff]
      %v1054 = vld [vmem:[%s165 + $0x2d0] sm:$0xff]
      %v1055 = vld [vmem:[%s165 + $0x2d8] sm:$0xff]
      %v1056 = vld [vmem:[%s165 + $0x2e0] sm:$0xff]
      %v1057 = vld [vmem:[%s165 + $0x2e8] sm:$0xff]
      %v1058 = vld [vmem:[%s165 + $0x2f0] sm:$0xff]
      %v1059 = vld [vmem:[%s165 + $0x2f8] sm:$0xff]
      %v1060 = vld [vmem:[%s165 + $0x300] sm:$0xff]
      %v1061 = vld [vmem:[%s165 + $0x308] sm:$0xff]
      %v1062 = vld [vmem:[%s165 + $0x310] sm:$0xff]
      %v1063 = vld [vmem:[%s165 + $0x318] sm:$0xff]
      %v1064 = vld [vmem:[%s165 + $0x320] sm:$0xff]
      %v1065 = vld [vmem:[%s165 + $0x328] sm:$0xff]
      %v1066 = vld [vmem:[%s165 + $0x330] sm:$0xff]
      %v1067 = vld [vmem:[%s165 + $0x338] sm:$0xff]
      %v1068 = vld [vmem:[%s165 + $0x340] sm:$0xff]
      %v1069 = vld [vmem:[%s165 + $0x348] sm:$0xff]
      %v1070 = vld [vmem:[%s165 + $0x350] sm:$0xff]
      %v1071 = vld [vmem:[%s165 + $0x358] sm:$0xff]
      %v1072 = vpack.c.bf16 %v1039, %v1038
      %v1073 = vpack.c.bf16 %v1041, %v1040
      %v1074 = vpack.c.bf16 %v1043, %v1042
      %v1075 = vpack.c.bf16 %v1045, %v1044
      %v1076 = vpack.c.bf16 %v1047, %v1046
      %v1077 = vpack.c.bf16 %v1049, %v1048
      %v1078 = vpack.c.bf16 %v1051, %v1050
      %v1079 = vpack.c.bf16 %v1053, %v1052
      %v1080 = vpack.c.bf16 %v1055, %v1054
      %v1081 = vpack.c.bf16 %v1057, %v1056
      %v1082 = vpack.c.bf16 %v1059, %v1058
      %v1083 = vpack.c.bf16 %v1061, %v1060
      %v1084 = vpack.c.bf16 %v1063, %v1062
      %v1085 = vpack.c.bf16 %v1065, %v1064
      %v1086 = vpack.c.bf16 %v1067, %v1066
      %v1087 = vpack.c.bf16 %v1069, %v1068
      %v1088 = vpack.c.bf16 %v1071, %v1070
      %s1089 = scalar_lea.vmem %s1, 6
      %v1090 = vld [vmem:[%s1089] sm:$0x3]
      %v1092 = vsel %vm277, %v1072, 0
      %v1095 = vsel %vm277, %v1073, 0
      %v1098 = vsel %vm277, %v1074, 0
      %v1101 = vsel %vm277, %v1075, 0
      %v1104 = vsel %vm277, %v1076, 0
      %v1107 = vsel %vm277, %v1077, 0
      %v1110 = vsel %vm277, %v1078, 0
      %v1113 = vsel %vm277, %v1079, 0
      %v1116 = vsel %vm277, %v1080, 0
      %v1119 = vsel %vm277, %v1081, 0
      %v1122 = vsel %vm277, %v1082, 0
      %v1125 = vsel %vm277, %v1083, 0
      %v1128 = vsel %vm277, %v1084, 0
      %v1131 = vsel %vm277, %v1085, 0
      %v1134 = vsel %vm277, %v1086, 0
      %v1137 = vsel %vm277, %v1087, 0
      %v1140 = vsel %vm277, %v1088, 0
      %v1143 = vand.u32 %v1090, %v332
      %1145 = vmatprep.subr.bf16.mxu0 0
      %1146 = vmatpush1.bf16.msra.mxu0 %v1143
      %1147 = vmatprep.subr.bf16.mxu0 0
      %1148 = vmatpush1.bf16.msra.mxu0 0
      %1149 = vmatprep.subr.bf16.mxu0 0
      %1150 = vmatpush1.bf16.msra.mxu0 0
      %1151 = vmatprep.subr.bf16.mxu0 0
      %1152 = vmatpush1.bf16.msra.mxu0 0
      %1153 = vmatprep.subr.bf16.mxu0 0
      %1154 = vmatpush1.bf16.msra.mxu0 0
      %1155 = vmatprep.subr.bf16.mxu0 0
      %1156 = vmatpush1.bf16.msra.mxu0 0
      %1157 = vmatprep.subr.bf16.mxu0 0
      %1158 = vmatpush1.bf16.msra.mxu0 0
      %1159 = vmatprep.subr.bf16.mxu0 0
      %1160 = vmatpush1.bf16.msra.mxu0 0
      %1161 = vmatprep.subr.bf16.mxu0 0
      %1162 = vmatpush1.bf16.msra.mxu0 0
      %1163 = vmatprep.subr.bf16.mxu0 0
      %1164 = vmatpush1.bf16.msra.mxu0 0
      %1165 = vmatprep.subr.bf16.mxu0 0
      %1166 = vmatpush1.bf16.msra.mxu0 0
      %1167 = vmatprep.subr.bf16.mxu0 0
      %1168 = vmatpush1.bf16.msra.mxu0 0
      %1169 = vmatprep.subr.bf16.mxu0 0
      %1170 = vmatpush1.bf16.msra.mxu0 0
      %1171 = vmatprep.subr.bf16.mxu0 0
      %1172 = vmatpush1.bf16.msra.mxu0 0
      %1173 = vmatprep.subr.bf16.mxu0 0
      %1174 = vmatpush1.bf16.msra.mxu0 0
      %1175 = vmatprep.subr.bf16.mxu0 0
      %1176 = vmatpush1.bf16.msra.mxu0 0
      %1177 = vmatprep.mubr.bf16.mxu0 0
      %1178 = vmatmul.mubr.bf16.gmra.mrb[0].mxu0 %v1092
      %v1179 = vpop.f32.mrb[0].mxu0
      %v1180 = vadd.f32 0.0, %v1179
      %v1181 = vpop.f32.mrb[0].mxu0
      %v1182 = vpop.f32.mrb[0].mxu0
      %v1183 = vadd.f32 0.0, %v1182
      %v1184 = vpop.f32.mrb[0].mxu0
      %1185 = vmatprep.mubr.bf16.mxu0 0
      %1186 = vmatmul.mubr.bf16.gmra.mrb[0].mxu0 %v1095
      %v1187 = vpop.f32.mrb[0].mxu0
      %v1188 = vadd.f32 0.0, %v1187
      %v1189 = vpop.f32.mrb[0].mxu0
      %v1190 = vpop.f32.mrb[0].mxu0
      %v1191 = vadd.f32 0.0, %v1190
      %v1192 = vpop.f32.mrb[0].mxu0
      %1193 = vmatprep.mubr.bf16.mxu0 0
      %1194 = vmatmul.mubr.bf16.gmra.mrb[0].mxu0 %v1098
      %v1195 = vpop.f32.mrb[0].mxu0
      %v1196 = vadd.f32 0.0, %v1195
      %v1197 = vpop.f32.mrb[0].mxu0
      %v1198 = vpop.f32.mrb[0].mxu0
      %v1199 = vadd.f32 0.0, %v1198
      %v1200 = vpop.f32.mrb[0].mxu0
      %1201 = vmatprep.mubr.bf16.mxu0 0
      %1202 = vmatmul.mubr.bf16.gmra.mrb[0].mxu0 %v1101
      %v1203 = vpop.f32.mrb[0].mxu0
      %v1204 = vadd.f32 0.0, %v1203
      %v1205 = vpop.f32.mrb[0].mxu0
      %v1206 = vpop.f32.mrb[0].mxu0
      %v1207 = vadd.f32 0.0, %v1206
      %v1208 = vpop.f32.mrb[0].mxu0
      %1209 = vmatprep.mubr.bf16.mxu0 0
      %1210 = vmatmul.mubr.bf16.gmra.mrb[0].mxu0 %v1104
      %v1211 = vpop.f32.mrb[0].mxu0
      %v1212 = vadd.f32 0.0, %v1211
      %v1213 = vpop.f32.mrb[0].mxu0
      %v1214 = vpop.f32.mrb[0].mxu0
      %v1215 = vadd.f32 0.0, %v1214
      %v1216 = vpop.f32.mrb[0].mxu0
      %1217 = vmatprep.mubr.bf16.mxu0 0
      %1218 = vmatmul.mubr.bf16.gmra.mrb[0].mxu0 %v1107
      %v1219 = vpop.f32.mrb[0].mxu0
      %v1220 = vadd.f32 0.0, %v1219
      %v1221 = vpop.f32.mrb[0].mxu0
      %v1222 = vpop.f32.mrb[0].mxu0
      %v1223 = vadd.f32 0.0, %v1222
      %v1224 = vpop.f32.mrb[0].mxu0
      %1225 = vmatprep.mubr.bf16.mxu0 0
      %1226 = vmatmul.mubr.bf16.gmra.mrb[0].mxu0 %v1110
      %v1227 = vpop.f32.mrb[0].mxu0
      %v1228 = vadd.f32 0.0, %v1227
      %v1229 = vpop.f32.mrb[0].mxu0
      %v1230 = vpop.f32.mrb[0].mxu0
      %v1231 = vadd.f32 0.0, %v1230
      %v1232 = vpop.f32.mrb[0].mxu0
      %1233 = vmatprep.mubr.bf16.mxu0 0
      %1234 = vmatmul.mubr.bf16.gmra.mrb[0].mxu0 %v1113
      %v1235 = vpop.f32.mrb[0].mxu0
      %v1236 = vadd.f32 0.0, %v1235
      %v1237 = vpop.f32.mrb[0].mxu0
      %v1238 = vpop.f32.mrb[0].mxu0
      %v1239 = vadd.f32 0.0, %v1238
      %v1240 = vpop.f32.mrb[0].mxu0
      %1241 = vmatprep.mubr.bf16.mxu0 0
      %1242 = vmatmul.mubr.bf16.gmra.mrb[0].mxu0 %v1116
      %v1243 = vpop.f32.mrb[0].mxu0
      %v1244 = vadd.f32 0.0, %v1243
      %v1245 = vpop.f32.mrb[0].mxu0
      %v1246 = vpop.f32.mrb[0].mxu0
      %v1247 = vadd.f32 0.0, %v1246
      %v1248 = vpop.f32.mrb[0].mxu0
      %1249 = vmatprep.mubr.bf16.mxu0 0
      %1250 = vmatmul.mubr.bf16.gmra.mrb[0].mxu0 %v1119
      %v1251 = vpop.f32.mrb[0].mxu0
      %v1252 = vadd.f32 0.0, %v1251
      %v1253 = vpop.f32.mrb[0].mxu0
      %v1254 = vpop.f32.mrb[0].mxu0
      %v1255 = vadd.f32 0.0, %v1254
      %v1256 = vpop.f32.mrb[0].mxu0
      %1257 = vmatprep.mubr.bf16.mxu0 0
      %1258 = vmatmul.mubr.bf16.gmra.mrb[0].mxu0 %v1122
      %v1259 = vpop.f32.mrb[0].mxu0
      %v1260 = vadd.f32 0.0, %v1259
      %v1261 = vpop.f32.mrb[0].mxu0
      %v1262 = vpop.f32.mrb[0].mxu0
      %v1263 = vadd.f32 0.0, %v1262
      %v1264 = vpop.f32.mrb[0].mxu0
      %1265 = vmatprep.mubr.bf16.mxu0 0
      %1266 = vmatmul.mubr.bf16.gmra.mrb[0].mxu0 %v1125
      %v1267 = vpop.f32.mrb[0].mxu0
      %v1268 = vadd.f32 0.0, %v1267
      %v1269 = vpop.f32.mrb[0].mxu0
      %v1270 = vpop.f32.mrb[0].mxu0
      %v1271 = vadd.f32 0.0, %v1270
      %v1272 = vpop.f32.mrb[0].mxu0
      %1273 = vmatprep.mubr.bf16.mxu0 0
      %1274 = vmatmul.mubr.bf16.gmra.mrb[0].mxu0 %v1128
      %v1275 = vpop.f32.mrb[0].mxu0
      %v1276 = vadd.f32 0.0, %v1275
      %v1277 = vpop.f32.mrb[0].mxu0
      %v1278 = vpop.f32.mrb[0].mxu0
      %v1279 = vadd.f32 0.0, %v1278
      %v1280 = vpop.f32.mrb[0].mxu0
      %1281 = vmatprep.mubr.bf16.mxu0 0
      %1282 = vmatmul.mubr.bf16.gmra.mrb[0].mxu0 %v1131
      %v1283 = vpop.f32.mrb[0].mxu0
      %v1284 = vadd.f32 0.0, %v1283
      %v1285 = vpop.f32.mrb[0].mxu0
      %v1286 = vpop.f32.mrb[0].mxu0
      %v1287 = vadd.f32 0.0, %v1286
      %v1288 = vpop.f32.mrb[0].mxu0
      %1289 = vmatprep.mubr.bf16.mxu0 0
      %1290 = vmatmul.mubr.bf16.gmra.mrb[0].mxu0 %v1134
      %v1291 = vpop.f32.mrb[0].mxu0
      %v1292 = vadd.f32 0.0, %v1291
      %v1293 = vpop.f32.mrb[0].mxu0
      %v1294 = vpop.f32.mrb[0].mxu0
      %v1295 = vadd.f32 0.0, %v1294
      %v1296 = vpop.f32.mrb[0].mxu0
      %1297 = vmatprep.mubr.bf16.mxu0 0
      %1298 = vmatmul.mubr.bf16.gmra.mrb[0].mxu0 %v1137
      %v1299 = vpop.f32.mrb[0].mxu0
      %v1300 = vadd.f32 0.0, %v1299
      %v1301 = vpop.f32.mrb[0].mxu0
      %v1302 = vpop.f32.mrb[0].mxu0
      %v1303 = vadd.f32 0.0, %v1302
      %v1304 = vpop.f32.mrb[0].mxu0
      %1305 = vmatprep.mubr.bf16.mxu0 0
      %1306 = vmatmul.mubr.bf16.gmra.mrb[0].mxu0 %v1140
      %v1307 = vpop.f32.mrb[0].mxu0
      %v1308 = vadd.f32 0.0, %v1307
      %v1309 = vpop.f32.mrb[0].mxu0
      %v1310 = vpop.f32.mrb[0].mxu0
      %v1311 = vadd.f32 0.0, %v1310
      %v1312 = vpop.f32.mrb[0].mxu0
      %1313 = vdwg.mxu0
      %v1314 = vadd.f32 %v1004, %v1180
      %v1315 = vadd.f32 %v1005, %v1183
      %v1316 = vadd.f32 %v1006, %v1188
      %v1317 = vadd.f32 %v1007, %v1191
      %v1318 = vadd.f32 %v1008, %v1196
      %v1319 = vadd.f32 %v1009, %v1199
      %v1320 = vadd.f32 %v1010, %v1204
      %v1321 = vadd.f32 %v1011, %v1207
      %v1322 = vadd.f32 %v1012, %v1212
      %v1323 = vadd.f32 %v1013, %v1215
      %v1324 = vadd.f32 %v1014, %v1220
      %v1325 = vadd.f32 %v1015, %v1223
      %v1326 = vadd.f32 %v1016, %v1228
      %v1327 = vadd.f32 %v1017, %v1231
      %v1328 = vadd.f32 %v1018, %v1236
      %v1329 = vadd.f32 %v1019, %v1239
      %v1330 = vadd.f32 %v1020, %v1244
      %v1331 = vadd.f32 %v1021, %v1247
      %v1332 = vadd.f32 %v1022, %v1252
      %v1333 = vadd.f32 %v1023, %v1255
      %v1334 = vadd.f32 %v1024, %v1260
      %v1335 = vadd.f32 %v1025, %v1263
      %v1336 = vadd.f32 %v1026, %v1268
      %v1337 = vadd.f32 %v1027, %v1271
      %v1338 = vadd.f32 %v1028, %v1276
      %v1339 = vadd.f32 %v1029, %v1279
      %v1340 = vadd.f32 %v1030, %v1284
      %v1341 = vadd.f32 %v1031, %v1287
      %v1342 = vadd.f32 %v1032, %v1292
      %v1343 = vadd.f32 %v1033, %v1295
      %v1344 = vadd.f32 %v1034, %v1300
      %v1345 = vadd.f32 %v1035, %v1303
      %v1346 = vadd.f32 %v1036, %v1308
      %v1347 = vadd.f32 %v1037, %v1311
      %v1348 = vld [vmem:[%s165 + $0x378] sm:$0xff]
      %v1349 = vld [vmem:[%s165 + $0x380] sm:$0xff]
      %v1350 = vld [vmem:[%s165 + $0x388] sm:$0xff]
      %v1351 = vld [vmem:[%s165 + $0x390] sm:$0xff]
      %v1352 = vld [vmem:[%s165 + $0x398] sm:$0xff]
      %v1353 = vld [vmem:[%s165 + $0x3a0] sm:$0xff]
      %v1354 = vld [vmem:[%s165 + $0x3a8] sm:$0xff]
      %v1355 = vld [vmem:[%s165 + $0x3b0] sm:$0xff]
      %v1356 = vld [vmem:[%s165 + $0x3b8] sm:$0xff]
      %v1357 = vld [vmem:[%s165 + $0x3c0] sm:$0xff]
      %v1358 = vld [vmem:[%s165 + $0x3c8] sm:$0xff]
      %v1359 = vld [vmem:[%s165 + $0x3d0] sm:$0xff]
      %v1360 = vld [vmem:[%s165 + $0x3d8] sm:$0xff]
      %v1361 = vld [vmem:[%s165 + $0x3e0] sm:$0xff]
      %v1362 = vld [vmem:[%s165 + $0x3e8] sm:$0xff]
      %v1363 = vld [vmem:[%s165 + $0x3f0] sm:$0xff]
      %v1364 = vld [vmem:[%s165 + $0x3f8] sm:$0xff]
      %v1365 = vld [vmem:[%s165 + $0x400] sm:$0xff]
      %v1366 = vld [vmem:[%s165 + $0x408] sm:$0xff]
      %v1367 = vld [vmem:[%s165 + $0x410] sm:$0xff]
      %v1368 = vld [vmem:[%s165 + $0x418] sm:$0xff]
      %v1369 = vld [vmem:[%s165 + $0x420] sm:$0xff]
      %v1370 = vld [vmem:[%s165 + $0x428] sm:$0xff]
      %v1371 = vld [vmem:[%s165 + $0x430] sm:$0xff]
      %v1372 = vld [vmem:[%s165 + $0x438] sm:$0xff]
      %v1373 = vld [vmem:[%s165 + $0x440] sm:$0xff]
      %v1374 = vld [vmem:[%s165 + $0x448] sm:$0xff]
      %v1375 = vld [vmem:[%s165 + $0x450] sm:$0xff]
      %v1376 = vld [vmem:[%s165 + $0x458] sm:$0xff]
      %v1377 = vld [vmem:[%s165 + $0x460] sm:$0xff]
      %v1378 = vld [vmem:[%s165 + $0x468] sm:$0xff]
      %v1379 = vld [vmem:[%s165 + $0x470] sm:$0xff]
      %v1380 = vld [vmem:[%s165 + $0x478] sm:$0xff]
      %v1381 = vld [vmem:[%s165 + $0x480] sm:$0xff]
      %v1382 = vpack.c.bf16 %v1349, %v1348
      %v1383 = vpack.c.bf16 %v1351, %v1350
      %v1384 = vpack.c.bf16 %v1353, %v1352
      %v1385 = vpack.c.bf16 %v1355, %v1354
      %v1386 = vpack.c.bf16 %v1357, %v1356
      %v1387 = vpack.c.bf16 %v1359, %v1358
      %v1388 = vpack.c.bf16 %v1361, %v1360
      %v1389 = vpack.c.bf16 %v1363, %v1362
      %v1390 = vpack.c.bf16 %v1365, %v1364
      %v1391 = vpack.c.bf16 %v1367, %v1366
      %v1392 = vpack.c.bf16 %v1369, %v1368
      %v1393 = vpack.c.bf16 %v1371, %v1370
      %v1394 = vpack.c.bf16 %v1373, %v1372
      %v1395 = vpack.c.bf16 %v1375, %v1374
      %v1396 = vpack.c.bf16 %v1377, %v1376
      %v1397 = vpack.c.bf16 %v1379, %v1378
      %v1398 = vpack.c.bf16 %v1381, %v1380
      %s1399 = scalar_lea.vmem %s1, 8
      %v1400 = vld [vmem:[%s1399] sm:$0x3]
      %v1402 = vsel %vm277, %v1382, 0
      %v1405 = vsel %vm277, %v1383, 0
      %v1408 = vsel %vm277, %v1384, 0
      %v1411 = vsel %vm277, %v1385, 0
      %v1414 = vsel %vm277, %v1386, 0
      %v1417 = vsel %vm277, %v1387, 0
      %v1420 = vsel %vm277, %v1388, 0
      %v1423 = vsel %vm277, %v1389, 0
      %v1426 = vsel %vm277, %v1390, 0
      %v1429 = vsel %vm277, %v1391, 0
      %v1432 = vsel %vm277, %v1392, 0
      %v1435 = vsel %vm277, %v1393, 0
      %v1438 = vsel %vm277, %v1394, 0
      %v1441 = vsel %vm277, %v1395, 0
      %v1444 = vsel %vm277, %v1396, 0
      %v1447 = vsel %vm277, %v1397, 0
      %v1450 = vsel %vm277, %v1398, 0
      %v1453 = vand.u32 %v1400, %v332
      %1455 = vmatprep.subr.bf16.mxu0 0
      %1456 = vmatpush1.bf16.msra.mxu0 %v1453
      %1457 = vmatprep.subr.bf16.mxu0 0
      %1458 = vmatpush1.bf16.msra.mxu0 0
      %1459 = vmatprep.subr.bf16.mxu0 0
      %1460 = vmatpush1.bf16.msra.mxu0 0
      %1461 = vmatprep.subr.bf16.mxu0 0
      %1462 = vmatpush1.bf16.msra.mxu0 0
      %1463 = vmatprep.subr.bf16.mxu0 0
      %1464 = vmatpush1.bf16.msra.mxu0 0
      %1465 = vmatprep.subr.bf16.mxu0 0
      %1466 = vmatpush1.bf16.msra.mxu0 0
      %1467 = vmatprep.subr.bf16.mxu0 0
      %1468 = vmatpush1.bf16.msra.mxu0 0
      %1469 = vmatprep.subr.bf16.mxu0 0
      %1470 = vmatpush1.bf16.msra.mxu0 0
      %1471 = vmatprep.subr.bf16.mxu0 0
      %1472 = vmatpush1.bf16.msra.mxu0 0
      %1473 = vmatprep.subr.bf16.mxu0 0
      %1474 = vmatpush1.bf16.msra.mxu0 0
      %1475 = vmatprep.subr.bf16.mxu0 0
      %1476 = vmatpush1.bf16.msra.mxu0 0
      %1477 = vmatprep.subr.bf16.mxu0 0
      %1478 = vmatpush1.bf16.msra.mxu0 0
      %1479 = vmatprep.subr.bf16.mxu0 0
      %1480 = vmatpush1.bf16.msra.mxu0 0
      %1481 = vmatprep.subr.bf16.mxu0 0
      %1482 = vmatpush1.bf16.msra.mxu0 0
      %1483 = vmatprep.subr.bf16.mxu0 0
      %1484 = vmatpush1.bf16.msra.mxu0 0
      %1485 = vmatprep.subr.bf16.mxu0 0
      %1486 = vmatpush1.bf16.msra.mxu0 0
      %1487 = vmatprep.mubr.bf16.mxu0 0
      %1488 = vmatmul.mubr.bf16.gmra.mrb[0].mxu0 %v1402
      %v1489 = vpop.f32.mrb[0].mxu0
      %v1490 = vadd.f32 0.0, %v1489
      %v1491 = vpop.f32.mrb[0].mxu0
      %v1492 = vpop.f32.mrb[0].mxu0
      %v1493 = vadd.f32 0.0, %v1492
      %v1494 = vpop.f32.mrb[0].mxu0
      %1495 = vmatprep.mubr.bf16.mxu0 0
      %1496 = vmatmul.mubr.bf16.gmra.mrb[0].mxu0 %v1405
      %v1497 = vpop.f32.mrb[0].mxu0
      %v1498 = vadd.f32 0.0, %v1497
      %v1499 = vpop.f32.mrb[0].mxu0
      %v1500 = vpop.f32.mrb[0].mxu0
      %v1501 = vadd.f32 0.0, %v1500
      %v1502 = vpop.f32.mrb[0].mxu0
      %1503 = vmatprep.mubr.bf16.mxu0 0
      %1504 = vmatmul.mubr.bf16.gmra.mrb[0].mxu0 %v1408
      %v1505 = vpop.f32.mrb[0].mxu0
      %v1506 = vadd.f32 0.0, %v1505
      %v1507 = vpop.f32.mrb[0].mxu0
      %v1508 = vpop.f32.mrb[0].mxu0
      %v1509 = vadd.f32 0.0, %v1508
      %v1510 = vpop.f32.mrb[0].mxu0
      %1511 = vmatprep.mubr.bf16.mxu0 0
      %1512 = vmatmul.mubr.bf16.gmra.mrb[0].mxu0 %v1411
      %v1513 = vpop.f32.mrb[0].mxu0
      %v1514 = vadd.f32 0.0, %v1513
      %v1515 = vpop.f32.mrb[0].mxu0
      %v1516 = vpop.f32.mrb[0].mxu0
      %v1517 = vadd.f32 0.0, %v1516
      %v1518 = vpop.f32.mrb[0].mxu0
      %1519 = vmatprep.mubr.bf16.mxu0 0
      %1520 = vmatmul.mubr.bf16.gmra.mrb[0].mxu0 %v1414
      %v1521 = vpop.f32.mrb[0].mxu0
      %v1522 = vadd.f32 0.0, %v1521
      %v1523 = vpop.f32.mrb[0].mxu0
      %v1524 = vpop.f32.mrb[0].mxu0
      %v1525 = vadd.f32 0.0, %v1524
      %v1526 = vpop.f32.mrb[0].mxu0
      %1527 = vmatprep.mubr.bf16.mxu0 0
      %1528 = vmatmul.mubr.bf16.gmra.mrb[0].mxu0 %v1417
      %v1529 = vpop.f32.mrb[0].mxu0
      %v1530 = vadd.f32 0.0, %v1529
      %v1531 = vpop.f32.mrb[0].mxu0
      %v1532 = vpop.f32.mrb[0].mxu0
      %v1533 = vadd.f32 0.0, %v1532
      %v1534 = vpop.f32.mrb[0].mxu0
      %1535 = vmatprep.mubr.bf16.mxu0 0
      %1536 = vmatmul.mubr.bf16.gmra.mrb[0].mxu0 %v1420
      %v1537 = vpop.f32.mrb[0].mxu0
      %v1538 = vadd.f32 0.0, %v1537
      %v1539 = vpop.f32.mrb[0].mxu0
      %v1540 = vpop.f32.mrb[0].mxu0
      %v1541 = vadd.f32 0.0, %v1540
      %v1542 = vpop.f32.mrb[0].mxu0
      %1543 = vmatprep.mubr.bf16.mxu0 0
      %1544 = vmatmul.mubr.bf16.gmra.mrb[0].mxu0 %v1423
      %v1545 = vpop.f32.mrb[0].mxu0
      %v1546 = vadd.f32 0.0, %v1545
      %v1547 = vpop.f32.mrb[0].mxu0
      %v1548 = vpop.f32.mrb[0].mxu0
      %v1549 = vadd.f32 0.0, %v1548
      %v1550 = vpop.f32.mrb[0].mxu0
      %1551 = vmatprep.mubr.bf16.mxu0 0
      %1552 = vmatmul.mubr.bf16.gmra.mrb[0].mxu0 %v1426
      %v1553 = vpop.f32.mrb[0].mxu0
      %v1554 = vadd.f32 0.0, %v1553
      %v1555 = vpop.f32.mrb[0].mxu0
      %v1556 = vpop.f32.mrb[0].mxu0
      %v1557 = vadd.f32 0.0, %v1556
      %v1558 = vpop.f32.mrb[0].mxu0
      %1559 = vmatprep.mubr.bf16.mxu0 0
      %1560 = vmatmul.mubr.bf16.gmra.mrb[0].mxu0 %v1429
      %v1561 = vpop.f32.mrb[0].mxu0
      %v1562 = vadd.f32 0.0, %v1561
      %v1563 = vpop.f32.mrb[0].mxu0
      %v1564 = vpop.f32.mrb[0].mxu0
      %v1565 = vadd.f32 0.0, %v1564
      %v1566 = vpop.f32.mrb[0].mxu0
      %1567 = vmatprep.mubr.bf16.mxu0 0
      %1568 = vmatmul.mubr.bf16.gmra.mrb[0].mxu0 %v1432
      %v1569 = vpop.f32.mrb[0].mxu0
      %v1570 = vadd.f32 0.0, %v1569
      %v1571 = vpop.f32.mrb[0].mxu0
      %v1572 = vpop.f32.mrb[0].mxu0
      %v1573 = vadd.f32 0.0, %v1572
      %v1574 = vpop.f32.mrb[0].mxu0
      %1575 = vmatprep.mubr.bf16.mxu0 0
      %1576 = vmatmul.mubr.bf16.gmra.mrb[0].mxu0 %v1435
      %v1577 = vpop.f32.mrb[0].mxu0
      %v1578 = vadd.f32 0.0, %v1577
      %v1579 = vpop.f32.mrb[0].mxu0
      %v1580 = vpop.f32.mrb[0].mxu0
      %v1581 = vadd.f32 0.0, %v1580
      %v1582 = vpop.f32.mrb[0].mxu0
      %1583 = vmatprep.mubr.bf16.mxu0 0
      %1584 = vmatmul.mubr.bf16.gmra.mrb[0].mxu0 %v1438
      %v1585 = vpop.f32.mrb[0].mxu0
      %v1586 = vadd.f32 0.0, %v1585
      %v1587 = vpop.f32.mrb[0].mxu0
      %v1588 = vpop.f32.mrb[0].mxu0
      %v1589 = vadd.f32 0.0, %v1588
      %v1590 = vpop.f32.mrb[0].mxu0
      %1591 = vmatprep.mubr.bf16.mxu0 0
      %1592 = vmatmul.mubr.bf16.gmra.mrb[0].mxu0 %v1441
      %v1593 = vpop.f32.mrb[0].mxu0
      %v1594 = vadd.f32 0.0, %v1593
      %v1595 = vpop.f32.mrb[0].mxu0
      %v1596 = vpop.f32.mrb[0].mxu0
      %v1597 = vadd.f32 0.0, %v1596
      %v1598 = vpop.f32.mrb[0].mxu0
      %1599 = vmatprep.mubr.bf16.mxu0 0
      %1600 = vmatmul.mubr.bf16.gmra.mrb[0].mxu0 %v1444
      %v1601 = vpop.f32.mrb[0].mxu0
      %v1602 = vadd.f32 0.0, %v1601
      %v1603 = vpop.f32.mrb[0].mxu0
      %v1604 = vpop.f32.mrb[0].mxu0
      %v1605 = vadd.f32 0.0, %v1604
      %v1606 = vpop.f32.mrb[0].mxu0
      %1607 = vmatprep.mubr.bf16.mxu0 0
      %1608 = vmatmul.mubr.bf16.gmra.mrb[0].mxu0 %v1447
      %v1609 = vpop.f32.mrb[0].mxu0
      %v1610 = vadd.f32 0.0, %v1609
      %v1611 = vpop.f32.mrb[0].mxu0
      %v1612 = vpop.f32.mrb[0].mxu0
      %v1613 = vadd.f32 0.0, %v1612
      %v1614 = vpop.f32.mrb[0].mxu0
      %1615 = vmatprep.mubr.bf16.mxu0 0
      %1616 = vmatmul.mubr.bf16.gmra.mrb[0].mxu0 %v1450
      %v1617 = vpop.f32.mrb[0].mxu0
      %v1618 = vadd.f32 0.0, %v1617
      %v1619 = vpop.f32.mrb[0].mxu0
      %v1620 = vpop.f32.mrb[0].mxu0
      %v1621 = vadd.f32 0.0, %v1620
      %v1622 = vpop.f32.mrb[0].mxu0
      %1623 = vdwg.mxu0
      %v1624 = vadd.f32 %v1314, %v1490
      %v1625 = vadd.f32 %v1315, %v1493
      %v1626 = vadd.f32 %v1316, %v1498
      %v1627 = vadd.f32 %v1317, %v1501
      %v1628 = vadd.f32 %v1318, %v1506
      %v1629 = vadd.f32 %v1319, %v1509
      %v1630 = vadd.f32 %v1320, %v1514
      %v1631 = vadd.f32 %v1321, %v1517
      %v1632 = vadd.f32 %v1322, %v1522
      %v1633 = vadd.f32 %v1323, %v1525
      %v1634 = vadd.f32 %v1324, %v1530
      %v1635 = vadd.f32 %v1325, %v1533
      %v1636 = vadd.f32 %v1326, %v1538
      %v1637 = vadd.f32 %v1327, %v1541
      %v1638 = vadd.f32 %v1328, %v1546
      %v1639 = vadd.f32 %v1329, %v1549
      %v1640 = vadd.f32 %v1330, %v1554
      %v1641 = vadd.f32 %v1331, %v1557
      %v1642 = vadd.f32 %v1332, %v1562
      %v1643 = vadd.f32 %v1333, %v1565
      %v1644 = vadd.f32 %v1334, %v1570
      %v1645 = vadd.f32 %v1335, %v1573
      %v1646 = vadd.f32 %v1336, %v1578
      %v1647 = vadd.f32 %v1337, %v1581
      %v1648 = vadd.f32 %v1338, %v1586
      %v1649 = vadd.f32 %v1339, %v1589
      %v1650 = vadd.f32 %v1340, %v1594
      %v1651 = vadd.f32 %v1341, %v1597
      %v1652 = vadd.f32 %v1342, %v1602
      %v1653 = vadd.f32 %v1343, %v1605
      %v1654 = vadd.f32 %v1344, %v1610
      %v1655 = vadd.f32 %v1345, %v1613
      %v1656 = vadd.f32 %v1346, %v1618
      %v1657 = vadd.f32 %v1347, %v1621
      %v1658 = vld [vmem:[%s165 + $0x251] sm:$0xff]
      %v1659 = vld [vmem:[%s165 + $0x259] sm:$0xff]
      %v1660 = vld [vmem:[%s165 + $0x261] sm:$0xff]
      %v1661 = vld [vmem:[%s165 + $0x269] sm:$0xff]
      %v1662 = vld [vmem:[%s165 + $0x271] sm:$0xff]
      %v1663 = vld [vmem:[%s165 + $0x279] sm:$0xff]
      %v1664 = vld [vmem:[%s165 + $0x281] sm:$0xff]
      %v1665 = vld [vmem:[%s165 + $0x289] sm:$0xff]
      %v1666 = vld [vmem:[%s165 + $0x291] sm:$0xff]
      %v1667 = vld [vmem:[%s165 + $0x299] sm:$0xff]
      %v1668 = vld [vmem:[%s165 + $0x2a1] sm:$0xff]
      %v1669 = vld [vmem:[%s165 + $0x2a9] sm:$0xff]
      %v1670 = vld [vmem:[%s165 + $0x2b1] sm:$0xff]
      %v1671 = vld [vmem:[%s165 + $0x2b9] sm:$0xff]
      %v1672 = vld [vmem:[%s165 + $0x2c1] sm:$0xff]
      %v1673 = vld [vmem:[%s165 + $0x2c9] sm:$0xff]
      %v1674 = vld [vmem:[%s165 + $0x2d1] sm:$0xff]
      %v1675 = vld [vmem:[%s165 + $0x2d9] sm:$0xff]
      %v1676 = vld [vmem:[%s165 + $0x2e1] sm:$0xff]
      %v1677 = vld [vmem:[%s165 + $0x2e9] sm:$0xff]
      %v1678 = vld [vmem:[%s165 + $0x2f1] sm:$0xff]
      %v1679 = vld [vmem:[%s165 + $0x2f9] sm:$0xff]
      %v1680 = vld [vmem:[%s165 + $0x301] sm:$0xff]
      %v1681 = vld [vmem:[%s165 + $0x309] sm:$0xff]
      %v1682 = vld [vmem:[%s165 + $0x311] sm:$0xff]
      %v1683 = vld [vmem:[%s165 + $0x319] sm:$0xff]
      %v1684 = vld [vmem:[%s165 + $0x321] sm:$0xff]
      %v1685 = vld [vmem:[%s165 + $0x329] sm:$0xff]
      %v1686 = vld [vmem:[%s165 + $0x331] sm:$0xff]
      %v1687 = vld [vmem:[%s165 + $0x339] sm:$0xff]
      %v1688 = vld [vmem:[%s165 + $0x341] sm:$0xff]
      %v1689 = vld [vmem:[%s165 + $0x349] sm:$0xff]
      %v1690 = vld [vmem:[%s165 + $0x351] sm:$0xff]
      %v1691 = vld [vmem:[%s165 + $0x359] sm:$0xff]
      %v1692 = vpack.c.bf16 %v1659, %v1658
      %v1693 = vpack.c.bf16 %v1661, %v1660
      %v1694 = vpack.c.bf16 %v1663, %v1662
      %v1695 = vpack.c.bf16 %v1665, %v1664
      %v1696 = vpack.c.bf16 %v1667, %v1666
      %v1697 = vpack.c.bf16 %v1669, %v1668
      %v1698 = vpack.c.bf16 %v1671, %v1670
      %v1699 = vpack.c.bf16 %v1673, %v1672
      %v1700 = vpack.c.bf16 %v1675, %v1674
      %v1701 = vpack.c.bf16 %v1677, %v1676
      %v1702 = vpack.c.bf16 %v1679, %v1678
      %v1703 = vpack.c.bf16 %v1681, %v1680
      %v1704 = vpack.c.bf16 %v1683, %v1682
      %v1705 = vpack.c.bf16 %v1685, %v1684
      %v1706 = vpack.c.bf16 %v1687, %v1686
      %v1707 = vpack.c.bf16 %v1689, %v1688
      %v1708 = vpack.c.bf16 %v1691, %v1690
      %s1709 = scalar_lea.vmem %s1, 10
      %v1710 = vld [vmem:[%s1709] sm:$0x3]
      %v1712 = vsel %vm277, %v1692, 0
      %v1715 = vsel %vm277, %v1693, 0
      %v1718 = vsel %vm277, %v1694, 0
      %v1721 = vsel %vm277, %v1695, 0
      %v1724 = vsel %vm277, %v1696, 0
      %v1727 = vsel %vm277, %v1697, 0
      %v1730 = vsel %vm277, %v1698, 0
      %v1733 = vsel %vm277, %v1699, 0
      %v1736 = vsel %vm277, %v1700, 0
      %v1739 = vsel %vm277, %v1701, 0
      %v1742 = vsel %vm277, %v1702, 0
      %v1745 = vsel %vm277, %v1703, 0
      %v1748 = vsel %vm277, %v1704, 0
      %v1751 = vsel %vm277, %v1705, 0
      %v1754 = vsel %vm277, %v1706, 0
      %v1757 = vsel %vm277, %v1707, 0
      %v1760 = vsel %vm277, %v1708, 0
      %v1763 = vand.u32 %v1710, %v332
      %1765 = vmatprep.subr.bf16.mxu0 0
      %1766 = vmatpush1.bf16.msra.mxu0 %v1763
      %1767 = vmatprep.subr.bf16.mxu0 0
      %1768 = vmatpush1.bf16.msra.mxu0 0
      %1769 = vmatprep.subr.bf16.mxu0 0
      %1770 = vmatpush1.bf16.msra.mxu0 0
      %1771 = vmatprep.subr.bf16.mxu0 0
      %1772 = vmatpush1.bf16.msra.mxu0 0
      %1773 = vmatprep.subr.bf16.mxu0 0
      %1774 = vmatpush1.bf16.msra.mxu0 0
      %1775 = vmatprep.subr.bf16.mxu0 0
      %1776 = vmatpush1.bf16.msra.mxu0 0
      %1777 = vmatprep.subr.bf16.mxu0 0
      %1778 = vmatpush1.bf16.msra.mxu0 0
      %1779 = vmatprep.subr.bf16.mxu0 0
      %1780 = vmatpush1.bf16.msra.mxu0 0
      %1781 = vmatprep.subr.bf16.mxu0 0
      %1782 = vmatpush1.bf16.msra.mxu0 0
      %1783 = vmatprep.subr.bf16.mxu0 0
      %1784 = vmatpush1.bf16.msra.mxu0 0
      %1785 = vmatprep.subr.bf16.mxu0 0
      %1786 = vmatpush1.bf16.msra.mxu0 0
      %1787 = vmatprep.subr.bf16.mxu0 0
      %1788 = vmatpush1.bf16.msra.mxu0 0
      %1789 = vmatprep.subr.bf16.mxu0 0
      %1790 = vmatpush1.bf16.msra.mxu0 0
      %1791 = vmatprep.subr.bf16.mxu0 0
      %1792 = vmatpush1.bf16.msra.mxu0 0
      %1793 = vmatprep.subr.bf16.mxu0 0
      %1794 = vmatpush1.bf16.msra.mxu0 0
      %1795 = vmatprep.subr.bf16.mxu0 0
      %1796 = vmatpush1.bf16.msra.mxu0 0
      %1797 = vmatprep.mubr.bf16.mxu0 0
      %1798 = vmatmul.mubr.bf16.gmra.mrb[0].mxu0 %v1712
      %v1799 = vpop.f32.mrb[0].mxu0
      %v1800 = vadd.f32 0.0, %v1799
      %v1801 = vpop.f32.mrb[0].mxu0
      %v1802 = vpop.f32.mrb[0].mxu0
      %v1803 = vadd.f32 0.0, %v1802
      %v1804 = vpop.f32.mrb[0].mxu0
      %1805 = vmatprep.mubr.bf16.mxu0 0
      %1806 = vmatmul.mubr.bf16.gmra.mrb[0].mxu0 %v1715
      %v1807 = vpop.f32.mrb[0].mxu0
      %v1808 = vadd.f32 0.0, %v1807
      %v1809 = vpop.f32.mrb[0].mxu0
      %v1810 = vpop.f32.mrb[0].mxu0
      %v1811 = vadd.f32 0.0, %v1810
      %v1812 = vpop.f32.mrb[0].mxu0
      %1813 = vmatprep.mubr.bf16.mxu0 0
      %1814 = vmatmul.mubr.bf16.gmra.mrb[0].mxu0 %v1718
      %v1815 = vpop.f32.mrb[0].mxu0
      %v1816 = vadd.f32 0.0, %v1815
      %v1817 = vpop.f32.mrb[0].mxu0
      %v1818 = vpop.f32.mrb[0].mxu0
      %v1819 = vadd.f32 0.0, %v1818
      %v1820 = vpop.f32.mrb[0].mxu0
      %1821 = vmatprep.mubr.bf16.mxu0 0
      %1822 = vmatmul.mubr.bf16.gmra.mrb[0].mxu0 %v1721
      %v1823 = vpop.f32.mrb[0].mxu0
      %v1824 = vadd.f32 0.0, %v1823
      %v1825 = vpop.f32.mrb[0].mxu0
      %v1826 = vpop.f32.mrb[0].mxu0
      %v1827 = vadd.f32 0.0, %v1826
      %v1828 = vpop.f32.mrb[0].mxu0
      %1829 = vmatprep.mubr.bf16.mxu0 0
      %1830 = vmatmul.mubr.bf16.gmra.mrb[0].mxu0 %v1724
      %v1831 = vpop.f32.mrb[0].mxu0
      %v1832 = vadd.f32 0.0, %v1831
      %v1833 = vpop.f32.mrb[0].mxu0
      %v1834 = vpop.f32.mrb[0].mxu0
      %v1835 = vadd.f32 0.0, %v1834
      %v1836 = vpop.f32.mrb[0].mxu0
      %1837 = vmatprep.mubr.bf16.mxu0 0
      %1838 = vmatmul.mubr.bf16.gmra.mrb[0].mxu0 %v1727
      %v1839 = vpop.f32.mrb[0].mxu0
      %v1840 = vadd.f32 0.0, %v1839
      %v1841 = vpop.f32.mrb[0].mxu0
      %v1842 = vpop.f32.mrb[0].mxu0
      %v1843 = vadd.f32 0.0, %v1842
      %v1844 = vpop.f32.mrb[0].mxu0
      %1845 = vmatprep.mubr.bf16.mxu0 0
      %1846 = vmatmul.mubr.bf16.gmra.mrb[0].mxu0 %v1730
      %v1847 = vpop.f32.mrb[0].mxu0
      %v1848 = vadd.f32 0.0, %v1847
      %v1849 = vpop.f32.mrb[0].mxu0
      %v1850 = vpop.f32.mrb[0].mxu0
      %v1851 = vadd.f32 0.0, %v1850
      %v1852 = vpop.f32.mrb[0].mxu0
      %1853 = vmatprep.mubr.bf16.mxu0 0
      %1854 = vmatmul.mubr.bf16.gmra.mrb[0].mxu0 %v1733
      %v1855 = vpop.f32.mrb[0].mxu0
      %v1856 = vadd.f32 0.0, %v1855
      %v1857 = vpop.f32.mrb[0].mxu0
      %v1858 = vpop.f32.mrb[0].mxu0
      %v1859 = vadd.f32 0.0, %v1858
      %v1860 = vpop.f32.mrb[0].mxu0
      %1861 = vmatprep.mubr.bf16.mxu0 0
      %1862 = vmatmul.mubr.bf16.gmra.mrb[0].mxu0 %v1736
      %v1863 = vpop.f32.mrb[0].mxu0
      %v1864 = vadd.f32 0.0, %v1863
      %v1865 = vpop.f32.mrb[0].mxu0
      %v1866 = vpop.f32.mrb[0].mxu0
      %v1867 = vadd.f32 0.0, %v1866
      %v1868 = vpop.f32.mrb[0].mxu0
      %1869 = vmatprep.mubr.bf16.mxu0 0
      %1870 = vmatmul.mubr.bf16.gmra.mrb[0].mxu0 %v1739
      %v1871 = vpop.f32.mrb[0].mxu0
      %v1872 = vadd.f32 0.0, %v1871
      %v1873 = vpop.f32.mrb[0].mxu0
      %v1874 = vpop.f32.mrb[0].mxu0
      %v1875 = vadd.f32 0.0, %v1874
      %v1876 = vpop.f32.mrb[0].mxu0
      %1877 = vmatprep.mubr.bf16.mxu0 0
      %1878 = vmatmul.mubr.bf16.gmra.mrb[0].mxu0 %v1742
      %v1879 = vpop.f32.mrb[0].mxu0
      %v1880 = vadd.f32 0.0, %v1879
      %v1881 = vpop.f32.mrb[0].mxu0
      %v1882 = vpop.f32.mrb[0].mxu0
      %v1883 = vadd.f32 0.0, %v1882
      %v1884 = vpop.f32.mrb[0].mxu0
      %1885 = vmatprep.mubr.bf16.mxu0 0
      %1886 = vmatmul.mubr.bf16.gmra.mrb[0].mxu0 %v1745
      %v1887 = vpop.f32.mrb[0].mxu0
      %v1888 = vadd.f32 0.0, %v1887
      %v1889 = vpop.f32.mrb[0].mxu0
      %v1890 = vpop.f32.mrb[0].mxu0
      %v1891 = vadd.f32 0.0, %v1890
      %v1892 = vpop.f32.mrb[0].mxu0
      %1893 = vmatprep.mubr.bf16.mxu0 0
      %1894 = vmatmul.mubr.bf16.gmra.mrb[0].mxu0 %v1748
      %v1895 = vpop.f32.mrb[0].mxu0
      %v1896 = vadd.f32 0.0, %v1895
      %v1897 = vpop.f32.mrb[0].mxu0
      %v1898 = vpop.f32.mrb[0].mxu0
      %v1899 = vadd.f32 0.0, %v1898
      %v1900 = vpop.f32.mrb[0].mxu0
      %1901 = vmatprep.mubr.bf16.mxu0 0
      %1902 = vmatmul.mubr.bf16.gmra.mrb[0].mxu0 %v1751
      %v1903 = vpop.f32.mrb[0].mxu0
      %v1904 = vadd.f32 0.0, %v1903
      %v1905 = vpop.f32.mrb[0].mxu0
      %v1906 = vpop.f32.mrb[0].mxu0
      %v1907 = vadd.f32 0.0, %v1906
      %v1908 = vpop.f32.mrb[0].mxu0
      %1909 = vmatprep.mubr.bf16.mxu0 0
      %1910 = vmatmul.mubr.bf16.gmra.mrb[0].mxu0 %v1754
      %v1911 = vpop.f32.mrb[0].mxu0
      %v1912 = vadd.f32 0.0, %v1911
      %v1913 = vpop.f32.mrb[0].mxu0
      %v1914 = vpop.f32.mrb[0].mxu0
      %v1915 = vadd.f32 0.0, %v1914
      %v1916 = vpop.f32.mrb[0].mxu0
      %1917 = vmatprep.mubr.bf16.mxu0 0
      %1918 = vmatmul.mubr.bf16.gmra.mrb[0].mxu0 %v1757
      %v1919 = vpop.f32.mrb[0].mxu0
      %v1920 = vadd.f32 0.0, %v1919
      %v1921 = vpop.f32.mrb[0].mxu0
      %v1922 = vpop.f32.mrb[0].mxu0
      %v1923 = vadd.f32 0.0, %v1922
      %v1924 = vpop.f32.mrb[0].mxu0
      %1925 = vmatprep.mubr.bf16.mxu0 0
      %1926 = vmatmul.mubr.bf16.gmra.mrb[0].mxu0 %v1760
      %v1927 = vpop.f32.mrb[0].mxu0
      %v1928 = vadd.f32 0.0, %v1927
      %v1929 = vpop.f32.mrb[0].mxu0
      %v1930 = vpop.f32.mrb[0].mxu0
      %v1931 = vadd.f32 0.0, %v1930
      %v1932 = vpop.f32.mrb[0].mxu0
      %1933 = vdwg.mxu0
      %v1934 = vadd.f32 %v1624, %v1800
      %v1935 = vadd.f32 %v1625, %v1803
      %v1936 = vadd.f32 %v1626, %v1808
      %v1937 = vadd.f32 %v1627, %v1811
      %v1938 = vadd.f32 %v1628, %v1816
      %v1939 = vadd.f32 %v1629, %v1819
      %v1940 = vadd.f32 %v1630, %v1824
      %v1941 = vadd.f32 %v1631, %v1827
      %v1942 = vadd.f32 %v1632, %v1832
      %v1943 = vadd.f32 %v1633, %v1835
      %v1944 = vadd.f32 %v1634, %v1840
      %v1945 = vadd.f32 %v1635, %v1843
      %v1946 = vadd.f32 %v1636, %v1848
      %v1947 = vadd.f32 %v1637, %v1851
      %v1948 = vadd.f32 %v1638, %v1856
      %v1949 = vadd.f32 %v1639, %v1859
      %v1950 = vadd.f32 %v1640, %v1864
      %v1951 = vadd.f32 %v1641, %v1867
      %v1952 = vadd.f32 %v1642, %v1872
      %v1953 = vadd.f32 %v1643, %v1875
      %v1954 = vadd.f32 %v1644, %v1880
      %v1955 = vadd.f32 %v1645, %v1883
      %v1956 = vadd.f32 %v1646, %v1888
      %v1957 = vadd.f32 %v1647, %v1891
      %v1958 = vadd.f32 %v1648, %v1896
      %v1959 = vadd.f32 %v1649, %v1899
      %v1960 = vadd.f32 %v1650, %v1904
      %v1961 = vadd.f32 %v1651, %v1907
      %v1962 = vadd.f32 %v1652, %v1912
      %v1963 = vadd.f32 %v1653, %v1915
      %v1964 = vadd.f32 %v1654, %v1920
      %v1965 = vadd.f32 %v1655, %v1923
      %v1966 = vadd.f32 %v1656, %v1928
      %v1967 = vadd.f32 %v1657, %v1931
      %v1968 = vld [vmem:[%s165 + $0x11] sm:$0xff]
      %v1969 = vld [vmem:[%s165 + $0x19] sm:$0xff]
      %v1970 = vld [vmem:[%s165 + $0x21] sm:$0xff]
      %v1971 = vld [vmem:[%s165 + $0x29] sm:$0xff]
      %v1972 = vld [vmem:[%s165 + $0x31] sm:$0xff]
      %v1973 = vld [vmem:[%s165 + $0x39] sm:$0xff]
      %v1974 = vld [vmem:[%s165 + $0x41] sm:$0xff]
      %v1975 = vld [vmem:[%s165 + $0x49] sm:$0xff]
      %v1976 = vld [vmem:[%s165 + $0x51] sm:$0xff]
      %v1977 = vld [vmem:[%s165 + $0x59] sm:$0xff]
      %v1978 = vld [vmem:[%s165 + $0x61] sm:$0xff]
      %v1979 = vld [vmem:[%s165 + $0x69] sm:$0xff]
      %v1980 = vld [vmem:[%s165 + $0x71] sm:$0xff]
      %v1981 = vld [vmem:[%s165 + $0x79] sm:$0xff]
      %v1982 = vld [vmem:[%s165 + $0x81] sm:$0xff]
      %v1983 = vld [vmem:[%s165 + $0x89] sm:$0xff]
      %v1984 = vld [vmem:[%s165 + $0x91] sm:$0xff]
      %v1985 = vld [vmem:[%s165 + $0x99] sm:$0xff]
      %v1986 = vld [vmem:[%s165 + $0xa1] sm:$0xff]
      %v1987 = vld [vmem:[%s165 + $0xa9] sm:$0xff]
      %v1988 = vld [vmem:[%s165 + $0xb1] sm:$0xff]
      %v1989 = vld [vmem:[%s165 + $0xb9] sm:$0xff]
      %v1990 = vld [vmem:[%s165 + $0xc1] sm:$0xff]
      %v1991 = vld [vmem:[%s165 + $0xc9] sm:$0xff]
      %v1992 = vld [vmem:[%s165 + $0xd1] sm:$0xff]
      %v1993 = vld [vmem:[%s165 + $0xd9] sm:$0xff]
      %v1994 = vld [vmem:[%s165 + $0xe1] sm:$0xff]
      %v1995 = vld [vmem:[%s165 + $0xe9] sm:$0xff]
      %v1996 = vld [vmem:[%s165 + $0xf1] sm:$0xff]
      %v1997 = vld [vmem:[%s165 + $0xf9] sm:$0xff]
      %v1998 = vld [vmem:[%s165 + $0x101] sm:$0xff]
      %v1999 = vld [vmem:[%s165 + $0x109] sm:$0xff]
      %v2000 = vld [vmem:[%s165 + $0x111] sm:$0xff]
      %v2001 = vld [vmem:[%s165 + $0x119] sm:$0xff]
      %v2002 = vpack.c.bf16 %v1969, %v1968
      %v2003 = vpack.c.bf16 %v1971, %v1970
      %v2004 = vpack.c.bf16 %v1973, %v1972
      %v2005 = vpack.c.bf16 %v1975, %v1974
      %v2006 = vpack.c.bf16 %v1977, %v1976
      %v2007 = vpack.c.bf16 %v1979, %v1978
      %v2008 = vpack.c.bf16 %v1981, %v1980
      %v2009 = vpack.c.bf16 %v1983, %v1982
      %v2010 = vpack.c.bf16 %v1985, %v1984
      %v2011 = vpack.c.bf16 %v1987, %v1986
      %v2012 = vpack.c.bf16 %v1989, %v1988
      %v2013 = vpack.c.bf16 %v1991, %v1990
      %v2014 = vpack.c.bf16 %v1993, %v1992
      %v2015 = vpack.c.bf16 %v1995, %v1994
      %v2016 = vpack.c.bf16 %v1997, %v1996
      %v2017 = vpack.c.bf16 %v1999, %v1998
      %v2018 = vpack.c.bf16 %v2001, %v2000
      %s2019 = scalar_lea.vmem %s1, 12
      %v2020 = vld [vmem:[%s2019] sm:$0x3]
      %v2022 = vsel %vm277, %v2002, 0
      %v2025 = vsel %vm277, %v2003, 0
      %v2028 = vsel %vm277, %v2004, 0
      %v2031 = vsel %vm277, %v2005, 0
      %v2034 = vsel %vm277, %v2006, 0
      %v2037 = vsel %vm277, %v2007, 0
      %v2040 = vsel %vm277, %v2008, 0
      %v2043 = vsel %vm277, %v2009, 0
      %v2046 = vsel %vm277, %v2010, 0
      %v2049 = vsel %vm277, %v2011, 0
      %v2052 = vsel %vm277, %v2012, 0
      %v2055 = vsel %vm277, %v2013, 0
      %v2058 = vsel %vm277, %v2014, 0
      %v2061 = vsel %vm277, %v2015, 0
      %v2064 = vsel %vm277, %v2016, 0
      %v2067 = vsel %vm277, %v2017, 0
      %v2070 = vsel %vm277, %v2018, 0
      %v2073 = vand.u32 %v2020, %v332
      %2075 = vmatprep.subr.bf16.mxu0 0
      %2076 = vmatpush1.bf16.msra.mxu0 %v2073
      %2077 = vmatprep.subr.bf16.mxu0 0
      %2078 = vmatpush1.bf16.msra.mxu0 0
      %2079 = vmatprep.subr.bf16.mxu0 0
      %2080 = vmatpush1.bf16.msra.mxu0 0
      %2081 = vmatprep.subr.bf16.mxu0 0
      %2082 = vmatpush1.bf16.msra.mxu0 0
      %2083 = vmatprep.subr.bf16.mxu0 0
      %2084 = vmatpush1.bf16.msra.mxu0 0
      %2085 = vmatprep.subr.bf16.mxu0 0
      %2086 = vmatpush1.bf16.msra.mxu0 0
      %2087 = vmatprep.subr.bf16.mxu0 0
      %2088 = vmatpush1.bf16.msra.mxu0 0
      %2089 = vmatprep.subr.bf16.mxu0 0
      %2090 = vmatpush1.bf16.msra.mxu0 0
      %2091 = vmatprep.subr.bf16.mxu0 0
      %2092 = vmatpush1.bf16.msra.mxu0 0
      %2093 = vmatprep.subr.bf16.mxu0 0
      %2094 = vmatpush1.bf16.msra.mxu0 0
      %2095 = vmatprep.subr.bf16.mxu0 0
      %2096 = vmatpush1.bf16.msra.mxu0 0
      %2097 = vmatprep.subr.bf16.mxu0 0
      %2098 = vmatpush1.bf16.msra.mxu0 0
      %2099 = vmatprep.subr.bf16.mxu0 0
      %2100 = vmatpush1.bf16.msra.mxu0 0
      %2101 = vmatprep.subr.bf16.mxu0 0
      %2102 = vmatpush1.bf16.msra.mxu0 0
      %2103 = vmatprep.subr.bf16.mxu0 0
      %2104 = vmatpush1.bf16.msra.mxu0 0
      %2105 = vmatprep.subr.bf16.mxu0 0
      %2106 = vmatpush1.bf16.msra.mxu0 0
      %2107 = vmatprep.mubr.bf16.mxu0 0
      %2108 = vmatmul.mubr.bf16.gmra.mrb[0].mxu0 %v2022
      %v2109 = vpop.f32.mrb[0].mxu0
      %v2110 = vadd.f32 0.0, %v2109
      %v2111 = vpop.f32.mrb[0].mxu0
      %v2112 = vpop.f32.mrb[0].mxu0
      %v2113 = vadd.f32 0.0, %v2112
      %v2114 = vpop.f32.mrb[0].mxu0
      %2115 = vmatprep.mubr.bf16.mxu0 0
      %2116 = vmatmul.mubr.bf16.gmra.mrb[0].mxu0 %v2025
      %v2117 = vpop.f32.mrb[0].mxu0
      %v2118 = vadd.f32 0.0, %v2117
      %v2119 = vpop.f32.mrb[0].mxu0
      %v2120 = vpop.f32.mrb[0].mxu0
      %v2121 = vadd.f32 0.0, %v2120
      %v2122 = vpop.f32.mrb[0].mxu0
      %2123 = vmatprep.mubr.bf16.mxu0 0
      %2124 = vmatmul.mubr.bf16.gmra.mrb[0].mxu0 %v2028
      %v2125 = vpop.f32.mrb[0].mxu0
      %v2126 = vadd.f32 0.0, %v2125
      %v2127 = vpop.f32.mrb[0].mxu0
      %v2128 = vpop.f32.mrb[0].mxu0
      %v2129 = vadd.f32 0.0, %v2128
      %v2130 = vpop.f32.mrb[0].mxu0
      %2131 = vmatprep.mubr.bf16.mxu0 0
      %2132 = vmatmul.mubr.bf16.gmra.mrb[0].mxu0 %v2031
      %v2133 = vpop.f32.mrb[0].mxu0
      %v2134 = vadd.f32 0.0, %v2133
      %v2135 = vpop.f32.mrb[0].mxu0
      %v2136 = vpop.f32.mrb[0].mxu0
      %v2137 = vadd.f32 0.0, %v2136
      %v2138 = vpop.f32.mrb[0].mxu0
      %2139 = vmatprep.mubr.bf16.mxu0 0
      %2140 = vmatmul.mubr.bf16.gmra.mrb[0].mxu0 %v2034
      %v2141 = vpop.f32.mrb[0].mxu0
      %v2142 = vadd.f32 0.0, %v2141
      %v2143 = vpop.f32.mrb[0].mxu0
      %v2144 = vpop.f32.mrb[0].mxu0
      %v2145 = vadd.f32 0.0, %v2144
      %v2146 = vpop.f32.mrb[0].mxu0
      %2147 = vmatprep.mubr.bf16.mxu0 0
      %2148 = vmatmul.mubr.bf16.gmra.mrb[0].mxu0 %v2037
      %v2149 = vpop.f32.mrb[0].mxu0
      %v2150 = vadd.f32 0.0, %v2149
      %v2151 = vpop.f32.mrb[0].mxu0
      %v2152 = vpop.f32.mrb[0].mxu0
      %v2153 = vadd.f32 0.0, %v2152
      %v2154 = vpop.f32.mrb[0].mxu0
      %2155 = vmatprep.mubr.bf16.mxu0 0
      %2156 = vmatmul.mubr.bf16.gmra.mrb[0].mxu0 %v2040
      %v2157 = vpop.f32.mrb[0].mxu0
      %v2158 = vadd.f32 0.0, %v2157
      %v2159 = vpop.f32.mrb[0].mxu0
      %v2160 = vpop.f32.mrb[0].mxu0
      %v2161 = vadd.f32 0.0, %v2160
      %v2162 = vpop.f32.mrb[0].mxu0
      %2163 = vmatprep.mubr.bf16.mxu0 0
      %2164 = vmatmul.mubr.bf16.gmra.mrb[0].mxu0 %v2043
      %v2165 = vpop.f32.mrb[0].mxu0
      %v2166 = vadd.f32 0.0, %v2165
      %v2167 = vpop.f32.mrb[0].mxu0
      %v2168 = vpop.f32.mrb[0].mxu0
      %v2169 = vadd.f32 0.0, %v2168
      %v2170 = vpop.f32.mrb[0].mxu0
      %2171 = vmatprep.mubr.bf16.mxu0 0
      %2172 = vmatmul.mubr.bf16.gmra.mrb[0].mxu0 %v2046
      %v2173 = vpop.f32.mrb[0].mxu0
      %v2174 = vadd.f32 0.0, %v2173
      %v2175 = vpop.f32.mrb[0].mxu0
      %v2176 = vpop.f32.mrb[0].mxu0
      %v2177 = vadd.f32 0.0, %v2176
      %v2178 = vpop.f32.mrb[0].mxu0
      %2179 = vmatprep.mubr.bf16.mxu0 0
      %2180 = vmatmul.mubr.bf16.gmra.mrb[0].mxu0 %v2049
      %v2181 = vpop.f32.mrb[0].mxu0
      %v2182 = vadd.f32 0.0, %v2181
      %v2183 = vpop.f32.mrb[0].mxu0
      %v2184 = vpop.f32.mrb[0].mxu0
      %v2185 = vadd.f32 0.0, %v2184
      %v2186 = vpop.f32.mrb[0].mxu0
      %2187 = vmatprep.mubr.bf16.mxu0 0
      %2188 = vmatmul.mubr.bf16.gmra.mrb[0].mxu0 %v2052
      %v2189 = vpop.f32.mrb[0].mxu0
      %v2190 = vadd.f32 0.0, %v2189
      %v2191 = vpop.f32.mrb[0].mxu0
      %v2192 = vpop.f32.mrb[0].mxu0
      %v2193 = vadd.f32 0.0, %v2192
      %v2194 = vpop.f32.mrb[0].mxu0
      %2195 = vmatprep.mubr.bf16.mxu0 0
      %2196 = vmatmul.mubr.bf16.gmra.mrb[0].mxu0 %v2055
      %v2197 = vpop.f32.mrb[0].mxu0
      %v2198 = vadd.f32 0.0, %v2197
      %v2199 = vpop.f32.mrb[0].mxu0
      %v2200 = vpop.f32.mrb[0].mxu0
      %v2201 = vadd.f32 0.0, %v2200
      %v2202 = vpop.f32.mrb[0].mxu0
      %2203 = vmatprep.mubr.bf16.mxu0 0
      %2204 = vmatmul.mubr.bf16.gmra.mrb[0].mxu0 %v2058
      %v2205 = vpop.f32.mrb[0].mxu0
      %v2206 = vadd.f32 0.0, %v2205
      %v2207 = vpop.f32.mrb[0].mxu0
      %v2208 = vpop.f32.mrb[0].mxu0
      %v2209 = vadd.f32 0.0, %v2208
      %v2210 = vpop.f32.mrb[0].mxu0
      %2211 = vmatprep.mubr.bf16.mxu0 0
      %2212 = vmatmul.mubr.bf16.gmra.mrb[0].mxu0 %v2061
      %v2213 = vpop.f32.mrb[0].mxu0
      %v2214 = vadd.f32 0.0, %v2213
      %v2215 = vpop.f32.mrb[0].mxu0
      %v2216 = vpop.f32.mrb[0].mxu0
      %v2217 = vadd.f32 0.0, %v2216
      %v2218 = vpop.f32.mrb[0].mxu0
      %2219 = vmatprep.mubr.bf16.mxu0 0
      %2220 = vmatmul.mubr.bf16.gmra.mrb[0].mxu0 %v2064
      %v2221 = vpop.f32.mrb[0].mxu0
      %v2222 = vadd.f32 0.0, %v2221
      %v2223 = vpop.f32.mrb[0].mxu0
      %v2224 = vpop.f32.mrb[0].mxu0
      %v2225 = vadd.f32 0.0, %v2224
      %v2226 = vpop.f32.mrb[0].mxu0
      %2227 = vmatprep.mubr.bf16.mxu0 0
      %2228 = vmatmul.mubr.bf16.gmra.mrb[0].mxu0 %v2067
      %v2229 = vpop.f32.mrb[0].mxu0
      %v2230 = vadd.f32 0.0, %v2229
      %v2231 = vpop.f32.mrb[0].mxu0
      %v2232 = vpop.f32.mrb[0].mxu0
      %v2233 = vadd.f32 0.0, %v2232
      %v2234 = vpop.f32.mrb[0].mxu0
      %2235 = vmatprep.mubr.bf16.mxu0 0
      %2236 = vmatmul.mubr.bf16.gmra.mrb[0].mxu0 %v2070
      %v2237 = vpop.f32.mrb[0].mxu0
      %v2238 = vadd.f32 0.0, %v2237
      %v2239 = vpop.f32.mrb[0].mxu0
      %v2240 = vpop.f32.mrb[0].mxu0
      %v2241 = vadd.f32 0.0, %v2240
      %v2242 = vpop.f32.mrb[0].mxu0
      %2243 = vdwg.mxu0
      %v2244 = vadd.f32 %v1934, %v2110
      %v2245 = vadd.f32 %v1935, %v2113
      %v2246 = vadd.f32 %v1936, %v2118
      %v2247 = vadd.f32 %v1937, %v2121
      %v2248 = vadd.f32 %v1938, %v2126
      %v2249 = vadd.f32 %v1939, %v2129
      %v2250 = vadd.f32 %v1940, %v2134
      %v2251 = vadd.f32 %v1941, %v2137
      %v2252 = vadd.f32 %v1942, %v2142
      %v2253 = vadd.f32 %v1943, %v2145
      %v2254 = vadd.f32 %v1944, %v2150
      %v2255 = vadd.f32 %v1945, %v2153
      %v2256 = vadd.f32 %v1946, %v2158
      %v2257 = vadd.f32 %v1947, %v2161
      %v2258 = vadd.f32 %v1948, %v2166
      %v2259 = vadd.f32 %v1949, %v2169
      %v2260 = vadd.f32 %v1950, %v2174
      %v2261 = vadd.f32 %v1951, %v2177
      %v2262 = vadd.f32 %v1952, %v2182
      %v2263 = vadd.f32 %v1953, %v2185
      %v2264 = vadd.f32 %v1954, %v2190
      %v2265 = vadd.f32 %v1955, %v2193
      %v2266 = vadd.f32 %v1956, %v2198
      %v2267 = vadd.f32 %v1957, %v2201
      %v2268 = vadd.f32 %v1958, %v2206
      %v2269 = vadd.f32 %v1959, %v2209
      %v2270 = vadd.f32 %v1960, %v2214
      %v2271 = vadd.f32 %v1961, %v2217
      %v2272 = vadd.f32 %v1962, %v2222
      %v2273 = vadd.f32 %v1963, %v2225
      %v2274 = vadd.f32 %v1964, %v2230
      %v2275 = vadd.f32 %v1965, %v2233
      %v2276 = vadd.f32 %v1966, %v2238
      %v2277 = vadd.f32 %v1967, %v2241
      %v2278 = vld [vmem:[%s165 + $0x139] sm:$0xff]
      %v2279 = vld [vmem:[%s165 + $0x141] sm:$0xff]
      %v2280 = vld [vmem:[%s165 + $0x149] sm:$0xff]
      %v2281 = vld [vmem:[%s165 + $0x151] sm:$0xff]
      %v2282 = vld [vmem:[%s165 + $0x159] sm:$0xff]
      %v2283 = vld [vmem:[%s165 + $0x161] sm:$0xff]
      %v2284 = vld [vmem:[%s165 + $0x169] sm:$0xff]
      %v2285 = vld [vmem:[%s165 + $0x171] sm:$0xff]
      %v2286 = vld [vmem:[%s165 + $0x179] sm:$0xff]
      %v2287 = vld [vmem:[%s165 + $0x181] sm:$0xff]
      %v2288 = vld [vmem:[%s165 + $0x189] sm:$0xff]
      %v2289 = vld [vmem:[%s165 + $0x191] sm:$0xff]
      %v2290 = vld [vmem:[%s165 + $0x199] sm:$0xff]
      %v2291 = vld [vmem:[%s165 + $0x1a1] sm:$0xff]
      %v2292 = vld [vmem:[%s165 + $0x1a9] sm:$0xff]
      %v2293 = vld [vmem:[%s165 + $0x1b1] sm:$0xff]
      %v2294 = vld [vmem:[%s165 + $0x1b9] sm:$0xff]
      %v2295 = vld [vmem:[%s165 + $0x1c1] sm:$0xff]
      %v2296 = vld [vmem:[%s165 + $0x1c9] sm:$0xff]
      %v2297 = vld [vmem:[%s165 + $0x1d1] sm:$0xff]
      %v2298 = vld [vmem:[%s165 + $0x1d9] sm:$0xff]
      %v2299 = vld [vmem:[%s165 + $0x1e1] sm:$0xff]
      %v2300 = vld [vmem:[%s165 + $0x1e9] sm:$0xff]
      %v2301 = vld [vmem:[%s165 + $0x1f1] sm:$0xff]
      %v2302 = vld [vmem:[%s165 + $0x1f9] sm:$0xff]
      %v2303 = vld [vmem:[%s165 + $0x201] sm:$0xff]
      %v2304 = vld [vmem:[%s165 + $0x209] sm:$0xff]
      %v2305 = vld [vmem:[%s165 + $0x211] sm:$0xff]
      %v2306 = vld [vmem:[%s165 + $0x219] sm:$0xff]
      %v2307 = vld [vmem:[%s165 + $0x221] sm:$0xff]
      %v2308 = vld [vmem:[%s165 + $0x229] sm:$0xff]
      %v2309 = vld [vmem:[%s165 + $0x231] sm:$0xff]
      %v2310 = vld [vmem:[%s165 + $0x239] sm:$0xff]
      %v2311 = vld [vmem:[%s165 + $0x241] sm:$0xff]
      %v2312 = vpack.c.bf16 %v2279, %v2278
      %v2313 = vpack.c.bf16 %v2281, %v2280
      %v2314 = vpack.c.bf16 %v2283, %v2282
      %v2315 = vpack.c.bf16 %v2285, %v2284
      %v2316 = vpack.c.bf16 %v2287, %v2286
      %v2317 = vpack.c.bf16 %v2289, %v2288
      %v2318 = vpack.c.bf16 %v2291, %v2290
      %v2319 = vpack.c.bf16 %v2293, %v2292
      %v2320 = vpack.c.bf16 %v2295, %v2294
      %v2321 = vpack.c.bf16 %v2297, %v2296
      %v2322 = vpack.c.bf16 %v2299, %v2298
      %v2323 = vpack.c.bf16 %v2301, %v2300
      %v2324 = vpack.c.bf16 %v2303, %v2302
      %v2325 = vpack.c.bf16 %v2305, %v2304
      %v2326 = vpack.c.bf16 %v2307, %v2306
      %v2327 = vpack.c.bf16 %v2309, %v2308
      %v2328 = vpack.c.bf16 %v2311, %v2310
      %s2329 = scalar_lea.vmem %s1, 14
      %v2330 = vld [vmem:[%s2329] sm:$0x3]
      %v2332 = vsel %vm277, %v2312, 0
      %v2335 = vsel %vm277, %v2313, 0
      %v2338 = vsel %vm277, %v2314, 0
      %v2341 = vsel %vm277, %v2315, 0
      %v2344 = vsel %vm277, %v2316, 0
      %v2347 = vsel %vm277, %v2317, 0
      %v2350 = vsel %vm277, %v2318, 0
      %v2353 = vsel %vm277, %v2319, 0
      %v2356 = vsel %vm277, %v2320, 0
      %v2359 = vsel %vm277, %v2321, 0
      %v2362 = vsel %vm277, %v2322, 0
      %v2365 = vsel %vm277, %v2323, 0
      %v2368 = vsel %vm277, %v2324, 0
      %v2371 = vsel %vm277, %v2325, 0
      %v2374 = vsel %vm277, %v2326, 0
      %v2377 = vsel %vm277, %v2327, 0
      %v2380 = vsel %vm277, %v2328, 0
      %v2383 = vand.u32 %v2330, %v332
      %2385 = vmatprep.subr.bf16.mxu0 0
      %2386 = vmatpush1.bf16.msra.mxu0 %v2383
      %2387 = vmatprep.subr.bf16.mxu0 0
      %2388 = vmatpush1.bf16.msra.mxu0 0
      %2389 = vmatprep.subr.bf16.mxu0 0
      %2390 = vmatpush1.bf16.msra.mxu0 0
      %2391 = vmatprep.subr.bf16.mxu0 0
      %2392 = vmatpush1.bf16.msra.mxu0 0
      %2393 = vmatprep.subr.bf16.mxu0 0
      %2394 = vmatpush1.bf16.msra.mxu0 0
      %2395 = vmatprep.subr.bf16.mxu0 0
      %2396 = vmatpush1.bf16.msra.mxu0 0
      %2397 = vmatprep.subr.bf16.mxu0 0
      %2398 = vmatpush1.bf16.msra.mxu0 0
      %2399 = vmatprep.subr.bf16.mxu0 0
      %2400 = vmatpush1.bf16.msra.mxu0 0
      %2401 = vmatprep.subr.bf16.mxu0 0
      %2402 = vmatpush1.bf16.msra.mxu0 0
      %2403 = vmatprep.subr.bf16.mxu0 0
      %2404 = vmatpush1.bf16.msra.mxu0 0
      %2405 = vmatprep.subr.bf16.mxu0 0
      %2406 = vmatpush1.bf16.msra.mxu0 0
      %2407 = vmatprep.subr.bf16.mxu0 0
      %2408 = vmatpush1.bf16.msra.mxu0 0
      %2409 = vmatprep.subr.bf16.mxu0 0
      %2410 = vmatpush1.bf16.msra.mxu0 0
      %2411 = vmatprep.subr.bf16.mxu0 0
      %2412 = vmatpush1.bf16.msra.mxu0 0
      %2413 = vmatprep.subr.bf16.mxu0 0
      %2414 = vmatpush1.bf16.msra.mxu0 0
      %2415 = vmatprep.subr.bf16.mxu0 0
      %2416 = vmatpush1.bf16.msra.mxu0 0
      %2417 = vmatprep.mubr.bf16.mxu0 0
      %2418 = vmatmul.mubr.bf16.gmra.mrb[0].mxu0 %v2332
      %v2419 = vpop.f32.mrb[0].mxu0
      %v2420 = vadd.f32 0.0, %v2419
      %v2421 = vpop.f32.mrb[0].mxu0
      %v2422 = vpop.f32.mrb[0].mxu0
      %v2423 = vadd.f32 0.0, %v2422
      %v2424 = vpop.f32.mrb[0].mxu0
      %2425 = vmatprep.mubr.bf16.mxu0 0
      %2426 = vmatmul.mubr.bf16.gmra.mrb[0].mxu0 %v2335
      %v2427 = vpop.f32.mrb[0].mxu0
      %v2428 = vadd.f32 0.0, %v2427
      %v2429 = vpop.f32.mrb[0].mxu0
      %v2430 = vpop.f32.mrb[0].mxu0
      %v2431 = vadd.f32 0.0, %v2430
      %v2432 = vpop.f32.mrb[0].mxu0
      %2433 = vmatprep.mubr.bf16.mxu0 0
      %2434 = vmatmul.mubr.bf16.gmra.mrb[0].mxu0 %v2338
      %v2435 = vpop.f32.mrb[0].mxu0
      %v2436 = vadd.f32 0.0, %v2435
      %v2437 = vpop.f32.mrb[0].mxu0
      %v2438 = vpop.f32.mrb[0].mxu0
      %v2439 = vadd.f32 0.0, %v2438
      %v2440 = vpop.f32.mrb[0].mxu0
      %2441 = vmatprep.mubr.bf16.mxu0 0
      %2442 = vmatmul.mubr.bf16.gmra.mrb[0].mxu0 %v2341
      %v2443 = vpop.f32.mrb[0].mxu0
      %v2444 = vadd.f32 0.0, %v2443
      %v2445 = vpop.f32.mrb[0].mxu0
      %v2446 = vpop.f32.mrb[0].mxu0
      %v2447 = vadd.f32 0.0, %v2446
      %v2448 = vpop.f32.mrb[0].mxu0
      %2449 = vmatprep.mubr.bf16.mxu0 0
      %2450 = vmatmul.mubr.bf16.gmra.mrb[0].mxu0 %v2344
      %v2451 = vpop.f32.mrb[0].mxu0
      %v2452 = vadd.f32 0.0, %v2451
      %v2453 = vpop.f32.mrb[0].mxu0
      %v2454 = vpop.f32.mrb[0].mxu0
      %v2455 = vadd.f32 0.0, %v2454
      %v2456 = vpop.f32.mrb[0].mxu0
      %2457 = vmatprep.mubr.bf16.mxu0 0
      %2458 = vmatmul.mubr.bf16.gmra.mrb[0].mxu0 %v2347
      %v2459 = vpop.f32.mrb[0].mxu0
      %v2460 = vadd.f32 0.0, %v2459
      %v2461 = vpop.f32.mrb[0].mxu0
      %v2462 = vpop.f32.mrb[0].mxu0
      %v2463 = vadd.f32 0.0, %v2462
      %v2464 = vpop.f32.mrb[0].mxu0
      %2465 = vmatprep.mubr.bf16.mxu0 0
      %2466 = vmatmul.mubr.bf16.gmra.mrb[0].mxu0 %v2350
      %v2467 = vpop.f32.mrb[0].mxu0
      %v2468 = vadd.f32 0.0, %v2467
      %v2469 = vpop.f32.mrb[0].mxu0
      %v2470 = vpop.f32.mrb[0].mxu0
      %v2471 = vadd.f32 0.0, %v2470
      %v2472 = vpop.f32.mrb[0].mxu0
      %2473 = vmatprep.mubr.bf16.mxu0 0
      %2474 = vmatmul.mubr.bf16.gmra.mrb[0].mxu0 %v2353
      %v2475 = vpop.f32.mrb[0].mxu0
      %v2476 = vadd.f32 0.0, %v2475
      %v2477 = vpop.f32.mrb[0].mxu0
      %v2478 = vpop.f32.mrb[0].mxu0
      %v2479 = vadd.f32 0.0, %v2478
      %v2480 = vpop.f32.mrb[0].mxu0
      %2481 = vmatprep.mubr.bf16.mxu0 0
      %2482 = vmatmul.mubr.bf16.gmra.mrb[0].mxu0 %v2356
      %v2483 = vpop.f32.mrb[0].mxu0
      %v2484 = vadd.f32 0.0, %v2483
      %v2485 = vpop.f32.mrb[0].mxu0
      %v2486 = vpop.f32.mrb[0].mxu0
      %v2487 = vadd.f32 0.0, %v2486
      %v2488 = vpop.f32.mrb[0].mxu0
      %2489 = vmatprep.mubr.bf16.mxu0 0
      %2490 = vmatmul.mubr.bf16.gmra.mrb[0].mxu0 %v2359
      %v2491 = vpop.f32.mrb[0].mxu0
      %v2492 = vadd.f32 0.0, %v2491
      %v2493 = vpop.f32.mrb[0].mxu0
      %v2494 = vpop.f32.mrb[0].mxu0
      %v2495 = vadd.f32 0.0, %v2494
      %v2496 = vpop.f32.mrb[0].mxu0
      %2497 = vmatprep.mubr.bf16.mxu0 0
      %2498 = vmatmul.mubr.bf16.gmra.mrb[0].mxu0 %v2362
      %v2499 = vpop.f32.mrb[0].mxu0
      %v2500 = vadd.f32 0.0, %v2499
      %v2501 = vpop.f32.mrb[0].mxu0
      %v2502 = vpop.f32.mrb[0].mxu0
      %v2503 = vadd.f32 0.0, %v2502
      %v2504 = vpop.f32.mrb[0].mxu0
      %2505 = vmatprep.mubr.bf16.mxu0 0
      %2506 = vmatmul.mubr.bf16.gmra.mrb[0].mxu0 %v2365
      %v2507 = vpop.f32.mrb[0].mxu0
      %v2508 = vadd.f32 0.0, %v2507
      %v2509 = vpop.f32.mrb[0].mxu0
      %v2510 = vpop.f32.mrb[0].mxu0
      %v2511 = vadd.f32 0.0, %v2510
      %v2512 = vpop.f32.mrb[0].mxu0
      %2513 = vmatprep.mubr.bf16.mxu0 0
      %2514 = vmatmul.mubr.bf16.gmra.mrb[0].mxu0 %v2368
      %v2515 = vpop.f32.mrb[0].mxu0
      %v2516 = vadd.f32 0.0, %v2515
      %v2517 = vpop.f32.mrb[0].mxu0
      %v2518 = vpop.f32.mrb[0].mxu0
      %v2519 = vadd.f32 0.0, %v2518
      %v2520 = vpop.f32.mrb[0].mxu0
      %2521 = vmatprep.mubr.bf16.mxu0 0
      %2522 = vmatmul.mubr.bf16.gmra.mrb[0].mxu0 %v2371
      %v2523 = vpop.f32.mrb[0].mxu0
      %v2524 = vadd.f32 0.0, %v2523
      %v2525 = vpop.f32.mrb[0].mxu0
      %v2526 = vpop.f32.mrb[0].mxu0
      %v2527 = vadd.f32 0.0, %v2526
      %v2528 = vpop.f32.mrb[0].mxu0
      %2529 = vmatprep.mubr.bf16.mxu0 0
      %2530 = vmatmul.mubr.bf16.gmra.mrb[0].mxu0 %v2374
      %v2531 = vpop.f32.mrb[0].mxu0
      %v2532 = vadd.f32 0.0, %v2531
      %v2533 = vpop.f32.mrb[0].mxu0
      %v2534 = vpop.f32.mrb[0].mxu0
      %v2535 = vadd.f32 0.0, %v2534
      %v2536 = vpop.f32.mrb[0].mxu0
      %2537 = vmatprep.mubr.bf16.mxu0 0
      %2538 = vmatmul.mubr.bf16.gmra.mrb[0].mxu0 %v2377
      %v2539 = vpop.f32.mrb[0].mxu0
      %v2540 = vadd.f32 0.0, %v2539
      %v2541 = vpop.f32.mrb[0].mxu0
      %v2542 = vpop.f32.mrb[0].mxu0
      %v2543 = vadd.f32 0.0, %v2542
      %v2544 = vpop.f32.mrb[0].mxu0
      %2545 = vmatprep.mubr.bf16.mxu0 0
      %2546 = vmatmul.mubr.bf16.gmra.mrb[0].mxu0 %v2380
      %v2547 = vpop.f32.mrb[0].mxu0
      %v2548 = vadd.f32 0.0, %v2547
      %v2549 = vpop.f32.mrb[0].mxu0
      %v2550 = vpop.f32.mrb[0].mxu0
      %v2551 = vadd.f32 0.0, %v2550
      %v2552 = vpop.f32.mrb[0].mxu0
      %2553 = vdwg.mxu0
      %v2554 = vadd.f32 %v2244, %v2420
      %v2555 = vadd.f32 %v2245, %v2423
      %v2556 = vadd.f32 %v2246, %v2428
      %v2557 = vadd.f32 %v2247, %v2431
      %v2558 = vadd.f32 %v2248, %v2436
      %v2559 = vadd.f32 %v2249, %v2439
      %v2560 = vadd.f32 %v2250, %v2444
      %v2561 = vadd.f32 %v2251, %v2447
      %v2562 = vadd.f32 %v2252, %v2452
      %v2563 = vadd.f32 %v2253, %v2455
      %v2564 = vadd.f32 %v2254, %v2460
      %v2565 = vadd.f32 %v2255, %v2463
      %v2566 = vadd.f32 %v2256, %v2468
      %v2567 = vadd.f32 %v2257, %v2471
      %v2568 = vadd.f32 %v2258, %v2476
      %v2569 = vadd.f32 %v2259, %v2479
      %v2570 = vadd.f32 %v2260, %v2484
      %v2571 = vadd.f32 %v2261, %v2487
      %v2572 = vadd.f32 %v2262, %v2492
      %v2573 = vadd.f32 %v2263, %v2495
      %v2574 = vadd.f32 %v2264, %v2500
      %v2575 = vadd.f32 %v2265, %v2503
      %v2576 = vadd.f32 %v2266, %v2508
      %v2577 = vadd.f32 %v2267, %v2511
      %v2578 = vadd.f32 %v2268, %v2516
      %v2579 = vadd.f32 %v2269, %v2519
      %v2580 = vadd.f32 %v2270, %v2524
      %v2581 = vadd.f32 %v2271, %v2527
      %v2582 = vadd.f32 %v2272, %v2532
      %v2583 = vadd.f32 %v2273, %v2535
      %v2584 = vadd.f32 %v2274, %v2540
      %v2585 = vadd.f32 %v2275, %v2543
      %v2586 = vadd.f32 %v2276, %v2548
      %v2587 = vadd.f32 %v2277, %v2551
      %v2588 = vld [vmem:[%s165 + $0x12] sm:$0xff]
      %v2589 = vld [vmem:[%s165 + $0x1a] sm:$0xff]
      %v2590 = vld [vmem:[%s165 + $0x22] sm:$0xff]
      %v2591 = vld [vmem:[%s165 + $0x2a] sm:$0xff]
      %v2592 = vld [vmem:[%s165 + $0x32] sm:$0xff]
      %v2593 = vld [vmem:[%s165 + $0x3a] sm:$0xff]
      %v2594 = vld [vmem:[%s165 + $0x42] sm:$0xff]
      %v2595 = vld [vmem:[%s165 + $0x4a] sm:$0xff]
      %v2596 = vld [vmem:[%s165 + $0x52] sm:$0xff]
      %v2597 = vld [vmem:[%s165 + $0x5a] sm:$0xff]
      %v2598 = vld [vmem:[%s165 + $0x62] sm:$0xff]
      %v2599 = vld [vmem:[%s165 + $0x6a] sm:$0xff]
      %v2600 = vld [vmem:[%s165 + $0x72] sm:$0xff]
      %v2601 = vld [vmem:[%s165 + $0x7a] sm:$0xff]
      %v2602 = vld [vmem:[%s165 + $0x82] sm:$0xff]
      %v2603 = vld [vmem:[%s165 + $0x8a] sm:$0xff]
      %v2604 = vld [vmem:[%s165 + $0x92] sm:$0xff]
      %v2605 = vld [vmem:[%s165 + $0x9a] sm:$0xff]
      %v2606 = vld [vmem:[%s165 + $0xa2] sm:$0xff]
      %v2607 = vld [vmem:[%s165 + $0xaa] sm:$0xff]
      %v2608 = vld [vmem:[%s165 + $0xb2] sm:$0xff]
      %v2609 = vld [vmem:[%s165 + $0xba] sm:$0xff]
      %v2610 = vld [vmem:[%s165 + $0xc2] sm:$0xff]
      %v2611 = vld [vmem:[%s165 + $0xca] sm:$0xff]
      %v2612 = vld [vmem:[%s165 + $0xd2] sm:$0xff]
      %v2613 = vld [vmem:[%s165 + $0xda] sm:$0xff]
      %v2614 = vld [vmem:[%s165 + $0xe2] sm:$0xff]
      %v2615 = vld [vmem:[%s165 + $0xea] sm:$0xff]
      %v2616 = vld [vmem:[%s165 + $0xf2] sm:$0xff]
      %v2617 = vld [vmem:[%s165 + $0xfa] sm:$0xff]
      %v2618 = vld [vmem:[%s165 + $0x102] sm:$0xff]
      %v2619 = vld [vmem:[%s165 + $0x10a] sm:$0xff]
      %v2620 = vld [vmem:[%s165 + $0x112] sm:$0xff]
      %v2621 = vld [vmem:[%s165 + $0x11a] sm:$0xff]
      %v2622 = vpack.c.bf16 %v2589, %v2588
      %v2623 = vpack.c.bf16 %v2591, %v2590
      %v2624 = vpack.c.bf16 %v2593, %v2592
      %v2625 = vpack.c.bf16 %v2595, %v2594
      %v2626 = vpack.c.bf16 %v2597, %v2596
      %v2627 = vpack.c.bf16 %v2599, %v2598
      %v2628 = vpack.c.bf16 %v2601, %v2600
      %v2629 = vpack.c.bf16 %v2603, %v2602
      %v2630 = vpack.c.bf16 %v2605, %v2604
      %v2631 = vpack.c.bf16 %v2607, %v2606
      %v2632 = vpack.c.bf16 %v2609, %v2608
      %v2633 = vpack.c.bf16 %v2611, %v2610
      %v2634 = vpack.c.bf16 %v2613, %v2612
      %v2635 = vpack.c.bf16 %v2615, %v2614
      %v2636 = vpack.c.bf16 %v2617, %v2616
      %v2637 = vpack.c.bf16 %v2619, %v2618
      %v2638 = vpack.c.bf16 %v2621, %v2620
      %s2639 = scalar_lea.vmem %s1, 16
      %v2640 = vld [vmem:[%s2639] sm:$0x3]
      %v2642 = vsel %vm277, %v2622, 0
      %v2645 = vsel %vm277, %v2623, 0
      %v2648 = vsel %vm277, %v2624, 0
      %v2651 = vsel %vm277, %v2625, 0
      %v2654 = vsel %vm277, %v2626, 0
      %v2657 = vsel %vm277, %v2627, 0
      %v2660 = vsel %vm277, %v2628, 0
      %v2663 = vsel %vm277, %v2629, 0
      %v2666 = vsel %vm277, %v2630, 0
      %v2669 = vsel %vm277, %v2631, 0
      %v2672 = vsel %vm277, %v2632, 0
      %v2675 = vsel %vm277, %v2633, 0
      %v2678 = vsel %vm277, %v2634, 0
      %v2681 = vsel %vm277, %v2635, 0
      %v2684 = vsel %vm277, %v2636, 0
      %v2687 = vsel %vm277, %v2637, 0
      %v2690 = vsel %vm277, %v2638, 0
      %v2693 = vand.u32 %v2640, %v332
      %2695 = vmatprep.subr.bf16.mxu0 0
      %2696 = vmatpush1.bf16.msra.mxu0 %v2693
      %2697 = vmatprep.subr.bf16.mxu0 0
      %2698 = vmatpush1.bf16.msra.mxu0 0
      %2699 = vmatprep.subr.bf16.mxu0 0
      %2700 = vmatpush1.bf16.msra.mxu0 0
      %2701 = vmatprep.subr.bf16.mxu0 0
      %2702 = vmatpush1.bf16.msra.mxu0 0
      %2703 = vmatprep.subr.bf16.mxu0 0
      %2704 = vmatpush1.bf16.msra.mxu0 0
      %2705 = vmatprep.subr.bf16.mxu0 0
      %2706 = vmatpush1.bf16.msra.mxu0 0
      %2707 = vmatprep.subr.bf16.mxu0 0
      %2708 = vmatpush1.bf16.msra.mxu0 0
      %2709 = vmatprep.subr.bf16.mxu0 0
      %2710 = vmatpush1.bf16.msra.mxu0 0
      %2711 = vmatprep.subr.bf16.mxu0 0
      %2712 = vmatpush1.bf16.msra.mxu0 0
      %2713 = vmatprep.subr.bf16.mxu0 0
      %2714 = vmatpush1.bf16.msra.mxu0 0
      %2715 = vmatprep.subr.bf16.mxu0 0
      %2716 = vmatpush1.bf16.msra.mxu0 0
      %2717 = vmatprep.subr.bf16.mxu0 0
      %2718 = vmatpush1.bf16.msra.mxu0 0
      %2719 = vmatprep.subr.bf16.mxu0 0
      %2720 = vmatpush1.bf16.msra.mxu0 0
      %2721 = vmatprep.subr.bf16.mxu0 0
      %2722 = vmatpush1.bf16.msra.mxu0 0
      %2723 = vmatprep.subr.bf16.mxu0 0
      %2724 = vmatpush1.bf16.msra.mxu0 0
      %2725 = vmatprep.subr.bf16.mxu0 0
      %2726 = vmatpush1.bf16.msra.mxu0 0
      %2727 = vmatprep.mubr.bf16.mxu0 0
      %2728 = vmatmul.mubr.bf16.gmra.mrb[0].mxu0 %v2642
      %v2729 = vpop.f32.mrb[0].mxu0
      %v2730 = vadd.f32 0.0, %v2729
      %v2731 = vpop.f32.mrb[0].mxu0
      %v2732 = vpop.f32.mrb[0].mxu0
      %v2733 = vadd.f32 0.0, %v2732
      %v2734 = vpop.f32.mrb[0].mxu0
      %2735 = vmatprep.mubr.bf16.mxu0 0
      %2736 = vmatmul.mubr.bf16.gmra.mrb[0].mxu0 %v2645
      %v2737 = vpop.f32.mrb[0].mxu0
      %v2738 = vadd.f32 0.0, %v2737
      %v2739 = vpop.f32.mrb[0].mxu0
      %v2740 = vpop.f32.mrb[0].mxu0
      %v2741 = vadd.f32 0.0, %v2740
      %v2742 = vpop.f32.mrb[0].mxu0
      %2743 = vmatprep.mubr.bf16.mxu0 0
      %2744 = vmatmul.mubr.bf16.gmra.mrb[0].mxu0 %v2648
      %v2745 = vpop.f32.mrb[0].mxu0
      %v2746 = vadd.f32 0.0, %v2745
      %v2747 = vpop.f32.mrb[0].mxu0
      %v2748 = vpop.f32.mrb[0].mxu0
      %v2749 = vadd.f32 0.0, %v2748
      %v2750 = vpop.f32.mrb[0].mxu0
      %2751 = vmatprep.mubr.bf16.mxu0 0
      %2752 = vmatmul.mubr.bf16.gmra.mrb[0].mxu0 %v2651
      %v2753 = vpop.f32.mrb[0].mxu0
      %v2754 = vadd.f32 0.0, %v2753
      %v2755 = vpop.f32.mrb[0].mxu0
      %v2756 = vpop.f32.mrb[0].mxu0
      %v2757 = vadd.f32 0.0, %v2756
      %v2758 = vpop.f32.mrb[0].mxu0
      %2759 = vmatprep.mubr.bf16.mxu0 0
      %2760 = vmatmul.mubr.bf16.gmra.mrb[0].mxu0 %v2654
      %v2761 = vpop.f32.mrb[0].mxu0
      %v2762 = vadd.f32 0.0, %v2761
      %v2763 = vpop.f32.mrb[0].mxu0
      %v2764 = vpop.f32.mrb[0].mxu0
      %v2765 = vadd.f32 0.0, %v2764
      %v2766 = vpop.f32.mrb[0].mxu0
      %2767 = vmatprep.mubr.bf16.mxu0 0
      %2768 = vmatmul.mubr.bf16.gmra.mrb[0].mxu0 %v2657
      %v2769 = vpop.f32.mrb[0].mxu0
      %v2770 = vadd.f32 0.0, %v2769
      %v2771 = vpop.f32.mrb[0].mxu0
      %v2772 = vpop.f32.mrb[0].mxu0
      %v2773 = vadd.f32 0.0, %v2772
      %v2774 = vpop.f32.mrb[0].mxu0
      %2775 = vmatprep.mubr.bf16.mxu0 0
      %2776 = vmatmul.mubr.bf16.gmra.mrb[0].mxu0 %v2660
      %v2777 = vpop.f32.mrb[0].mxu0
      %v2778 = vadd.f32 0.0, %v2777
      %v2779 = vpop.f32.mrb[0].mxu0
      %v2780 = vpop.f32.mrb[0].mxu0
      %v2781 = vadd.f32 0.0, %v2780
      %v2782 = vpop.f32.mrb[0].mxu0
      %2783 = vmatprep.mubr.bf16.mxu0 0
      %2784 = vmatmul.mubr.bf16.gmra.mrb[0].mxu0 %v2663
      %v2785 = vpop.f32.mrb[0].mxu0
      %v2786 = vadd.f32 0.0, %v2785
      %v2787 = vpop.f32.mrb[0].mxu0
      %v2788 = vpop.f32.mrb[0].mxu0
      %v2789 = vadd.f32 0.0, %v2788
      %v2790 = vpop.f32.mrb[0].mxu0
      %2791 = vmatprep.mubr.bf16.mxu0 0
      %2792 = vmatmul.mubr.bf16.gmra.mrb[0].mxu0 %v2666
      %v2793 = vpop.f32.mrb[0].mxu0
      %v2794 = vadd.f32 0.0, %v2793
      %v2795 = vpop.f32.mrb[0].mxu0
      %v2796 = vpop.f32.mrb[0].mxu0
      %v2797 = vadd.f32 0.0, %v2796
      %v2798 = vpop.f32.mrb[0].mxu0
      %2799 = vmatprep.mubr.bf16.mxu0 0
      %2800 = vmatmul.mubr.bf16.gmra.mrb[0].mxu0 %v2669
      %v2801 = vpop.f32.mrb[0].mxu0
      %v2802 = vadd.f32 0.0, %v2801
      %v2803 = vpop.f32.mrb[0].mxu0
      %v2804 = vpop.f32.mrb[0].mxu0
      %v2805 = vadd.f32 0.0, %v2804
      %v2806 = vpop.f32.mrb[0].mxu0
      %2807 = vmatprep.mubr.bf16.mxu0 0
      %2808 = vmatmul.mubr.bf16.gmra.mrb[0].mxu0 %v2672
      %v2809 = vpop.f32.mrb[0].mxu0
      %v2810 = vadd.f32 0.0, %v2809
      %v2811 = vpop.f32.mrb[0].mxu0
      %v2812 = vpop.f32.mrb[0].mxu0
      %v2813 = vadd.f32 0.0, %v2812
      %v2814 = vpop.f32.mrb[0].mxu0
      %2815 = vmatprep.mubr.bf16.mxu0 0
      %2816 = vmatmul.mubr.bf16.gmra.mrb[0].mxu0 %v2675
      %v2817 = vpop.f32.mrb[0].mxu0
      %v2818 = vadd.f32 0.0, %v2817
      %v2819 = vpop.f32.mrb[0].mxu0
      %v2820 = vpop.f32.mrb[0].mxu0
      %v2821 = vadd.f32 0.0, %v2820
      %v2822 = vpop.f32.mrb[0].mxu0
      %2823 = vmatprep.mubr.bf16.mxu0 0
      %2824 = vmatmul.mubr.bf16.gmra.mrb[0].mxu0 %v2678
      %v2825 = vpop.f32.mrb[0].mxu0
      %v2826 = vadd.f32 0.0, %v2825
      %v2827 = vpop.f32.mrb[0].mxu0
      %v2828 = vpop.f32.mrb[0].mxu0
      %v2829 = vadd.f32 0.0, %v2828
      %v2830 = vpop.f32.mrb[0].mxu0
      %2831 = vmatprep.mubr.bf16.mxu0 0
      %2832 = vmatmul.mubr.bf16.gmra.mrb[0].mxu0 %v2681
      %v2833 = vpop.f32.mrb[0].mxu0
      %v2834 = vadd.f32 0.0, %v2833
      %v2835 = vpop.f32.mrb[0].mxu0
      %v2836 = vpop.f32.mrb[0].mxu0
      %v2837 = vadd.f32 0.0, %v2836
      %v2838 = vpop.f32.mrb[0].mxu0
      %2839 = vmatprep.mubr.bf16.mxu0 0
      %2840 = vmatmul.mubr.bf16.gmra.mrb[0].mxu0 %v2684
      %v2841 = vpop.f32.mrb[0].mxu0
      %v2842 = vadd.f32 0.0, %v2841
      %v2843 = vpop.f32.mrb[0].mxu0
      %v2844 = vpop.f32.mrb[0].mxu0
      %v2845 = vadd.f32 0.0, %v2844
      %v2846 = vpop.f32.mrb[0].mxu0
      %2847 = vmatprep.mubr.bf16.mxu0 0
      %2848 = vmatmul.mubr.bf16.gmra.mrb[0].mxu0 %v2687
      %v2849 = vpop.f32.mrb[0].mxu0
      %v2850 = vadd.f32 0.0, %v2849
      %v2851 = vpop.f32.mrb[0].mxu0
      %v2852 = vpop.f32.mrb[0].mxu0
      %v2853 = vadd.f32 0.0, %v2852
      %v2854 = vpop.f32.mrb[0].mxu0
      %2855 = vmatprep.mubr.bf16.mxu0 0
      %2856 = vmatmul.mubr.bf16.gmra.mrb[0].mxu0 %v2690
      %v2857 = vpop.f32.mrb[0].mxu0
      %v2858 = vadd.f32 0.0, %v2857
      %v2859 = vpop.f32.mrb[0].mxu0
      %v2860 = vpop.f32.mrb[0].mxu0
      %v2861 = vadd.f32 0.0, %v2860
      %v2862 = vpop.f32.mrb[0].mxu0
      %2863 = vdwg.mxu0
      %v2864 = vadd.f32 %v2554, %v2730
      %v2865 = vadd.f32 %v2555, %v2733
      %v2866 = vadd.f32 %v2556, %v2738
      %v2867 = vadd.f32 %v2557, %v2741
      %v2868 = vadd.f32 %v2558, %v2746
      %v2869 = vadd.f32 %v2559, %v2749
      %v2870 = vadd.f32 %v2560, %v2754
      %v2871 = vadd.f32 %v2561, %v2757
      %v2872 = vadd.f32 %v2562, %v2762
      %v2873 = vadd.f32 %v2563, %v2765
      %v2874 = vadd.f32 %v2564, %v2770
      %v2875 = vadd.f32 %v2565, %v2773
      %v2876 = vadd.f32 %v2566, %v2778
      %v2877 = vadd.f32 %v2567, %v2781
      %v2878 = vadd.f32 %v2568, %v2786
      %v2879 = vadd.f32 %v2569, %v2789
      %v2880 = vadd.f32 %v2570, %v2794
      %v2881 = vadd.f32 %v2571, %v2797
      %v2882 = vadd.f32 %v2572, %v2802
      %v2883 = vadd.f32 %v2573, %v2805
      %v2884 = vadd.f32 %v2574, %v2810
      %v2885 = vadd.f32 %v2575, %v2813
      %v2886 = vadd.f32 %v2576, %v2818
      %v2887 = vadd.f32 %v2577, %v2821
      %v2888 = vadd.f32 %v2578, %v2826
      %v2889 = vadd.f32 %v2579, %v2829
      %v2890 = vadd.f32 %v2580, %v2834
      %v2891 = vadd.f32 %v2581, %v2837
      %v2892 = vadd.f32 %v2582, %v2842
      %v2893 = vadd.f32 %v2583, %v2845
      %v2894 = vadd.f32 %v2584, %v2850
      %v2895 = vadd.f32 %v2585, %v2853
      %v2896 = vadd.f32 %v2586, %v2858
      %v2897 = vadd.f32 %v2587, %v2861
      %v2898 = vld [vmem:[%s2] sm:$0x1]
      %v2900 = vlaneseq
      %v2901 = vshrl.u32 %v2900, 7
      %v2902 = vsub.s32 0, %v2901
      %v2903 = vrot.slane %v2898, %v2902
      %v2905 = vadd.f32 %v2864, %v2903
      %v2906 = vadd.f32 %v2865, %v2903
      %v2907 = vadd.f32 %v2866, %v2903
      %v2908 = vadd.f32 %v2867, %v2903
      %v2909 = vadd.f32 %v2868, %v2903
      %v2910 = vadd.f32 %v2869, %v2903
      %v2911 = vadd.f32 %v2870, %v2903
      %v2912 = vadd.f32 %v2871, %v2903
      %v2913 = vadd.f32 %v2872, %v2903
      %v2914 = vadd.f32 %v2873, %v2903
      %v2915 = vadd.f32 %v2874, %v2903
      %v2916 = vadd.f32 %v2875, %v2903
      %v2917 = vadd.f32 %v2876, %v2903
      %v2918 = vadd.f32 %v2877, %v2903
      %v2919 = vadd.f32 %v2878, %v2903
      %v2920 = vadd.f32 %v2879, %v2903
      %v2921 = vadd.f32 %v2880, %v2903
      %v2922 = vadd.f32 %v2881, %v2903
      %v2923 = vadd.f32 %v2882, %v2903
      %v2924 = vadd.f32 %v2883, %v2903
      %v2925 = vadd.f32 %v2884, %v2903
      %v2926 = vadd.f32 %v2885, %v2903
      %v2927 = vadd.f32 %v2886, %v2903
      %v2928 = vadd.f32 %v2887, %v2903
      %v2929 = vadd.f32 %v2888, %v2903
      %v2930 = vadd.f32 %v2889, %v2903
      %v2931 = vadd.f32 %v2890, %v2903
      %v2932 = vadd.f32 %v2891, %v2903
      %v2933 = vadd.f32 %v2892, %v2903
      %v2934 = vadd.f32 %v2893, %v2903
      %v2935 = vadd.f32 %v2894, %v2903
      %v2936 = vadd.f32 %v2895, %v2903
      %v2937 = vadd.f32 %v2896, %v2903
      %v2938 = vadd.f32 %v2897, %v2903
      %v2939 = vmax.f32 %v2905, 0.0
      %v2940 = vmax.f32 %v2906, 0.0
      %v2941 = vmax.f32 %v2907, 0.0
      %v2942 = vmax.f32 %v2908, 0.0
      %v2943 = vmax.f32 %v2909, 0.0
      %v2944 = vmax.f32 %v2910, 0.0
      %v2945 = vmax.f32 %v2911, 0.0
      %v2946 = vmax.f32 %v2912, 0.0
      %v2947 = vmax.f32 %v2913, 0.0
      %v2948 = vmax.f32 %v2914, 0.0
      %v2949 = vmax.f32 %v2915, 0.0
      %v2950 = vmax.f32 %v2916, 0.0
      %v2951 = vmax.f32 %v2917, 0.0
      %v2952 = vmax.f32 %v2918, 0.0
      %v2953 = vmax.f32 %v2919, 0.0
      %v2954 = vmax.f32 %v2920, 0.0
      %v2955 = vmax.f32 %v2921, 0.0
      %v2956 = vmax.f32 %v2922, 0.0
      %v2957 = vmax.f32 %v2923, 0.0
      %v2958 = vmax.f32 %v2924, 0.0
      %v2959 = vmax.f32 %v2925, 0.0
      %v2960 = vmax.f32 %v2926, 0.0
      %v2961 = vmax.f32 %v2927, 0.0
      %v2962 = vmax.f32 %v2928, 0.0
      %v2963 = vmax.f32 %v2929, 0.0
      %v2964 = vmax.f32 %v2930, 0.0
      %v2965 = vmax.f32 %v2931, 0.0
      %v2966 = vmax.f32 %v2932, 0.0
      %v2967 = vmax.f32 %v2933, 0.0
      %v2968 = vmax.f32 %v2934, 0.0
      %v2969 = vmax.f32 %v2935, 0.0
      %v2970 = vmax.f32 %v2936, 0.0
      %v2971 = vmax.f32 %v2937, 0.0
      %v2972 = vmax.f32 %v2938, 0.0
      %vm2973 = vcmask 64512
      %2974 = vst.msk [vmem:[%s170] sm:$0xff] %vm2973, %v2939
      %2975 = vst.msk [vmem:[%s170 + $0x8] sm:$0xff] %vm2973, %v2940
      %2976 = vst.msk [vmem:[%s170 + $0x10] sm:$0xff] %vm2973, %v2941
      %2977 = vst.msk [vmem:[%s170 + $0x18] sm:$0xff] %vm2973, %v2942
      %2978 = vst.msk [vmem:[%s170 + $0x20] sm:$0xff] %vm2973, %v2943
      %2979 = vst.msk [vmem:[%s170 + $0x28] sm:$0xff] %vm2973, %v2944
      %2980 = vst.msk [vmem:[%s170 + $0x30] sm:$0xff] %vm2973, %v2945
      %2981 = vst.msk [vmem:[%s170 + $0x38] sm:$0xff] %vm2973, %v2946
      %2982 = vst.msk [vmem:[%s170 + $0x40] sm:$0xff] %vm2973, %v2947
      %2983 = vst.msk [vmem:[%s170 + $0x48] sm:$0xff] %vm2973, %v2948
      %2984 = vst.msk [vmem:[%s170 + $0x50] sm:$0xff] %vm2973, %v2949
      %2985 = vst.msk [vmem:[%s170 + $0x58] sm:$0xff] %vm2973, %v2950
      %2986 = vst.msk [vmem:[%s170 + $0x60] sm:$0xff] %vm2973, %v2951
      %2987 = vst.msk [vmem:[%s170 + $0x68] sm:$0xff] %vm2973, %v2952
      %2988 = vst.msk [vmem:[%s170 + $0x70] sm:$0xff] %vm2973, %v2953
      %2989 = vst.msk [vmem:[%s170 + $0x78] sm:$0xff] %vm2973, %v2954
      %2990 = vst.msk [vmem:[%s170 + $0x80] sm:$0xff] %vm2973, %v2955
      %2991 = vst.msk [vmem:[%s170 + $0x88] sm:$0xff] %vm2973, %v2956
      %2992 = vst.msk [vmem:[%s170 + $0x90] sm:$0xff] %vm2973, %v2957
      %2993 = vst.msk [vmem:[%s170 + $0x98] sm:$0xff] %vm2973, %v2958
      %2994 = vst.msk [vmem:[%s170 + $0xa0] sm:$0xff] %vm2973, %v2959
      %2995 = vst.msk [vmem:[%s170 + $0xa8] sm:$0xff] %vm2973, %v2960
      %2996 = vst.msk [vmem:[%s170 + $0xb0] sm:$0xff] %vm2973, %v2961
      %2997 = vst.msk [vmem:[%s170 + $0xb8] sm:$0xff] %vm2973, %v2962
      %2998 = vst.msk [vmem:[%s170 + $0xc0] sm:$0xff] %vm2973, %v2963
      %2999 = vst.msk [vmem:[%s170 + $0xc8] sm:$0xff] %vm2973, %v2964
      %3000 = vst.msk [vmem:[%s170 + $0xd0] sm:$0xff] %vm2973, %v2965
      %3001 = vst.msk [vmem:[%s170 + $0xd8] sm:$0xff] %vm2973, %v2966
      %3002 = vst.msk [vmem:[%s170 + $0xe0] sm:$0xff] %vm2973, %v2967
      %3003 = vst.msk [vmem:[%s170 + $0xe8] sm:$0xff] %vm2973, %v2968
      %3004 = vst.msk [vmem:[%s170 + $0xf0] sm:$0xff] %vm2973, %v2969
      %3005 = vst.msk [vmem:[%s170 + $0xf8] sm:$0xff] %vm2973, %v2970
      %3006 = vst.msk [vmem:[%s170 + $0x100] sm:$0xff] %vm2973, %v2971
      %3007 = vst.msk [vmem:[%s170 + $0x108] sm:$0xff] %vm2973, %v2972
      %p3008 = scmp.lt.s32.totalorder %s14, 1
      %s3009 = scalar_select %p3008, %s14, 1
      %s3010 = smul.addr %s3009, 34
      %s3011 = smul.addr %s3010, 8
      %s3012 = scalar_lea.vmem %s3, %s3011
      // Predicated region
      $region33: #{tpu_custom_call.1} parent=31 // pred_check
        %p3013 = pneg %p100
      $region34: #{tpu_custom_call.1} parent=31 // pred_check_branch
        %3015 = sbr.rel (%p3013) target = $region36
      $region35: #{tpu_custom_call.1} parent=31 // pred_region
        _
      $region36: #{tpu_custom_call.1} parent=31 // pred_fallthru
        _
    $region32: #{tpu_custom_call.1} parent=5 // pred_fallthru
      _
    %p3016 = scmp.le.s32.totalorder 2, %s9
    // Predicated region
    $region37: #{tpu_custom_call.1} parent=5 // pred_check
      %p3017 = pneg %p3016
    $region38: #{tpu_custom_call.1} parent=5 // pred_check_branch
      %3019 = sbr.rel (%p3017) target = $region40
    $region39: #{tpu_custom_call.1} parent=5 // pred_region
      %s3020 = ssub.s32 %s9, 2
      // Predicated region
      $region41: #{tpu_custom_call.1} parent=39 // pred_check
        %p3021 = pneg %p106
      $region42: #{tpu_custom_call.1} parent=39 // pred_check_branch
        %3023 = sbr.rel (%p3021) target = $region44
      $region43: #{tpu_custom_call.1} parent=39 // pred_region
        %p3024 = scmp.lt.s32.totalorder %s15, 1
        %s3025 = scalar_select %p3024, %s15, 1
        %s3026 = smul.addr %s3025, 34
        %s3027 = smul.addr %s3026, 8
        %s3028 = scalar_lea.vmem %s3, %s3027
      $region44: #{tpu_custom_call.1} parent=39 // pred_fallthru
        _
    $region40: #{tpu_custom_call.1} parent=5 // pred_fallthru
      _
  $region6: #{tpu_custom_call.1} parent=0 // loop_footer
    %s13 = sadd.s32 1, %s9
  $region7: #{tpu_custom_call.1} parent=0 // loop_footer_branch
    %8 = sbr.rel target = $region3
  $region8: #{tpu_custom_call.1} parent=0 // loop_exit
    _

</llo_original>
